<compile_context>
chip_gen: v6e
topology: v6e:2x2x1
jax: 0.10.0
libtpu: 0.0.40
codegen_flags: <defaults>
</compile_context>

<pallas_src>
import functools

import jax
import jax.numpy as jnp
from jax.experimental import pallas as pl
from jax.experimental.pallas import tpu as pltpu


def _round_up(v, m):
    return (v + m - 1) // m * m


def _vmem_capacity_bytes():
    """Best-effort physical VMEM query; conservative (v7x-sized) fallback."""
    try:
        cap = getattr(pltpu.get_tpu_info(), "vmem_capacity_bytes", None)
        if cap:
            return int(cap)
    except Exception:
        pass
    return 64 * 1024 * 1024


def lstm_recurrent_kernel(x_ref, wih_ref, whh_ref, b_ref, y_ref, cN_ref,
                          h_sc, c_sc, *, seq_len, mask_tail):
    """One grid step = one batch block x TQ fused timesteps of the LSTM recurrence.

    x_ref  : (TQ, TB, D)   time-major input block (dense (TB,D) tile per timestep)
    wih_ref: (D, 4*Hp)     resident input-projection weights (gate order [i|f|o|g])
    whh_ref: (Hp, 4*Hp)    resident recurrent weights
    b_ref  : (1, 4*Hp)     resident bias (b_ih + b_hh), f32
    y_ref  : (TQ, TB, Hp)  time-major per-step hidden outputs (dense stores)
    cN_ref : (TB, Hp)      final cell state (resident block, written on last time block)
    h_sc/c_sc: (TB, Hp) f32 state carried across grid steps along the time axis
    """
    TQ, TB, _ = x_ref.shape
    Hp = whh_ref.shape[0]
    cdt = whh_ref.dtype

    # hidden_state=None -> zero init at the first time block of each batch block.
    @pl.when(pl.program_id(1) == 0)
    def _():
        h_sc[...] = jnp.zeros_like(h_sc)
        c_sc[...] = jnp.zeros_like(c_sc)

    def _sigmoid(z):
        # one EUP tanh + cheap VPU ops instead of exp + divide
        return 0.5 * jnp.tanh(0.5 * z) + 0.5

    wih = wih_ref[...]
    whh = whh_ref[...]
    bias = jnp.broadcast_to(b_ref[...], (TB, 4 * Hp))     # hoisted out of the loop

    # h/c live in registers across the unrolled chunk: one scratch load + store per block
    h = h_sc[...]
    c = c_sc[...]
    t0 = pl.program_id(1) * TQ

    for k in range(TQ):                                    # statically unrolled
        gates = (jnp.dot(x_ref[k], wih, preferred_element_type=jnp.float32)
                 + jnp.dot(h.astype(cdt), whh, preferred_element_type=jnp.float32)
                 + bias)                                   # (TB, 4Hp) f32, [i|f|o|g]

        sig = _sigmoid(gates[:, 0:3 * Hp])                 # contiguous i|f|o slab
        i = sig[:, 0 * Hp:1 * Hp]
        f = sig[:, 1 * Hp:2 * Hp]
        o = sig[:, 2 * Hp:3 * Hp]
        g = jnp.tanh(gates[:, 3 * Hp:4 * Hp])

        c_new = f * c + i * g
        h_new = o * jnp.tanh(c_new)

        if mask_tail:
            # Time axis padded to a multiple of TQ: freeze the carries on padded steps
            # so h_n / c_n correspond to the true sequence length.
            valid = (t0 + k) < seq_len
            c = jnp.where(valid, c_new, c)
            h = jnp.where(valid, h_new, h)
        else:
            c = c_new
            h = h_new

        y_ref[k] = h_new.astype(y_ref.dtype)               # dense (TB, Hp) store

    h_sc[...] = h
    c_sc[...] = c

    # Final cell state: resident output block; only the last time block writes it.
    @pl.when(pl.program_id(1) == pl.num_programs(1) - 1)
    def _():
        cN_ref[...] = c.astype(cN_ref.dtype)


def lstm_forward(x, w_ih, w_hh, b_ih, b_hh, *, param_dtype=jnp.bfloat16):
    """x: (B, T, D) float32 (batch_first, like the PyTorch module).
    w_ih: (4H, D), w_hh: (4H, H), b_ih/b_hh: (4H,) -- PyTorch nn.LSTM parameter shapes.
    param_dtype: dtype of the resident weights / streamed x (bf16 = MXU-native,
    f32 accumulation; pass jnp.float32 for tight accuracy).
    """
    # TODO(synk): a non-None initial hidden_state would simply seed h_sc/c_sc; the
    # module's forward defaults to zeros, which is what is implemented here.
    B, T, D = x.shape
    H = w_hh.shape[1]

    Hp = _round_up(H, 128)              # lane-align each gate (slices at 128 multiples)
    Bp = _round_up(B, 8)                # f32 sublane alignment
    param_bytes = jnp.dtype(param_dtype).itemsize
    out_bytes = jnp.dtype(x.dtype).itemsize

    # ---------------- VMEM-budget-driven tiling & scoped-VMEM limit -----------------
    cap = _vmem_capacity_bytes()
    vmem_limit = min(int(cap * 0.75), 100 * 1024 * 1024)   # ~48 MiB v7x, ~96 MiB v5e/v6e
    budget = int(vmem_limit * 0.9)

    # Resident weights + bias (double-buffer accounted; index maps are constant so the
    # second buffer is waste, but budgeting x2 keeps us safely under the limit).
    weights_bytes = 2 * (D + Hp) * 4 * Hp * param_bytes + 2 * 4 * Hp * 4

    def tile_bytes(tq, tb):
        return (2 * tq * tb * D * param_bytes       # streamed x (double-buffered)
                + 2 * tq * tb * Hp * out_bytes      # streamed y (double-buffered)
                + 2 * tb * Hp * 4                   # resident c_n output
                + 2 * tb * Hp * 4)                  # h/c carry scratch

    # Batch tile: divisor of Bp, <=128; prefer >=2 blocks so the "parallel" batch axis
    # can feed both TensorCores on v7x (MXU has slack for the smaller M dim).
    tb_cands = [c for c in (128, 64, 32, 16, 8) if Bp % c == 0]
    if Bp >= 16:
        tb_cands = [c for c in tb_cands if Bp // c >= 2] or tb_cands
    TB = tb_cands[0]

    # Time tile: multiple of 8, largest that fits the budget; prefer no tail padding.
    T8 = _round_up(T, 8)
    tq_cands = sorted((c for c in (32, 16, 8) if c <= T8),
                      key=lambda c: (T8 % c != 0, -c))
    TQ = 8
    for c in tq_cands:
        if weights_bytes + tile_bytes(c, TB) <= budget:
            TQ = c
            break
    while weights_bytes + tile_bytes(TQ, TB) > budget and TB > 8:
        TB //= 2                                     # shrink batch tile for huge H
    Tp = _round_up(T, TQ)

    # -------- parameter prep: reorder gates i,f,g,o -> [i|f|o|g], pad per-gate --------
    perm = jnp.array([0, 1, 3, 2])

    def prep(w):                                     # (4H, X) -> (X, 4Hp) for x @ W
        X = w.shape[-1]
        w4 = w.reshape(4, H, X)[perm]
        w4 = jnp.pad(w4, ((0, 0), (0, Hp - H), (0, 0)))
        return w4.reshape(4 * Hp, X).T

    wih_t = prep(w_ih).astype(param_dtype)                                   # (D, 4Hp)
    whh_t = jnp.pad(prep(w_hh), ((0, Hp - H), (0, 0))).astype(param_dtype)   # (Hp, 4Hp)
    bias = jnp.pad((b_ih + b_hh).reshape(4, H)[perm],
                   ((0, 0), (0, Hp - H))).reshape(1, 4 * Hp).astype(jnp.float32)

    # -------- time-major input (one cheap XLA transpose; no gx HBM intermediate) -----
    x_tm = jnp.pad(jnp.transpose(x, (1, 0, 2)),
                   ((0, Tp - T), (0, Bp - B), (0, 0))).astype(param_dtype)   # (Tp, Bp, D)

    n_b = Bp // TB
    n_t = Tp // TQ

    kernel = functools.partial(lstm_recurrent_kernel, seq_len=T, mask_tail=(Tp != T))

    y_tm, c_last = pl.pallas_call(
        kernel,
        out_shape=(
            jax.ShapeDtypeStruct((Tp, Bp, Hp), x.dtype),    # time-major hidden states
            jax.ShapeDtypeStruct((Bp, Hp), jnp.float32),    # final cell state
        ),
        grid_spec=pltpu.PrefetchScalarGridSpec(
            num_scalar_prefetch=0,
            grid=(n_b, n_t),
            in_specs=[
                pl.BlockSpec((TQ, TB, D), lambda b, t: (t, b, 0)),      # streamed x
                pl.BlockSpec((D, 4 * Hp), lambda b, t: (0, 0)),         # W_ih^T resident
                pl.BlockSpec((Hp, 4 * Hp), lambda b, t: (0, 0)),        # W_hh^T resident
                pl.BlockSpec((1, 4 * Hp), lambda b, t: (0, 0)),         # bias resident
            ],
            out_specs=(
                pl.BlockSpec((TQ, TB, Hp), lambda b, t: (t, b, 0)),     # y block (dense)
                pl.BlockSpec((TB, Hp), lambda b, t: (b, 0)),            # c_n (resident)
            ),
            scratch_shapes=[
                pltpu.VMEM((TB, Hp), jnp.float32),   # h carry
                pltpu.VMEM((TB, Hp), jnp.float32),   # c carry
            ],
        ),
        compiler_params=pltpu.CompilerParams(
            # batch blocks parallel (megacore / v7x 2 TCs); time sequential recurrence
            dimension_semantics=("parallel", "arbitrary"),
            vmem_limit_bytes=vmem_limit,
        ),
    )(x_tm, wih_t, whh_t, bias)

    y = jnp.transpose(y_tm, (1, 0, 2))[:B, :T, :H]   # back to batch_first, strip padding
    h_n = y[:, T - 1, :][None, ...]                  # (1, B, H): last valid step == h_n
    c_n = c_last[:B, :H][None, ...].astype(x.dtype)
    return y, (h_n, c_n)


def lstm_reference(x, w_ih, w_hh, b_ih, b_hh):
    """Pure-JAX reference matching torch.nn.LSTM semantics (for verification)."""
    B, T, D = x.shape
    H = w_hh.shape[1]
    h = jnp.zeros((B, H), jnp.float32)
    c = jnp.zeros((B, H), jnp.float32)
    ys = []
    for t in range(T):
        gates = x[:, t, :] @ w_ih.T + h @ w_hh.T + b_ih + b_hh
        i = jax.nn.sigmoid(gates[:, 0 * H:1 * H])
        f = jax.nn.sigmoid(gates[:, 1 * H:2 * H])
        g = jnp.tanh(gates[:, 2 * H:3 * H])
        o = jax.nn.sigmoid(gates[:, 3 * H:4 * H])
        c = f * c + i * g
        h = o * jnp.tanh(c)
        ys.append(h)
    y = jnp.stack(ys, axis=1)
    return y, (h[None], c[None])


if __name__ == "__main__":
    key = jax.random.PRNGKey(0)
    kx, k1, k2, k3, k4, kx2 = jax.random.split(key, 6)

    B, T, D, H = 2, 8, 16, 32
    x = jax.random.normal(kx, (B, T, D), dtype=jnp.float32)

    # Deterministic init matching nn.LSTM's uniform(-1/sqrt(H), 1/sqrt(H)) convention.
    bound = 1.0 / jnp.sqrt(jnp.float32(H))
    w_ih = jax.random.uniform(k1, (4 * H, D), jnp.float32, -bound, bound)
    w_hh = jax.random.uniform(k2, (4 * H, H), jnp.float32, -bound, bound)
    b_ih = jax.random.uniform(k3, (4 * H,), jnp.float32, -bound, bound)
    b_hh = jax.random.uniform(k4, (4 * H,), jnp.float32, -bound, bound)

    y_ref, (h_ref, c_ref) = lstm_reference(x, w_ih, w_hh, b_ih, b_hh)

    fwd_f32 = jax.jit(lambda *a: lstm_forward(*a, param_dtype=jnp.float32))
    fwd_bf16 = jax.jit(lambda *a: lstm_forward(*a, param_dtype=jnp.bfloat16))

    # f32 weights / f32 stream: tight-tolerance correctness check.
    y32, (h32, c32) = fwd_f32(x, w_ih, w_hh, b_ih, b_hh)
    jax.block_until_ready((y32, h32, c32))
    assert y32.shape == (B, T, H) and h32.shape == (1, B, H) and c32.shape == (1, B, H)
    assert jnp.allclose(y32, y_ref, atol=1e-4, rtol=1e-4)
    assert jnp.allclose(h32, h_ref, atol=1e-4, rtol=1e-4)
    assert jnp.allclose(c32, c_ref, atol=1e-4, rtol=1e-4)

    # Default bf16 weights + bf16 streamed x (MXU-native, f32 accumulation / carries):
    # looser tolerance (bf16 error compounds slightly over the T=8 recurrence).
    y16, (h16, c16) = fwd_bf16(x, w_ih, w_hh, b_ih, b_hh)
    jax.block_until_ready((y16, h16, c16))
    assert y16.shape == (B, T, H)
    assert jnp.allclose(y16, y_ref, atol=4e-2, rtol=4e-2)
    assert jnp.allclose(h16, h_ref, atol=4e-2, rtol=4e-2)
    assert jnp.allclose(c16, c_ref, atol=4e-2, rtol=4e-2)

    # Odd T / odd B: exercises the padded-time tail masking and batch padding (f32 path).
    B2, T2 = 3, 5
    x2 = jax.random.normal(kx2, (B2, T2, D), dtype=jnp.float32)
    y2_ref, (h2_ref, c2_ref) = lstm_reference(x2, w_ih, w_hh, b_ih, b_hh)
    y2, (h2, c2) = fwd_f32(x2, w_ih, w_hh, b_ih, b_hh)
    jax.block_until_ready((y2, h2, c2))
    assert y2.shape == (B2, T2, H)
    assert jnp.allclose(y2, y2_ref, atol=1e-4, rtol=1e-4)
    assert jnp.allclose(h2, h2_ref, atol=1e-4, rtol=1e-4)
    assert jnp.allclose(c2, c2_ref, atol=1e-4, rtol=1e-4)

    print("KERNEL_OK")
</pallas_src>

<mosaic_0001>
module attributes {stable_mosaic.version = 11 : i64} {
  func.func @lstm_recurrent_kernel(%arg0: i32, %arg1: i32, %arg2: memref<8x8x16xf32, #tpu.memory_space<vmem>>, %arg3: memref<16x512xf32, #tpu.memory_space<vmem>>, %arg4: memref<128x512xf32, #tpu.memory_space<vmem>>, %arg5: memref<1x512xf32, #tpu.memory_space<vmem>>, %arg6: memref<8x8x128xf32, #tpu.memory_space<vmem>>, %arg7: memref<8x128xf32, #tpu.memory_space<vmem>>, %arg8: memref<8x128xf32, #tpu.memory_space<vmem>>, %arg9: memref<8x128xf32, #tpu.memory_space<vmem>>) attributes {dimension_semantics = [#tpu.dimension_semantics<parallel>, #tpu.dimension_semantics<arbitrary>], iteration_bounds = array<i64: 1, 1>, scalar_prefetch = 0 : i64, scratch_operands = 2 : i64, tpu.core_type = #tpu.core_type<tc>, window_params = [{transform_indices = @transform_0, window_bounds = array<i64: 8, 8, 16>}, {pipeline_mode = #tpu.pipeline_mode<synchronous>, transform_indices = @transform_1, window_bounds = array<i64: 16, 512>}, {pipeline_mode = #tpu.pipeline_mode<synchronous>, transform_indices = @transform_2, window_bounds = array<i64: 128, 512>}, {pipeline_mode = #tpu.pipeline_mode<synchronous>, transform_indices = @transform_3, window_bounds = array<i64: 1, 512>}, {transform_indices = @transform_4, window_bounds = array<i64: 8, 8, 128>}, {transform_indices = @transform_5, window_bounds = array<i64: 8, 128>}]} {
    %c0_i32 = arith.constant 0 : i32
    %0 = arith.cmpi eq, %arg1, %c0_i32 : i32
    %1 = arith.extui %0 : i1 to i32
    %c0_i32_0 = arith.constant 0 : i32
    %2 = arith.cmpi ne, %1, %c0_i32_0 : i32
    scf.if %2 {
      %cst_96 = arith.constant 0.000000e+00 : f32
      %231 = vector.broadcast %cst_96 : f32 to vector<8x128xf32>
      %c0_97 = arith.constant 0 : index
      %c0_98 = arith.constant 0 : index
      %232 = vector.load %arg8[%c0_97, %c0_98] : memref<8x128xf32, #tpu.memory_space<vmem>>, vector<8x128xf32>
      tpu.vector_store %arg8[%c0_97, %c0_98], %231 {strides = array<i32>} : memref<8x128xf32, #tpu.memory_space<vmem>>, vector<8x128xf32>,
      %cst_99 = arith.constant 0.000000e+00 : f32
      %233 = vector.broadcast %cst_99 : f32 to vector<8x128xf32>
      %c0_100 = arith.constant 0 : index
      %c0_101 = arith.constant 0 : index
      %234 = vector.load %arg9[%c0_100, %c0_101] : memref<8x128xf32, #tpu.memory_space<vmem>>, vector<8x128xf32>
      tpu.vector_store %arg9[%c0_100, %c0_101], %233 {strides = array<i32>} : memref<8x128xf32, #tpu.memory_space<vmem>>, vector<8x128xf32>,
    } else {
    }
    %c0 = arith.constant 0 : index
    %c0_1 = arith.constant 0 : index
    %3 = vector.load %arg3[%c0, %c0_1] : memref<16x512xf32, #tpu.memory_space<vmem>>, vector<16x512xf32>
    %c0_2 = arith.constant 0 : index
    %c0_3 = arith.constant 0 : index
    %4 = vector.load %arg4[%c0_2, %c0_3] : memref<128x512xf32, #tpu.memory_space<vmem>>, vector<128x512xf32>
    %c0_4 = arith.constant 0 : index
    %c0_5 = arith.constant 0 : index
    %5 = vector.load %arg5[%c0_4, %c0_5] : memref<1x512xf32, #tpu.memory_space<vmem>>, vector<1x512xf32>
    %6 = vector.shape_cast %5 : vector<1x512xf32> to vector<1x512xf32>
    %7 = vector.broadcast %6 : vector<1x512xf32> to vector<8x512xf32>
    %c0_6 = arith.constant 0 : index
    %c0_7 = arith.constant 0 : index
    %8 = vector.load %arg8[%c0_6, %c0_7] : memref<8x128xf32, #tpu.memory_space<vmem>>, vector<8x128xf32>
    %c0_8 = arith.constant 0 : index
    %c0_9 = arith.constant 0 : index
    %9 = vector.load %arg9[%c0_8, %c0_9] : memref<8x128xf32, #tpu.memory_space<vmem>>, vector<8x128xf32>
    %c0_10 = arith.constant 0 : index
    %c0_11 = arith.constant 0 : index
    %c0_12 = arith.constant 0 : index
    %10 = vector.load %arg2[%c0_10, %c0_11, %c0_12] : memref<8x8x16xf32, #tpu.memory_space<vmem>>, vector<1x8x16xf32>
    %11 = vector.shape_cast %10 : vector<1x8x16xf32> to vector<8x16xf32>
    %cst = arith.constant dense<0.000000e+00> : vector<8x512xf32>
    %12 = tpu.matmul %11, %3, %cst {dimension_numbers = #tpu.dot_dimension_numbers<[1], [0], [0], [1], [0, 0, 1, 1], [], []>} : vector<8x16xf32>, vector<16x512xf32>, vector<8x512xf32> -> vector<8x512xf32>
    %cst_13 = arith.constant dense<0.000000e+00> : vector<8x512xf32>
    %13 = tpu.matmul %8, %4, %cst_13 {dimension_numbers = #tpu.dot_dimension_numbers<[1], [0], [0], [1], [0, 0, 1, 1], [], []>} : vector<8x128xf32>, vector<128x512xf32>, vector<8x512xf32> -> vector<8x512xf32>
    %14 = arith.addf %12, %13 : vector<8x512xf32>
    %15 = arith.addf %14, %7 : vector<8x512xf32>
    %16 = vector.extract_strided_slice %15 {offsets = [0, 0], sizes = [8, 384], strides = [1, 1]} : vector<8x512xf32> to vector<8x384xf32>
    %cst_14 = arith.constant 5.000000e-01 : f32
    %17 = vector.broadcast %cst_14 : f32 to vector<8x384xf32>
    %18 = arith.mulf %17, %16 : vector<8x384xf32>
    %19 = math.tanh %18 : vector<8x384xf32>
    %cst_15 = arith.constant 5.000000e-01 : f32
    %20 = vector.broadcast %cst_15 : f32 to vector<8x384xf32>
    %21 = arith.mulf %20, %19 : vector<8x384xf32>
    %cst_16 = arith.constant 5.000000e-01 : f32
    %22 = vector.broadcast %cst_16 : f32 to vector<8x384xf32>
    %23 = arith.addf %21, %22 : vector<8x384xf32>
    %24 = vector.extract_strided_slice %23 {offsets = [0, 0], sizes = [8, 128], strides = [1, 1]} : vector<8x384xf32> to vector<8x128xf32>
    %25 = vector.extract_strided_slice %23 {offsets = [0, 128], sizes = [8, 128], strides = [1, 1]} : vector<8x384xf32> to vector<8x128xf32>
    %26 = vector.extract_strided_slice %23 {offsets = [0, 256], sizes = [8, 128], strides = [1, 1]} : vector<8x384xf32> to vector<8x128xf32>
    %27 = vector.extract_strided_slice %15 {offsets = [0, 384], sizes = [8, 128], strides = [1, 1]} : vector<8x512xf32> to vector<8x128xf32>
    %28 = math.tanh %27 : vector<8x128xf32>
    %29 = arith.mulf %25, %9 : vector<8x128xf32>
    %30 = arith.mulf %24, %28 : vector<8x128xf32>
    %31 = arith.addf %29, %30 : vector<8x128xf32>
    %32 = math.tanh %31 : vector<8x128xf32>
    %33 = arith.mulf %26, %32 : vector<8x128xf32>
    %c0_17 = arith.constant 0 : index
    %c0_18 = arith.constant 0 : index
    %c0_19 = arith.constant 0 : index
    %34 = vector.load %arg6[%c0_17, %c0_18, %c0_19] : memref<8x8x128xf32, #tpu.memory_space<vmem>>, vector<1x8x128xf32>
    %35 = vector.shape_cast %34 : vector<1x8x128xf32> to vector<8x128xf32>
    %36 = vector.shape_cast %33 : vector<8x128xf32> to vector<1x8x128xf32>
    tpu.vector_store %arg6[%c0_17, %c0_18, %c0_19], %36 {strides = array<i32>} : memref<8x8x128xf32, #tpu.memory_space<vmem>>, vector<1x8x128xf32>,
    %c1 = arith.constant 1 : index
    %c0_20 = arith.constant 0 : index
    %c0_21 = arith.constant 0 : index
    %37 = vector.load %arg2[%c1, %c0_20, %c0_21] : memref<8x8x16xf32, #tpu.memory_space<vmem>>, vector<1x8x16xf32>
    %38 = vector.shape_cast %37 : vector<1x8x16xf32> to vector<8x16xf32>
    %cst_22 = arith.constant dense<0.000000e+00> : vector<8x512xf32>
    %39 = tpu.matmul %38, %3, %cst_22 {dimension_numbers = #tpu.dot_dimension_numbers<[1], [0], [0], [1], [0, 0, 1, 1], [], []>} : vector<8x16xf32>, vector<16x512xf32>, vector<8x512xf32> -> vector<8x512xf32>
    %cst_23 = arith.constant dense<0.000000e+00> : vector<8x512xf32>
    %40 = tpu.matmul %33, %4, %cst_23 {dimension_numbers = #tpu.dot_dimension_numbers<[1], [0], [0], [1], [0, 0, 1, 1], [], []>} : vector<8x128xf32>, vector<128x512xf32>, vector<8x512xf32> -> vector<8x512xf32>
    %41 = arith.addf %39, %40 : vector<8x512xf32>
    %42 = arith.addf %41, %7 : vector<8x512xf32>
    %43 = vector.extract_strided_slice %42 {offsets = [0, 0], sizes = [8, 384], strides = [1, 1]} : vector<8x512xf32> to vector<8x384xf32>
    %cst_24 = arith.constant 5.000000e-01 : f32
    %44 = vector.broadcast %cst_24 : f32 to vector<8x384xf32>
    %45 = arith.mulf %44, %43 : vector<8x384xf32>
    %46 = math.tanh %45 : vector<8x384xf32>
    %cst_25 = arith.constant 5.000000e-01 : f32
    %47 = vector.broadcast %cst_25 : f32 to vector<8x384xf32>
    %48 = arith.mulf %47, %46 : vector<8x384xf32>
    %cst_26 = arith.constant 5.000000e-01 : f32
    %49 = vector.broadcast %cst_26 : f32 to vector<8x384xf32>
    %50 = arith.addf %48, %49 : vector<8x384xf32>
    %51 = vector.extract_strided_slice %50 {offsets = [0, 0], sizes = [8, 128], strides = [1, 1]} : vector<8x384xf32> to vector<8x128xf32>
    %52 = vector.extract_strided_slice %50 {offsets = [0, 128], sizes = [8, 128], strides = [1, 1]} : vector<8x384xf32> to vector<8x128xf32>
    %53 = vector.extract_strided_slice %50 {offsets = [0, 256], sizes = [8, 128], strides = [1, 1]} : vector<8x384xf32> to vector<8x128xf32>
    %54 = vector.extract_strided_slice %42 {offsets = [0, 384], sizes = [8, 128], strides = [1, 1]} : vector<8x512xf32> to vector<8x128xf32>
    %55 = math.tanh %54 : vector<8x128xf32>
    %56 = arith.mulf %52, %31 : vector<8x128xf32>
    %57 = arith.mulf %51, %55 : vector<8x128xf32>
    %58 = arith.addf %56, %57 : vector<8x128xf32>
    %59 = math.tanh %58 : vector<8x128xf32>
    %60 = arith.mulf %53, %59 : vector<8x128xf32>
    %c1_27 = arith.constant 1 : index
    %c0_28 = arith.constant 0 : index
    %c0_29 = arith.constant 0 : index
    %61 = vector.load %arg6[%c1_27, %c0_28, %c0_29] : memref<8x8x128xf32, #tpu.memory_space<vmem>>, vector<1x8x128xf32>
    %62 = vector.shape_cast %61 : vector<1x8x128xf32> to vector<8x128xf32>
    %63 = vector.shape_cast %60 : vector<8x128xf32> to vector<1x8x128xf32>
    tpu.vector_store %arg6[%c1_27, %c0_28, %c0_29], %63 {strides = array<i32>} : memref<8x8x128xf32, #tpu.memory_space<vmem>>, vector<1x8x128xf32>,
    %c2 = arith.constant 2 : index
    %c0_30 = arith.constant 0 : index
    %c0_31 = arith.constant 0 : index
    %64 = vector.load %arg2[%c2, %c0_30, %c0_31] : memref<8x8x16xf32, #tpu.memory_space<vmem>>, vector<1x8x16xf32>
    %65 = vector.shape_cast %64 : vector<1x8x16xf32> to vector<8x16xf32>
    %cst_32 = arith.constant dense<0.000000e+00> : vector<8x512xf32>
    %66 = tpu.matmul %65, %3, %cst_32 {dimension_numbers = #tpu.dot_dimension_numbers<[1], [0], [0], [1], [0, 0, 1, 1], [], []>} : vector<8x16xf32>, vector<16x512xf32>, vector<8x512xf32> -> vector<8x512xf32>
    %cst_33 = arith.constant dense<0.000000e+00> : vector<8x512xf32>
    %67 = tpu.matmul %60, %4, %cst_33 {dimension_numbers = #tpu.dot_dimension_numbers<[1], [0], [0], [1], [0, 0, 1, 1], [], []>} : vector<8x128xf32>, vector<128x512xf32>, vector<8x512xf32> -> vector<8x512xf32>
    %68 = arith.addf %66, %67 : vector<8x512xf32>
    %69 = arith.addf %68, %7 : vector<8x512xf32>
    %70 = vector.extract_strided_slice %69 {offsets = [0, 0], sizes = [8, 384], strides = [1, 1]} : vector<8x512xf32> to vector<8x384xf32>
    %cst_34 = arith.constant 5.000000e-01 : f32
    %71 = vector.broadcast %cst_34 : f32 to vector<8x384xf32>
    %72 = arith.mulf %71, %70 : vector<8x384xf32>
    %73 = math.tanh %72 : vector<8x384xf32>
    %cst_35 = arith.constant 5.000000e-01 : f32
    %74 = vector.broadcast %cst_35 : f32 to vector<8x384xf32>
    %75 = arith.mulf %74, %73 : vector<8x384xf32>
    %cst_36 = arith.constant 5.000000e-01 : f32
    %76 = vector.broadcast %cst_36 : f32 to vector<8x384xf32>
    %77 = arith.addf %75, %76 : vector<8x384xf32>
    %78 = vector.extract_strided_slice %77 {offsets = [0, 0], sizes = [8, 128], strides = [1, 1]} : vector<8x384xf32> to vector<8x128xf32>
    %79 = vector.extract_strided_slice %77 {offsets = [0, 128], sizes = [8, 128], strides = [1, 1]} : vector<8x384xf32> to vector<8x128xf32>
    %80 = vector.extract_strided_slice %77 {offsets = [0, 256], sizes = [8, 128], strides = [1, 1]} : vector<8x384xf32> to vector<8x128xf32>
    %81 = vector.extract_strided_slice %69 {offsets = [0, 384], sizes = [8, 128], strides = [1, 1]} : vector<8x512xf32> to vector<8x128xf32>
    %82 = math.tanh %81 : vector<8x128xf32>
    %83 = arith.mulf %79, %58 : vector<8x128xf32>
    %84 = arith.mulf %78, %82 : vector<8x128xf32>
    %85 = arith.addf %83, %84 : vector<8x128xf32>
    %86 = math.tanh %85 : vector<8x128xf32>
    %87 = arith.mulf %80, %86 : vector<8x128xf32>
    %c2_37 = arith.constant 2 : index
    %c0_38 = arith.constant 0 : index
    %c0_39 = arith.constant 0 : index
    %88 = vector.load %arg6[%c2_37, %c0_38, %c0_39] : memref<8x8x128xf32, #tpu.memory_space<vmem>>, vector<1x8x128xf32>
    %89 = vector.shape_cast %88 : vector<1x8x128xf32> to vector<8x128xf32>
    %90 = vector.shape_cast %87 : vector<8x128xf32> to vector<1x8x128xf32>
    tpu.vector_store %arg6[%c2_37, %c0_38, %c0_39], %90 {strides = array<i32>} : memref<8x8x128xf32, #tpu.memory_space<vmem>>, vector<1x8x128xf32>,
    %c3 = arith.constant 3 : index
    %c0_40 = arith.constant 0 : index
    %c0_41 = arith.constant 0 : index
    %91 = vector.load %arg2[%c3, %c0_40, %c0_41] : memref<8x8x16xf32, #tpu.memory_space<vmem>>, vector<1x8x16xf32>
    %92 = vector.shape_cast %91 : vector<1x8x16xf32> to vector<8x16xf32>
    %cst_42 = arith.constant dense<0.000000e+00> : vector<8x512xf32>
    %93 = tpu.matmul %92, %3, %cst_42 {dimension_numbers = #tpu.dot_dimension_numbers<[1], [0], [0], [1], [0, 0, 1, 1], [], []>} : vector<8x16xf32>, vector<16x512xf32>, vector<8x512xf32> -> vector<8x512xf32>
    %cst_43 = arith.constant dense<0.000000e+00> : vector<8x512xf32>
    %94 = tpu.matmul %87, %4, %cst_43 {dimension_numbers = #tpu.dot_dimension_numbers<[1], [0], [0], [1], [0, 0, 1, 1], [], []>} : vector<8x128xf32>, vector<128x512xf32>, vector<8x512xf32> -> vector<8x512xf32>
    %95 = arith.addf %93, %94 : vector<8x512xf32>
    %96 = arith.addf %95, %7 : vector<8x512xf32>
    %97 = vector.extract_strided_slice %96 {offsets = [0, 0], sizes = [8, 384], strides = [1, 1]} : vector<8x512xf32> to vector<8x384xf32>
    %cst_44 = arith.constant 5.000000e-01 : f32
    %98 = vector.broadcast %cst_44 : f32 to vector<8x384xf32>
    %99 = arith.mulf %98, %97 : vector<8x384xf32>
    %100 = math.tanh %99 : vector<8x384xf32>
    %cst_45 = arith.constant 5.000000e-01 : f32
    %101 = vector.broadcast %cst_45 : f32 to vector<8x384xf32>
    %102 = arith.mulf %101, %100 : vector<8x384xf32>
    %cst_46 = arith.constant 5.000000e-01 : f32
    %103 = vector.broadcast %cst_46 : f32 to vector<8x384xf32>
    %104 = arith.addf %102, %103 : vector<8x384xf32>
    %105 = vector.extract_strided_slice %104 {offsets = [0, 0], sizes = [8, 128], strides = [1, 1]} : vector<8x384xf32> to vector<8x128xf32>
    %106 = vector.extract_strided_slice %104 {offsets = [0, 128], sizes = [8, 128], strides = [1, 1]} : vector<8x384xf32> to vector<8x128xf32>
    %107 = vector.extract_strided_slice %104 {offsets = [0, 256], sizes = [8, 128], strides = [1, 1]} : vector<8x384xf32> to vector<8x128xf32>
    %108 = vector.extract_strided_slice %96 {offsets = [0, 384], sizes = [8, 128], strides = [1, 1]} : vector<8x512xf32> to vector<8x128xf32>
    %109 = math.tanh %108 : vector<8x128xf32>
    %110 = arith.mulf %106, %85 : vector<8x128xf32>
    %111 = arith.mulf %105, %109 : vector<8x128xf32>
    %112 = arith.addf %110, %111 : vector<8x128xf32>
    %113 = math.tanh %112 : vector<8x128xf32>
    %114 = arith.mulf %107, %113 : vector<8x128xf32>
    %c3_47 = arith.constant 3 : index
    %c0_48 = arith.constant 0 : index
    %c0_49 = arith.constant 0 : index
    %115 = vector.load %arg6[%c3_47, %c0_48, %c0_49] : memref<8x8x128xf32, #tpu.memory_space<vmem>>, vector<1x8x128xf32>
    %116 = vector.shape_cast %115 : vector<1x8x128xf32> to vector<8x128xf32>
    %117 = vector.shape_cast %114 : vector<8x128xf32> to vector<1x8x128xf32>
    tpu.vector_store %arg6[%c3_47, %c0_48, %c0_49], %117 {strides = array<i32>} : memref<8x8x128xf32, #tpu.memory_space<vmem>>, vector<1x8x128xf32>,
    %c4 = arith.constant 4 : index
    %c0_50 = arith.constant 0 : index
    %c0_51 = arith.constant 0 : index
    %118 = vector.load %arg2[%c4, %c0_50, %c0_51] : memref<8x8x16xf32, #tpu.memory_space<vmem>>, vector<1x8x16xf32>
    %119 = vector.shape_cast %118 : vector<1x8x16xf32> to vector<8x16xf32>
    %cst_52 = arith.constant dense<0.000000e+00> : vector<8x512xf32>
    %120 = tpu.matmul %119, %3, %cst_52 {dimension_numbers = #tpu.dot_dimension_numbers<[1], [0], [0], [1], [0, 0, 1, 1], [], []>} : vector<8x16xf32>, vector<16x512xf32>, vector<8x512xf32> -> vector<8x512xf32>
    %cst_53 = arith.constant dense<0.000000e+00> : vector<8x512xf32>
    %121 = tpu.matmul %114, %4, %cst_53 {dimension_numbers = #tpu.dot_dimension_numbers<[1], [0], [0], [1], [0, 0, 1, 1], [], []>} : vector<8x128xf32>, vector<128x512xf32>, vector<8x512xf32> -> vector<8x512xf32>
    %122 = arith.addf %120, %121 : vector<8x512xf32>
    %123 = arith.addf %122, %7 : vector<8x512xf32>
    %124 = vector.extract_strided_slice %123 {offsets = [0, 0], sizes = [8, 384], strides = [1, 1]} : vector<8x512xf32> to vector<8x384xf32>
    %cst_54 = arith.constant 5.000000e-01 : f32
    %125 = vector.broadcast %cst_54 : f32 to vector<8x384xf32>
    %126 = arith.mulf %125, %124 : vector<8x384xf32>
    %127 = math.tanh %126 : vector<8x384xf32>
    %cst_55 = arith.constant 5.000000e-01 : f32
    %128 = vector.broadcast %cst_55 : f32 to vector<8x384xf32>
    %129 = arith.mulf %128, %127 : vector<8x384xf32>
    %cst_56 = arith.constant 5.000000e-01 : f32
    %130 = vector.broadcast %cst_56 : f32 to vector<8x384xf32>
    %131 = arith.addf %129, %130 : vector<8x384xf32>
    %132 = vector.extract_strided_slice %131 {offsets = [0, 0], sizes = [8, 128], strides = [1, 1]} : vector<8x384xf32> to vector<8x128xf32>
    %133 = vector.extract_strided_slice %131 {offsets = [0, 128], sizes = [8, 128], strides = [1, 1]} : vector<8x384xf32> to vector<8x128xf32>
    %134 = vector.extract_strided_slice %131 {offsets = [0, 256], sizes = [8, 128], strides = [1, 1]} : vector<8x384xf32> to vector<8x128xf32>
    %135 = vector.extract_strided_slice %123 {offsets = [0, 384], sizes = [8, 128], strides = [1, 1]} : vector<8x512xf32> to vector<8x128xf32>
    %136 = math.tanh %135 : vector<8x128xf32>
    %137 = arith.mulf %133, %112 : vector<8x128xf32>
    %138 = arith.mulf %132, %136 : vector<8x128xf32>
    %139 = arith.addf %137, %138 : vector<8x128xf32>
    %140 = math.tanh %139 : vector<8x128xf32>
    %141 = arith.mulf %134, %140 : vector<8x128xf32>
    %c4_57 = arith.constant 4 : index
    %c0_58 = arith.constant 0 : index
    %c0_59 = arith.constant 0 : index
    %142 = vector.load %arg6[%c4_57, %c0_58, %c0_59] : memref<8x8x128xf32, #tpu.memory_space<vmem>>, vector<1x8x128xf32>
    %143 = vector.shape_cast %142 : vector<1x8x128xf32> to vector<8x128xf32>
    %144 = vector.shape_cast %141 : vector<8x128xf32> to vector<1x8x128xf32>
    tpu.vector_store %arg6[%c4_57, %c0_58, %c0_59], %144 {strides = array<i32>} : memref<8x8x128xf32, #tpu.memory_space<vmem>>, vector<1x8x128xf32>,
    %c5 = arith.constant 5 : index
    %c0_60 = arith.constant 0 : index
    %c0_61 = arith.constant 0 : index
    %145 = vector.load %arg2[%c5, %c0_60, %c0_61] : memref<8x8x16xf32, #tpu.memory_space<vmem>>, vector<1x8x16xf32>
    %146 = vector.shape_cast %145 : vector<1x8x16xf32> to vector<8x16xf32>
    %cst_62 = arith.constant dense<0.000000e+00> : vector<8x512xf32>
    %147 = tpu.matmul %146, %3, %cst_62 {dimension_numbers = #tpu.dot_dimension_numbers<[1], [0], [0], [1], [0, 0, 1, 1], [], []>} : vector<8x16xf32>, vector<16x512xf32>, vector<8x512xf32> -> vector<8x512xf32>
    %cst_63 = arith.constant dense<0.000000e+00> : vector<8x512xf32>
    %148 = tpu.matmul %141, %4, %cst_63 {dimension_numbers = #tpu.dot_dimension_numbers<[1], [0], [0], [1], [0, 0, 1, 1], [], []>} : vector<8x128xf32>, vector<128x512xf32>, vector<8x512xf32> -> vector<8x512xf32>
    %149 = arith.addf %147, %148 : vector<8x512xf32>
    %150 = arith.addf %149, %7 : vector<8x512xf32>
    %151 = vector.extract_strided_slice %150 {offsets = [0, 0], sizes = [8, 384], strides = [1, 1]} : vector<8x512xf32> to vector<8x384xf32>
    %cst_64 = arith.constant 5.000000e-01 : f32
    %152 = vector.broadcast %cst_64 : f32 to vector<8x384xf32>
    %153 = arith.mulf %152, %151 : vector<8x384xf32>
    %154 = math.tanh %153 : vector<8x384xf32>
    %cst_65 = arith.constant 5.000000e-01 : f32
    %155 = vector.broadcast %cst_65 : f32 to vector<8x384xf32>
    %156 = arith.mulf %155, %154 : vector<8x384xf32>
    %cst_66 = arith.constant 5.000000e-01 : f32
    %157 = vector.broadcast %cst_66 : f32 to vector<8x384xf32>
    %158 = arith.addf %156, %157 : vector<8x384xf32>
    %159 = vector.extract_strided_slice %158 {offsets = [0, 0], sizes = [8, 128], strides = [1, 1]} : vector<8x384xf32> to vector<8x128xf32>
    %160 = vector.extract_strided_slice %158 {offsets = [0, 128], sizes = [8, 128], strides = [1, 1]} : vector<8x384xf32> to vector<8x128xf32>
    %161 = vector.extract_strided_slice %158 {offsets = [0, 256], sizes = [8, 128], strides = [1, 1]} : vector<8x384xf32> to vector<8x128xf32>
    %162 = vector.extract_strided_slice %150 {offsets = [0, 384], sizes = [8, 128], strides = [1, 1]} : vector<8x512xf32> to vector<8x128xf32>
    %163 = math.tanh %162 : vector<8x128xf32>
    %164 = arith.mulf %160, %139 : vector<8x128xf32>
    %165 = arith.mulf %159, %163 : vector<8x128xf32>
    %166 = arith.addf %164, %165 : vector<8x128xf32>
    %167 = math.tanh %166 : vector<8x128xf32>
    %168 = arith.mulf %161, %167 : vector<8x128xf32>
    %c5_67 = arith.constant 5 : index
    %c0_68 = arith.constant 0 : index
    %c0_69 = arith.constant 0 : index
    %169 = vector.load %arg6[%c5_67, %c0_68, %c0_69] : memref<8x8x128xf32, #tpu.memory_space<vmem>>, vector<1x8x128xf32>
    %170 = vector.shape_cast %169 : vector<1x8x128xf32> to vector<8x128xf32>
    %171 = vector.shape_cast %168 : vector<8x128xf32> to vector<1x8x128xf32>
    tpu.vector_store %arg6[%c5_67, %c0_68, %c0_69], %171 {strides = array<i32>} : memref<8x8x128xf32, #tpu.memory_space<vmem>>, vector<1x8x128xf32>,
    %c6 = arith.constant 6 : index
    %c0_70 = arith.constant 0 : index
    %c0_71 = arith.constant 0 : index
    %172 = vector.load %arg2[%c6, %c0_70, %c0_71] : memref<8x8x16xf32, #tpu.memory_space<vmem>>, vector<1x8x16xf32>
    %173 = vector.shape_cast %172 : vector<1x8x16xf32> to vector<8x16xf32>
    %cst_72 = arith.constant dense<0.000000e+00> : vector<8x512xf32>
    %174 = tpu.matmul %173, %3, %cst_72 {dimension_numbers = #tpu.dot_dimension_numbers<[1], [0], [0], [1], [0, 0, 1, 1], [], []>} : vector<8x16xf32>, vector<16x512xf32>, vector<8x512xf32> -> vector<8x512xf32>
    %cst_73 = arith.constant dense<0.000000e+00> : vector<8x512xf32>
    %175 = tpu.matmul %168, %4, %cst_73 {dimension_numbers = #tpu.dot_dimension_numbers<[1], [0], [0], [1], [0, 0, 1, 1], [], []>} : vector<8x128xf32>, vector<128x512xf32>, vector<8x512xf32> -> vector<8x512xf32>
    %176 = arith.addf %174, %175 : vector<8x512xf32>
    %177 = arith.addf %176, %7 : vector<8x512xf32>
    %178 = vector.extract_strided_slice %177 {offsets = [0, 0], sizes = [8, 384], strides = [1, 1]} : vector<8x512xf32> to vector<8x384xf32>
    %cst_74 = arith.constant 5.000000e-01 : f32
    %179 = vector.broadcast %cst_74 : f32 to vector<8x384xf32>
    %180 = arith.mulf %179, %178 : vector<8x384xf32>
    %181 = math.tanh %180 : vector<8x384xf32>
    %cst_75 = arith.constant 5.000000e-01 : f32
    %182 = vector.broadcast %cst_75 : f32 to vector<8x384xf32>
    %183 = arith.mulf %182, %181 : vector<8x384xf32>
    %cst_76 = arith.constant 5.000000e-01 : f32
    %184 = vector.broadcast %cst_76 : f32 to vector<8x384xf32>
    %185 = arith.addf %183, %184 : vector<8x384xf32>
    %186 = vector.extract_strided_slice %185 {offsets = [0, 0], sizes = [8, 128], strides = [1, 1]} : vector<8x384xf32> to vector<8x128xf32>
    %187 = vector.extract_strided_slice %185 {offsets = [0, 128], sizes = [8, 128], strides = [1, 1]} : vector<8x384xf32> to vector<8x128xf32>
    %188 = vector.extract_strided_slice %185 {offsets = [0, 256], sizes = [8, 128], strides = [1, 1]} : vector<8x384xf32> to vector<8x128xf32>
    %189 = vector.extract_strided_slice %177 {offsets = [0, 384], sizes = [8, 128], strides = [1, 1]} : vector<8x512xf32> to vector<8x128xf32>
    %190 = math.tanh %189 : vector<8x128xf32>
    %191 = arith.mulf %187, %166 : vector<8x128xf32>
    %192 = arith.mulf %186, %190 : vector<8x128xf32>
    %193 = arith.addf %191, %192 : vector<8x128xf32>
    %194 = math.tanh %193 : vector<8x128xf32>
    %195 = arith.mulf %188, %194 : vector<8x128xf32>
    %c6_77 = arith.constant 6 : index
    %c0_78 = arith.constant 0 : index
    %c0_79 = arith.constant 0 : index
    %196 = vector.load %arg6[%c6_77, %c0_78, %c0_79] : memref<8x8x128xf32, #tpu.memory_space<vmem>>, vector<1x8x128xf32>
    %197 = vector.shape_cast %196 : vector<1x8x128xf32> to vector<8x128xf32>
    %198 = vector.shape_cast %195 : vector<8x128xf32> to vector<1x8x128xf32>
    tpu.vector_store %arg6[%c6_77, %c0_78, %c0_79], %198 {strides = array<i32>} : memref<8x8x128xf32, #tpu.memory_space<vmem>>, vector<1x8x128xf32>,
    %c7 = arith.constant 7 : index
    %c0_80 = arith.constant 0 : index
    %c0_81 = arith.constant 0 : index
    %199 = vector.load %arg2[%c7, %c0_80, %c0_81] : memref<8x8x16xf32, #tpu.memory_space<vmem>>, vector<1x8x16xf32>
    %200 = vector.shape_cast %199 : vector<1x8x16xf32> to vector<8x16xf32>
    %cst_82 = arith.constant dense<0.000000e+00> : vector<8x512xf32>
    %201 = tpu.matmul %200, %3, %cst_82 {dimension_numbers = #tpu.dot_dimension_numbers<[1], [0], [0], [1], [0, 0, 1, 1], [], []>} : vector<8x16xf32>, vector<16x512xf32>, vector<8x512xf32> -> vector<8x512xf32>
    %cst_83 = arith.constant dense<0.000000e+00> : vector<8x512xf32>
    %202 = tpu.matmul %195, %4, %cst_83 {dimension_numbers = #tpu.dot_dimension_numbers<[1], [0], [0], [1], [0, 0, 1, 1], [], []>} : vector<8x128xf32>, vector<128x512xf32>, vector<8x512xf32> -> vector<8x512xf32>
    %203 = arith.addf %201, %202 : vector<8x512xf32>
    %204 = arith.addf %203, %7 : vector<8x512xf32>
    %205 = vector.extract_strided_slice %204 {offsets = [0, 0], sizes = [8, 384], strides = [1, 1]} : vector<8x512xf32> to vector<8x384xf32>
    %cst_84 = arith.constant 5.000000e-01 : f32
    %206 = vector.broadcast %cst_84 : f32 to vector<8x384xf32>
    %207 = arith.mulf %206, %205 : vector<8x384xf32>
    %208 = math.tanh %207 : vector<8x384xf32>
    %cst_85 = arith.constant 5.000000e-01 : f32
    %209 = vector.broadcast %cst_85 : f32 to vector<8x384xf32>
    %210 = arith.mulf %209, %208 : vector<8x384xf32>
    %cst_86 = arith.constant 5.000000e-01 : f32
    %211 = vector.broadcast %cst_86 : f32 to vector<8x384xf32>
    %212 = arith.addf %210, %211 : vector<8x384xf32>
    %213 = vector.extract_strided_slice %212 {offsets = [0, 0], sizes = [8, 128], strides = [1, 1]} : vector<8x384xf32> to vector<8x128xf32>
    %214 = vector.extract_strided_slice %212 {offsets = [0, 128], sizes = [8, 128], strides = [1, 1]} : vector<8x384xf32> to vector<8x128xf32>
    %215 = vector.extract_strided_slice %212 {offsets = [0, 256], sizes = [8, 128], strides = [1, 1]} : vector<8x384xf32> to vector<8x128xf32>
    %216 = vector.extract_strided_slice %204 {offsets = [0, 384], sizes = [8, 128], strides = [1, 1]} : vector<8x512xf32> to vector<8x128xf32>
    %217 = math.tanh %216 : vector<8x128xf32>
    %218 = arith.mulf %214, %193 : vector<8x128xf32>
    %219 = arith.mulf %213, %217 : vector<8x128xf32>
    %220 = arith.addf %218, %219 : vector<8x128xf32>
    %221 = math.tanh %220 : vector<8x128xf32>
    %222 = arith.mulf %215, %221 : vector<8x128xf32>
    %c7_87 = arith.constant 7 : index
    %c0_88 = arith.constant 0 : index
    %c0_89 = arith.constant 0 : index
    %223 = vector.load %arg6[%c7_87, %c0_88, %c0_89] : memref<8x8x128xf32, #tpu.memory_space<vmem>>, vector<1x8x128xf32>
    %224 = vector.shape_cast %223 : vector<1x8x128xf32> to vector<8x128xf32>
    %225 = vector.shape_cast %222 : vector<8x128xf32> to vector<1x8x128xf32>
    tpu.vector_store %arg6[%c7_87, %c0_88, %c0_89], %225 {strides = array<i32>} : memref<8x8x128xf32, #tpu.memory_space<vmem>>, vector<1x8x128xf32>,
    %c0_90 = arith.constant 0 : index
    %c0_91 = arith.constant 0 : index
    %226 = vector.load %arg8[%c0_90, %c0_91] : memref<8x128xf32, #tpu.memory_space<vmem>>, vector<8x128xf32>
    tpu.vector_store %arg8[%c0_90, %c0_91], %222 {strides = array<i32>} : memref<8x128xf32, #tpu.memory_space<vmem>>, vector<8x128xf32>,
    %c0_92 = arith.constant 0 : index
    %c0_93 = arith.constant 0 : index
    %227 = vector.load %arg9[%c0_92, %c0_93] : memref<8x128xf32, #tpu.memory_space<vmem>>, vector<8x128xf32>
    tpu.vector_store %arg9[%c0_92, %c0_93], %220 {strides = array<i32>} : memref<8x128xf32, #tpu.memory_space<vmem>>, vector<8x128xf32>,
    %c0_i32_94 = arith.constant 0 : i32
    %228 = arith.cmpi eq, %arg1, %c0_i32_94 : i32
    %229 = arith.extui %228 : i1 to i32
    %c0_i32_95 = arith.constant 0 : i32
    %230 = arith.cmpi ne, %229, %c0_i32_95 : i32
    scf.if %230 {
      %c0_96 = arith.constant 0 : index
      %c0_97 = arith.constant 0 : index
      %231 = vector.load %arg7[%c0_96, %c0_97] : memref<8x128xf32, #tpu.memory_space<vmem>>, vector<8x128xf32>
      tpu.vector_store %arg7[%c0_96, %c0_97], %220 {strides = array<i32>} : memref<8x128xf32, #tpu.memory_space<vmem>>, vector<8x128xf32>,
    } else {
    }
    return
  }
  func.func @transform_0(%arg0: i32, %arg1: i32) -> (i32, i32, i32) {
    %c0_i32 = arith.constant 0 : i32
    %c0_i32_0 = arith.constant 0 : i32
    return %arg1, %arg0, %c0_i32 : i32, i32, i32
  }
  func.func @transform_1(%arg0: i32, %arg1: i32) -> (i32, i32) {
    %c0_i32 = arith.constant 0 : i32
    %c0_i32_0 = arith.constant 0 : i32
    %c0_i32_1 = arith.constant 0 : i32
    return %c0_i32, %c0_i32_0 : i32, i32
  }
  func.func @transform_2(%arg0: i32, %arg1: i32) -> (i32, i32) {
    %c0_i32 = arith.constant 0 : i32
    %c0_i32_0 = arith.constant 0 : i32
    %c0_i32_1 = arith.constant 0 : i32
    return %c0_i32, %c0_i32_0 : i32, i32
  }
  func.func @transform_3(%arg0: i32, %arg1: i32) -> (i32, i32) {
    %c0_i32 = arith.constant 0 : i32
    %c0_i32_0 = arith.constant 0 : i32
    %c0_i32_1 = arith.constant 0 : i32
    return %c0_i32, %c0_i32_0 : i32, i32
  }
  func.func @transform_4(%arg0: i32, %arg1: i32) -> (i32, i32, i32) {
    %c0_i32 = arith.constant 0 : i32
    %c0_i32_0 = arith.constant 0 : i32
    return %arg1, %arg0, %c0_i32 : i32, i32, i32
  }
  func.func @transform_5(%arg0: i32, %arg1: i32) -> (i32, i32) {
    %c0_i32 = arith.constant 0 : i32
    %c0_i32_0 = arith.constant 0 : i32
    return %arg0, %c0_i32 : i32, i32
  }
}

</mosaic_0001>

<llo_original>
// kernel: _lambda_.1
$region0: #{_lambda_.1}
  #allocation0 [shape = 'u32[]', space=smem, size = 0x4, offset = 0x4, fixed_abs, tag = 'smem constant byte address 0x4 - core index']
  #allocation1 [shape = 'u32[144,128]{1,0:T(1,128)}', space=vmem, size = 0x12000, scoped, tag = 'internal scratch']
  #allocation2 [shape = 'f32[8,128]{1,0:T(8,128)}', space=vmem, size = 0x1000, scoped, tag = 'scratch operand']
  #allocation3 [shape = 'f32[8,128]{1,0:T(8,128)}', space=vmem, size = 0x1000, scoped, tag = 'scratch operand']
  %s0 = inlined_call_operand.vmem [shape: f32[8,8,16], index: 0, kind: input, shape index: {}]
  %s1 = inlined_call_operand.vmem [shape: f32[16,512], index: 1, kind: input, shape index: {}]
  %s2 = inlined_call_operand.vmem [shape: f32[128,512], index: 2, kind: input, shape index: {}]
  %s3 = inlined_call_operand.vmem [shape: f32[1,512], index: 3, kind: input, shape index: {}]
  %s4 = inlined_call_operand.vmem [shape: f32[8,8,128], index: 4, kind: output, shape index: {0}]
  %s5 = inlined_call_operand.vmem [shape: f32[8,128], index: 5, kind: output, shape index: {1}]
  %6 = xla_tuple %s4, %s5
  %s7 = sld [smem:[#allocation0]]
  $region42: #{_lambda_.1} parent=0
    _
  %s9 = ssub.s32 1, %s7
  %s10 = scalar_select 0, %s9, %s7
  // Predicated region
  $region2: #{_lambda_.1} parent=0 // pred_check
    _
  $region3: #{_lambda_.1} parent=0 // pred_check_branch
    %12 = sbr.rel (0) target = $region5
  $region4: #{_lambda_.1} parent=0 // pred_region
    _
  $region5: #{_lambda_.1} parent=0 // pred_fallthru
    _
  // Predicated region
  $region6: #{_lambda_.1} parent=0 // pred_check
    _
  $region7: #{_lambda_.1} parent=0 // pred_check_branch
    %14 = sbr.rel (0) target = $region9
  $region8: #{_lambda_.1} parent=0 // pred_region
    _
  $region9: #{_lambda_.1} parent=0 // pred_fallthru
    _
  // Predicated region
  $region10: #{_lambda_.1} parent=0 // pred_check
    _
  $region11: #{_lambda_.1} parent=0 // pred_check_branch
    %16 = sbr.rel (0) target = $region13
  $region12: #{_lambda_.1} parent=0 // pred_region
    _
  $region13: #{_lambda_.1} parent=0 // pred_fallthru
    _
  // Predicated region
  $region14: #{_lambda_.1} parent=0 // pred_check
    _
  $region15: #{_lambda_.1} parent=0 // pred_check_branch
    %18 = sbr.rel (0) target = $region17
  $region16: #{_lambda_.1} parent=0 // pred_region
    _
  $region17: #{_lambda_.1} parent=0 // pred_fallthru
    _
  %p19 = scmp.eq.s32.totalorder 0, 0
  // Predicated region
  $region18: #{_lambda_.1} parent=0 // pred_check
    %p20 = pneg %p19
  $region19: #{_lambda_.1} parent=0 // pred_check_branch
    %22 = sbr.rel (%p20) target = $region21
  $region20: #{_lambda_.1} parent=0 // pred_region
    %23 = vst [vmem:[#allocation2] sm:$0xff] 0.0
    %24 = vst [vmem:[#allocation3] sm:$0xff] 0.0
  $region21: #{_lambda_.1} parent=0 // pred_fallthru
    _
  %v25 = vld [vmem:[%s1] sm:$0xff]
  %v26 = vld [vmem:[%s1 + $0x8] sm:$0xff]
  %v27 = vld [vmem:[%s1 + $0x10] sm:$0xff]
  %v28 = vld [vmem:[%s1 + $0x18] sm:$0xff]
  %v29 = vld [vmem:[%s1 + $0x20] sm:$0xff]
  %v30 = vld [vmem:[%s1 + $0x28] sm:$0xff]
  %v31 = vld [vmem:[%s1 + $0x30] sm:$0xff]
  %v32 = vld [vmem:[%s1 + $0x38] sm:$0xff]
  %v33 = vld [vmem:[%s2] sm:$0xff]
  %v34 = vld [vmem:[%s2 + $0x8] sm:$0xff]
  %v35 = vld [vmem:[%s2 + $0x10] sm:$0xff]
  %v36 = vld [vmem:[%s2 + $0x18] sm:$0xff]
  %v37 = vld [vmem:[%s2 + $0x20] sm:$0xff]
  %v38 = vld [vmem:[%s2 + $0x28] sm:$0xff]
  %v39 = vld [vmem:[%s2 + $0x30] sm:$0xff]
  %v40 = vld [vmem:[%s2 + $0x38] sm:$0xff]
  %v41 = vld [vmem:[%s2 + $0x40] sm:$0xff]
  %v42 = vld [vmem:[%s2 + $0x48] sm:$0xff]
  %v43 = vld [vmem:[%s2 + $0x50] sm:$0xff]
  %v44 = vld [vmem:[%s2 + $0x58] sm:$0xff]
  %v45 = vld [vmem:[%s2 + $0x60] sm:$0xff]
  %v46 = vld [vmem:[%s2 + $0x68] sm:$0xff]
  %v47 = vld [vmem:[%s2 + $0x70] sm:$0xff]
  %v48 = vld [vmem:[%s2 + $0x78] sm:$0xff]
  %v49 = vld [vmem:[%s2 + $0x80] sm:$0xff]
  %v50 = vld [vmem:[%s2 + $0x88] sm:$0xff]
  %v51 = vld [vmem:[%s2 + $0x90] sm:$0xff]
  %v52 = vld [vmem:[%s2 + $0x98] sm:$0xff]
  %v53 = vld [vmem:[%s2 + $0xa0] sm:$0xff]
  %v54 = vld [vmem:[%s2 + $0xa8] sm:$0xff]
  %v55 = vld [vmem:[%s2 + $0xb0] sm:$0xff]
  %v56 = vld [vmem:[%s2 + $0xb8] sm:$0xff]
  %v57 = vld [vmem:[%s2 + $0xc0] sm:$0xff]
  %v58 = vld [vmem:[%s2 + $0xc8] sm:$0xff]
  %v59 = vld [vmem:[%s2 + $0xd0] sm:$0xff]
  %v60 = vld [vmem:[%s2 + $0xd8] sm:$0xff]
  %v61 = vld [vmem:[%s2 + $0xe0] sm:$0xff]
  %v62 = vld [vmem:[%s2 + $0xe8] sm:$0xff]
  %v63 = vld [vmem:[%s2 + $0xf0] sm:$0xff]
  %v64 = vld [vmem:[%s2 + $0xf8] sm:$0xff]
  %v65 = vld [vmem:[%s2 + $0x100] sm:$0xff]
  %v66 = vld [vmem:[%s2 + $0x108] sm:$0xff]
  %v67 = vld [vmem:[%s2 + $0x110] sm:$0xff]
  %v68 = vld [vmem:[%s2 + $0x118] sm:$0xff]
  %v69 = vld [vmem:[%s2 + $0x120] sm:$0xff]
  %v70 = vld [vmem:[%s2 + $0x128] sm:$0xff]
  %v71 = vld [vmem:[%s2 + $0x130] sm:$0xff]
  %v72 = vld [vmem:[%s2 + $0x138] sm:$0xff]
  %v73 = vld [vmem:[%s2 + $0x140] sm:$0xff]
  %v74 = vld [vmem:[%s2 + $0x148] sm:$0xff]
  %v75 = vld [vmem:[%s2 + $0x150] sm:$0xff]
  %v76 = vld [vmem:[%s2 + $0x158] sm:$0xff]
  %v77 = vld [vmem:[%s2 + $0x160] sm:$0xff]
  %v78 = vld [vmem:[%s2 + $0x168] sm:$0xff]
  %v79 = vld [vmem:[%s2 + $0x170] sm:$0xff]
  %v80 = vld [vmem:[%s2 + $0x178] sm:$0xff]
  %v81 = vld [vmem:[%s2 + $0x180] sm:$0xff]
  %v82 = vld [vmem:[%s2 + $0x188] sm:$0xff]
  %v83 = vld [vmem:[%s2 + $0x190] sm:$0xff]
  %v84 = vld [vmem:[%s2 + $0x198] sm:$0xff]
  %v85 = vld [vmem:[%s2 + $0x1a0] sm:$0xff]
  %v86 = vld [vmem:[%s2 + $0x1a8] sm:$0xff]
  %v87 = vld [vmem:[%s2 + $0x1b0] sm:$0xff]
  %v88 = vld [vmem:[%s2 + $0x1b8] sm:$0xff]
  %v89 = vld [vmem:[%s2 + $0x1c0] sm:$0xff]
  %v90 = vld [vmem:[%s2 + $0x1c8] sm:$0xff]
  %v91 = vld [vmem:[%s2 + $0x1d0] sm:$0xff]
  %v92 = vld [vmem:[%s2 + $0x1d8] sm:$0xff]
  %v93 = vld [vmem:[%s2 + $0x1e0] sm:$0xff]
  %v94 = vld [vmem:[%s2 + $0x1e8] sm:$0xff]
  %v95 = vld [vmem:[%s2 + $0x1f0] sm:$0xff]
  %v96 = vld [vmem:[%s2 + $0x1f8] sm:$0xff]
  %v97 = vld [vmem:[%s3] sm:$0xf]
  %v99 = vlaneseq
  %v100 = vshrl.u32 %v99, 7
  %v101 = vsub.s32 0, %v100
  %v102 = vrot.slane %v97, %v101
  %v103 = vlaneseq
  %v104 = vshrl.u32 %v103, 7
  %v105 = vsub.s32 1, %v104
  %v106 = vrot.slane %v97, %v105
  %v107 = vlaneseq
  %v108 = vshrl.u32 %v107, 7
  %v109 = vsub.s32 2, %v108
  %v110 = vrot.slane %v97, %v109
  %v111 = vlaneseq
  %v112 = vshrl.u32 %v111, 7
  %v113 = vsub.s32 3, %v112
  %v114 = vrot.slane %v97, %v113
  %v119 = vld [vmem:[#allocation2] sm:$0xff]
  %v120 = vld [vmem:[#allocation3] sm:$0xff]
  %v121 = vld [vmem:[%s0] sm:$0xff]
  %122 = vmatprep.subr.mxu0 %v94
  %123 = vmatpush1.msra.mxu0 %v93
  %124 = vmatprep.subr.mxu0 %v90
  %125 = vmatpush1.msra.mxu0 %v89
  %126 = vmatprep.subr.mxu0 %v86
  %127 = vmatpush1.msra.mxu0 %v85
  %128 = vmatprep.subr.mxu0 %v82
  %129 = vmatpush1.msra.mxu0 %v81
  %130 = vmatprep.subr.mxu0 %v78
  %131 = vmatpush1.msra.mxu0 %v77
  %132 = vmatprep.subr.mxu0 %v74
  %133 = vmatpush1.msra.mxu0 %v73
  %134 = vmatprep.subr.mxu0 %v70
  %135 = vmatpush1.msra.mxu0 %v69
  %136 = vmatprep.subr.mxu0 %v66
  %137 = vmatpush1.msra.mxu0 %v65
  %138 = vmatprep.subr.mxu0 %v62
  %139 = vmatpush1.msra.mxu0 %v61
  %140 = vmatprep.subr.mxu0 %v58
  %141 = vmatpush1.msra.mxu0 %v57
  %142 = vmatprep.subr.mxu0 %v54
  %143 = vmatpush1.msra.mxu0 %v53
  %144 = vmatprep.subr.mxu0 %v50
  %145 = vmatpush1.msra.mxu0 %v49
  %146 = vmatprep.subr.mxu0 %v46
  %147 = vmatpush1.msra.mxu0 %v45
  %148 = vmatprep.subr.mxu0 %v42
  %149 = vmatpush1.msra.mxu0 %v41
  %150 = vmatprep.subr.mxu0 %v38
  %151 = vmatpush1.msra.mxu0 %v37
  %152 = vmatprep.subr.mxu0 %v34
  %153 = vmatpush1.msra.mxu0 %v33
  %154 = vmatprep.subr.mxu0 0.0
  %155 = vmatpush2.msra.mxu0 0.0
  %156 = vmatprep.subr.mxu0 0.0
  %157 = vmatpush2.msra.mxu0 0.0
  %158 = vmatprep.subr.mxu0 0.0
  %159 = vmatpush2.msra.mxu0 0.0
  %160 = vmatprep.subr.mxu0 0.0
  %161 = vmatpush2.msra.mxu0 0.0
  %162 = vmatprep.subr.mxu0 0.0
  %163 = vmatpush2.msra.mxu0 0.0
  %164 = vmatprep.subr.mxu0 0.0
  %165 = vmatpush2.msra.mxu0 0.0
  %166 = vmatprep.subr.mxu0 0.0
  %167 = vmatpush2.msra.mxu0 0.0
  %168 = vmatprep.subr.mxu0 0.0
  %169 = vmatpush2.msra.mxu0 0.0
  %170 = vmatprep.subr.mxu0 0.0
  %171 = vmatpush2.msra.mxu0 0.0
  %172 = vmatprep.subr.mxu0 0.0
  %173 = vmatpush2.msra.mxu0 0.0
  %174 = vmatprep.subr.mxu0 0.0
  %175 = vmatpush2.msra.mxu0 0.0
  %176 = vmatprep.subr.mxu0 0.0
  %177 = vmatpush2.msra.mxu0 0.0
  %178 = vmatprep.subr.mxu0 0.0
  %179 = vmatpush2.msra.mxu0 0.0
  %180 = vmatprep.subr.mxu0 0.0
  %181 = vmatpush2.msra.mxu0 0.0
  %182 = vmatprep.subr.mxu0 0.0
  %183 = vmatpush2.msra.mxu0 0.0
  %184 = vmatprep.subr.mxu0 0.0
  %185 = vmatpush2.msra.mxu0 0.0
  %186 = vmatprep.mubr.f32.mxu0 0.0
  %187 = vmatmul.mubr.f32.gmra.mxu0 %v119
  %v188 = vpop.f32.mrf.mxu0
  %v189 = vadd.f32 0.0, %v188
  %v190 = vpop.f32.mrf.mxu0
  %v191 = vadd.f32 0.0, %v190
  %192 = vdwg.mxu0
  %193 = vmatprep.subr.mxu0 %v96
  %194 = vmatpush1.msra.mxu0 %v95
  %195 = vmatprep.subr.mxu0 %v92
  %196 = vmatpush1.msra.mxu0 %v91
  %197 = vmatprep.subr.mxu0 %v88
  %198 = vmatpush1.msra.mxu0 %v87
  %199 = vmatprep.subr.mxu0 %v84
  %200 = vmatpush1.msra.mxu0 %v83
  %201 = vmatprep.subr.mxu0 %v80
  %202 = vmatpush1.msra.mxu0 %v79
  %203 = vmatprep.subr.mxu0 %v76
  %204 = vmatpush1.msra.mxu0 %v75
  %205 = vmatprep.subr.mxu0 %v72
  %206 = vmatpush1.msra.mxu0 %v71
  %207 = vmatprep.subr.mxu0 %v68
  %208 = vmatpush1.msra.mxu0 %v67
  %209 = vmatprep.subr.mxu0 %v64
  %210 = vmatpush1.msra.mxu0 %v63
  %211 = vmatprep.subr.mxu0 %v60
  %212 = vmatpush1.msra.mxu0 %v59
  %213 = vmatprep.subr.mxu0 %v56
  %214 = vmatpush1.msra.mxu0 %v55
  %215 = vmatprep.subr.mxu0 %v52
  %216 = vmatpush1.msra.mxu0 %v51
  %217 = vmatprep.subr.mxu0 %v48
  %218 = vmatpush1.msra.mxu0 %v47
  %219 = vmatprep.subr.mxu0 %v44
  %220 = vmatpush1.msra.mxu0 %v43
  %221 = vmatprep.subr.mxu0 %v40
  %222 = vmatpush1.msra.mxu0 %v39
  %223 = vmatprep.subr.mxu0 %v36
  %224 = vmatpush1.msra.mxu0 %v35
  %225 = vmatprep.subr.mxu0 0.0
  %226 = vmatpush2.msra.mxu0 0.0
  %227 = vmatprep.subr.mxu0 0.0
  %228 = vmatpush2.msra.mxu0 0.0
  %229 = vmatprep.subr.mxu0 0.0
  %230 = vmatpush2.msra.mxu0 0.0
  %231 = vmatprep.subr.mxu0 0.0
  %232 = vmatpush2.msra.mxu0 0.0
  %233 = vmatprep.subr.mxu0 0.0
  %234 = vmatpush2.msra.mxu0 0.0
  %235 = vmatprep.subr.mxu0 0.0
  %236 = vmatpush2.msra.mxu0 0.0
  %237 = vmatprep.subr.mxu0 0.0
  %238 = vmatpush2.msra.mxu0 0.0
  %239 = vmatprep.subr.mxu0 0.0
  %240 = vmatpush2.msra.mxu0 0.0
  %241 = vmatprep.subr.mxu0 0.0
  %242 = vmatpush2.msra.mxu0 0.0
  %243 = vmatprep.subr.mxu0 0.0
  %244 = vmatpush2.msra.mxu0 0.0
  %245 = vmatprep.subr.mxu0 0.0
  %246 = vmatpush2.msra.mxu0 0.0
  %247 = vmatprep.subr.mxu0 0.0
  %248 = vmatpush2.msra.mxu0 0.0
  %249 = vmatprep.subr.mxu0 0.0
  %250 = vmatpush2.msra.mxu0 0.0
  %251 = vmatprep.subr.mxu0 0.0
  %252 = vmatpush2.msra.mxu0 0.0
  %253 = vmatprep.subr.mxu0 0.0
  %254 = vmatpush2.msra.mxu0 0.0
  %255 = vmatprep.subr.mxu0 0.0
  %256 = vmatpush2.msra.mxu0 0.0
  %257 = vmatprep.mubr.f32.mxu0 0.0
  %258 = vmatmul.mubr.f32.gmra.mxu0 %v119
  %v259 = vpop.f32.mrf.mxu0
  %v260 = vadd.f32 0.0, %v259
  %v261 = vpop.f32.mrf.mxu0
  %v262 = vadd.f32 0.0, %v261
  %263 = vdwg.mxu0
  %vm264 = vcmask 130048
  %v266 = vsel %vm264, %v121, 0
  %268 = vmatprep.subr.mxu0 0.0
  %269 = vmatpush1.msra.mxu0 0.0
  %270 = vmatprep.subr.mxu0 0.0
  %271 = vmatpush1.msra.mxu0 0.0
  %272 = vmatprep.subr.mxu0 0.0
  %273 = vmatpush1.msra.mxu0 0.0
  %274 = vmatprep.subr.mxu0 0.0
  %275 = vmatpush1.msra.mxu0 0.0
  %276 = vmatprep.subr.mxu0 0.0
  %277 = vmatpush1.msra.mxu0 0.0
  %278 = vmatprep.subr.mxu0 0.0
  %279 = vmatpush1.msra.mxu0 0.0
  %280 = vmatprep.subr.mxu0 0.0
  %281 = vmatpush1.msra.mxu0 0.0
  %282 = vmatprep.subr.mxu0 0.0
  %283 = vmatpush1.msra.mxu0 0.0
  %284 = vmatprep.subr.mxu0 0.0
  %285 = vmatpush1.msra.mxu0 0.0
  %286 = vmatprep.subr.mxu0 0.0
  %287 = vmatpush1.msra.mxu0 0.0
  %288 = vmatprep.subr.mxu0 0.0
  %289 = vmatpush1.msra.mxu0 0.0
  %290 = vmatprep.subr.mxu0 0.0
  %291 = vmatpush1.msra.mxu0 0.0
  %292 = vmatprep.subr.mxu0 0.0
  %293 = vmatpush1.msra.mxu0 0.0
  %294 = vmatprep.subr.mxu0 0.0
  %295 = vmatpush1.msra.mxu0 0.0
  %296 = vmatprep.subr.mxu0 %v30
  %297 = vmatpush1.msra.mxu0 %v29
  %298 = vmatprep.subr.mxu0 %v26
  %299 = vmatpush1.msra.mxu0 %v25
  %300 = vmatprep.subr.mxu0 0.0
  %301 = vmatpush2.msra.mxu0 0.0
  %302 = vmatprep.subr.mxu0 0.0
  %303 = vmatpush2.msra.mxu0 0.0
  %304 = vmatprep.subr.mxu0 0.0
  %305 = vmatpush2.msra.mxu0 0.0
  %306 = vmatprep.subr.mxu0 0.0
  %307 = vmatpush2.msra.mxu0 0.0
  %308 = vmatprep.subr.mxu0 0.0
  %309 = vmatpush2.msra.mxu0 0.0
  %310 = vmatprep.subr.mxu0 0.0
  %311 = vmatpush2.msra.mxu0 0.0
  %312 = vmatprep.subr.mxu0 0.0
  %313 = vmatpush2.msra.mxu0 0.0
  %314 = vmatprep.subr.mxu0 0.0
  %315 = vmatpush2.msra.mxu0 0.0
  %316 = vmatprep.subr.mxu0 0.0
  %317 = vmatpush2.msra.mxu0 0.0
  %318 = vmatprep.subr.mxu0 0.0
  %319 = vmatpush2.msra.mxu0 0.0
  %320 = vmatprep.subr.mxu0 0.0
  %321 = vmatpush2.msra.mxu0 0.0
  %322 = vmatprep.subr.mxu0 0.0
  %323 = vmatpush2.msra.mxu0 0.0
  %324 = vmatprep.subr.mxu0 0.0
  %325 = vmatpush2.msra.mxu0 0.0
  %326 = vmatprep.subr.mxu0 0.0
  %327 = vmatpush2.msra.mxu0 0.0
  %328 = vmatprep.subr.mxu0 0.0
  %329 = vmatpush2.msra.mxu0 0.0
  %330 = vmatprep.subr.mxu0 0.0
  %331 = vmatpush2.msra.mxu0 0.0
  %332 = vmatprep.mubr.f32.mxu0 0.0
  %333 = vmatmul.mubr.f32.gmra.mxu0 %v266
  %v334 = vpop.f32.mrf.mxu0
  %v335 = vadd.f32 %v189, %v334
  %v336 = vpop.f32.mrf.mxu0
  %v337 = vadd.f32 %v191, %v336
  %338 = vdwg.mxu0
  %339 = vmatprep.subr.mxu0 0.0
  %340 = vmatpush1.msra.mxu0 0.0
  %341 = vmatprep.subr.mxu0 0.0
  %342 = vmatpush1.msra.mxu0 0.0
  %343 = vmatprep.subr.mxu0 0.0
  %344 = vmatpush1.msra.mxu0 0.0
  %345 = vmatprep.subr.mxu0 0.0
  %346 = vmatpush1.msra.mxu0 0.0
  %347 = vmatprep.subr.mxu0 0.0
  %348 = vmatpush1.msra.mxu0 0.0
  %349 = vmatprep.subr.mxu0 0.0
  %350 = vmatpush1.msra.mxu0 0.0
  %351 = vmatprep.subr.mxu0 0.0
  %352 = vmatpush1.msra.mxu0 0.0
  %353 = vmatprep.subr.mxu0 0.0
  %354 = vmatpush1.msra.mxu0 0.0
  %355 = vmatprep.subr.mxu0 0.0
  %356 = vmatpush1.msra.mxu0 0.0
  %357 = vmatprep.subr.mxu0 0.0
  %358 = vmatpush1.msra.mxu0 0.0
  %359 = vmatprep.subr.mxu0 0.0
  %360 = vmatpush1.msra.mxu0 0.0
  %361 = vmatprep.subr.mxu0 0.0
  %362 = vmatpush1.msra.mxu0 0.0
  %363 = vmatprep.subr.mxu0 0.0
  %364 = vmatpush1.msra.mxu0 0.0
  %365 = vmatprep.subr.mxu0 0.0
  %366 = vmatpush1.msra.mxu0 0.0
  %367 = vmatprep.subr.mxu0 %v32
  %368 = vmatpush1.msra.mxu0 %v31
  %369 = vmatprep.subr.mxu0 %v28
  %370 = vmatpush1.msra.mxu0 %v27
  %371 = vmatprep.subr.mxu0 0.0
  %372 = vmatpush2.msra.mxu0 0.0
  %373 = vmatprep.subr.mxu0 0.0
  %374 = vmatpush2.msra.mxu0 0.0
  %375 = vmatprep.subr.mxu0 0.0
  %376 = vmatpush2.msra.mxu0 0.0
  %377 = vmatprep.subr.mxu0 0.0
  %378 = vmatpush2.msra.mxu0 0.0
  %379 = vmatprep.subr.mxu0 0.0
  %380 = vmatpush2.msra.mxu0 0.0
  %381 = vmatprep.subr.mxu0 0.0
  %382 = vmatpush2.msra.mxu0 0.0
  %383 = vmatprep.subr.mxu0 0.0
  %384 = vmatpush2.msra.mxu0 0.0
  %385 = vmatprep.subr.mxu0 0.0
  %386 = vmatpush2.msra.mxu0 0.0
  %387 = vmatprep.subr.mxu0 0.0
  %388 = vmatpush2.msra.mxu0 0.0
  %389 = vmatprep.subr.mxu0 0.0
  %390 = vmatpush2.msra.mxu0 0.0
  %391 = vmatprep.subr.mxu0 0.0
  %392 = vmatpush2.msra.mxu0 0.0
  %393 = vmatprep.subr.mxu0 0.0
  %394 = vmatpush2.msra.mxu0 0.0
  %395 = vmatprep.subr.mxu0 0.0
  %396 = vmatpush2.msra.mxu0 0.0
  %397 = vmatprep.subr.mxu0 0.0
  %398 = vmatpush2.msra.mxu0 0.0
  %399 = vmatprep.subr.mxu0 0.0
  %400 = vmatpush2.msra.mxu0 0.0
  %401 = vmatprep.subr.mxu0 0.0
  %402 = vmatpush2.msra.mxu0 0.0
  %403 = vmatprep.mubr.f32.mxu0 0.0
  %404 = vmatmul.mubr.f32.gmra.mxu0 %v266
  %v405 = vpop.f32.mrf.mxu0
  %v406 = vadd.f32 %v260, %v405
  %v407 = vpop.f32.mrf.mxu0
  %v408 = vadd.f32 %v262, %v407
  %409 = vdwg.mxu0
  %v410 = vadd.f32 %v335, %v102
  %v411 = vadd.f32 %v337, %v106
  %v412 = vadd.f32 %v406, %v110
  %v413 = vadd.f32 %v408, %v114
  %v414 = vmul.f32 %v410, 0.5
  %v415 = vmul.f32 %v411, 0.5
  %v416 = vmul.f32 %v412, 0.5
  %v417 = vtanh.pop %v414
  %v418 = vtanh.pop %v415
  %v419 = vtanh.pop %v416
  %v420 = vmul.f32 %v417, 0.5
  %v421 = vmul.f32 %v418, 0.5
  %v422 = vmul.f32 %v419, 0.5
  %v423 = vadd.f32 %v420, 0.5
  %v424 = vadd.f32 %v421, 0.5
  %v425 = vadd.f32 %v422, 0.5
  %v426 = vtanh.pop %v413
  %v427 = vmul.f32 %v424, %v120
  %v428 = vmul.f32 %v423, %v426
  %v429 = vadd.f32 %v427, %v428
  %v430 = vtanh.pop %v429
  %v431 = vmul.f32 %v425, %v430
  %432 = vst [vmem:[%s4] sm:$0xff] %v431
  %s433 = scalar_lea.vmem %s0, 8
  %v434 = vld [vmem:[%s433] sm:$0xff]
  %435 = vmatprep.subr.mxu0 %v94
  %436 = vmatpush1.msra.mxu0 %v93
  %437 = vmatprep.subr.mxu0 %v90
  %438 = vmatpush1.msra.mxu0 %v89
  %439 = vmatprep.subr.mxu0 %v86
  %440 = vmatpush1.msra.mxu0 %v85
  %441 = vmatprep.subr.mxu0 %v82
  %442 = vmatpush1.msra.mxu0 %v81
  %443 = vmatprep.subr.mxu0 %v78
  %444 = vmatpush1.msra.mxu0 %v77
  %445 = vmatprep.subr.mxu0 %v74
  %446 = vmatpush1.msra.mxu0 %v73
  %447 = vmatprep.subr.mxu0 %v70
  %448 = vmatpush1.msra.mxu0 %v69
  %449 = vmatprep.subr.mxu0 %v66
  %450 = vmatpush1.msra.mxu0 %v65
  %451 = vmatprep.subr.mxu0 %v62
  %452 = vmatpush1.msra.mxu0 %v61
  %453 = vmatprep.subr.mxu0 %v58
  %454 = vmatpush1.msra.mxu0 %v57
  %455 = vmatprep.subr.mxu0 %v54
  %456 = vmatpush1.msra.mxu0 %v53
  %457 = vmatprep.subr.mxu0 %v50
  %458 = vmatpush1.msra.mxu0 %v49
  %459 = vmatprep.subr.mxu0 %v46
  %460 = vmatpush1.msra.mxu0 %v45
  %461 = vmatprep.subr.mxu0 %v42
  %462 = vmatpush1.msra.mxu0 %v41
  %463 = vmatprep.subr.mxu0 %v38
  %464 = vmatpush1.msra.mxu0 %v37
  %465 = vmatprep.subr.mxu0 %v34
  %466 = vmatpush1.msra.mxu0 %v33
  %467 = vmatprep.subr.mxu0 0.0
  %468 = vmatpush2.msra.mxu0 0.0
  %469 = vmatprep.subr.mxu0 0.0
  %470 = vmatpush2.msra.mxu0 0.0
  %471 = vmatprep.subr.mxu0 0.0
  %472 = vmatpush2.msra.mxu0 0.0
  %473 = vmatprep.subr.mxu0 0.0
  %474 = vmatpush2.msra.mxu0 0.0
  %475 = vmatprep.subr.mxu0 0.0
  %476 = vmatpush2.msra.mxu0 0.0
  %477 = vmatprep.subr.mxu0 0.0
  %478 = vmatpush2.msra.mxu0 0.0
  %479 = vmatprep.subr.mxu0 0.0
  %480 = vmatpush2.msra.mxu0 0.0
  %481 = vmatprep.subr.mxu0 0.0
  %482 = vmatpush2.msra.mxu0 0.0
  %483 = vmatprep.subr.mxu0 0.0
  %484 = vmatpush2.msra.mxu0 0.0
  %485 = vmatprep.subr.mxu0 0.0
  %486 = vmatpush2.msra.mxu0 0.0
  %487 = vmatprep.subr.mxu0 0.0
  %488 = vmatpush2.msra.mxu0 0.0
  %489 = vmatprep.subr.mxu0 0.0
  %490 = vmatpush2.msra.mxu0 0.0
  %491 = vmatprep.subr.mxu0 0.0
  %492 = vmatpush2.msra.mxu0 0.0
  %493 = vmatprep.subr.mxu0 0.0
  %494 = vmatpush2.msra.mxu0 0.0
  %495 = vmatprep.subr.mxu0 0.0
  %496 = vmatpush2.msra.mxu0 0.0
  %497 = vmatprep.subr.mxu0 0.0
  %498 = vmatpush2.msra.mxu0 0.0
  %499 = vmatprep.mubr.f32.mxu0 0.0
  %500 = vmatmul.mubr.f32.gmra.mxu0 %v431
  %v501 = vpop.f32.mrf.mxu0
  %v502 = vadd.f32 0.0, %v501
  %v503 = vpop.f32.mrf.mxu0
  %v504 = vadd.f32 0.0, %v503
  %505 = vdwg.mxu0
  %506 = vmatprep.subr.mxu0 %v96
  %507 = vmatpush1.msra.mxu0 %v95
  %508 = vmatprep.subr.mxu0 %v92
  %509 = vmatpush1.msra.mxu0 %v91
  %510 = vmatprep.subr.mxu0 %v88
  %511 = vmatpush1.msra.mxu0 %v87
  %512 = vmatprep.subr.mxu0 %v84
  %513 = vmatpush1.msra.mxu0 %v83
  %514 = vmatprep.subr.mxu0 %v80
  %515 = vmatpush1.msra.mxu0 %v79
  %516 = vmatprep.subr.mxu0 %v76
  %517 = vmatpush1.msra.mxu0 %v75
  %518 = vmatprep.subr.mxu0 %v72
  %519 = vmatpush1.msra.mxu0 %v71
  %520 = vmatprep.subr.mxu0 %v68
  %521 = vmatpush1.msra.mxu0 %v67
  %522 = vmatprep.subr.mxu0 %v64
  %523 = vmatpush1.msra.mxu0 %v63
  %524 = vmatprep.subr.mxu0 %v60
  %525 = vmatpush1.msra.mxu0 %v59
  %526 = vmatprep.subr.mxu0 %v56
  %527 = vmatpush1.msra.mxu0 %v55
  %528 = vmatprep.subr.mxu0 %v52
  %529 = vmatpush1.msra.mxu0 %v51
  %530 = vmatprep.subr.mxu0 %v48
  %531 = vmatpush1.msra.mxu0 %v47
  %532 = vmatprep.subr.mxu0 %v44
  %533 = vmatpush1.msra.mxu0 %v43
  %534 = vmatprep.subr.mxu0 %v40
  %535 = vmatpush1.msra.mxu0 %v39
  %536 = vmatprep.subr.mxu0 %v36
  %537 = vmatpush1.msra.mxu0 %v35
  %538 = vmatprep.subr.mxu0 0.0
  %539 = vmatpush2.msra.mxu0 0.0
  %540 = vmatprep.subr.mxu0 0.0
  %541 = vmatpush2.msra.mxu0 0.0
  %542 = vmatprep.subr.mxu0 0.0
  %543 = vmatpush2.msra.mxu0 0.0
  %544 = vmatprep.subr.mxu0 0.0
  %545 = vmatpush2.msra.mxu0 0.0
  %546 = vmatprep.subr.mxu0 0.0
  %547 = vmatpush2.msra.mxu0 0.0
  %548 = vmatprep.subr.mxu0 0.0
  %549 = vmatpush2.msra.mxu0 0.0
  %550 = vmatprep.subr.mxu0 0.0
  %551 = vmatpush2.msra.mxu0 0.0
  %552 = vmatprep.subr.mxu0 0.0
  %553 = vmatpush2.msra.mxu0 0.0
  %554 = vmatprep.subr.mxu0 0.0
  %555 = vmatpush2.msra.mxu0 0.0
  %556 = vmatprep.subr.mxu0 0.0
  %557 = vmatpush2.msra.mxu0 0.0
  %558 = vmatprep.subr.mxu0 0.0
  %559 = vmatpush2.msra.mxu0 0.0
  %560 = vmatprep.subr.mxu0 0.0
  %561 = vmatpush2.msra.mxu0 0.0
  %562 = vmatprep.subr.mxu0 0.0
  %563 = vmatpush2.msra.mxu0 0.0
  %564 = vmatprep.subr.mxu0 0.0
  %565 = vmatpush2.msra.mxu0 0.0
  %566 = vmatprep.subr.mxu0 0.0
  %567 = vmatpush2.msra.mxu0 0.0
  %568 = vmatprep.subr.mxu0 0.0
  %569 = vmatpush2.msra.mxu0 0.0
  %570 = vmatprep.mubr.f32.mxu0 0.0
  %571 = vmatmul.mubr.f32.gmra.mxu0 %v431
  %v572 = vpop.f32.mrf.mxu0
  %v573 = vadd.f32 0.0, %v572
  %v574 = vpop.f32.mrf.mxu0
  %v575 = vadd.f32 0.0, %v574
  %576 = vdwg.mxu0
  %v578 = vsel %vm264, %v434, 0
  %580 = vmatprep.subr.mxu0 0.0
  %581 = vmatpush1.msra.mxu0 0.0
  %582 = vmatprep.subr.mxu0 0.0
  %583 = vmatpush1.msra.mxu0 0.0
  %584 = vmatprep.subr.mxu0 0.0
  %585 = vmatpush1.msra.mxu0 0.0
  %586 = vmatprep.subr.mxu0 0.0
  %587 = vmatpush1.msra.mxu0 0.0
  %588 = vmatprep.subr.mxu0 0.0
  %589 = vmatpush1.msra.mxu0 0.0
  %590 = vmatprep.subr.mxu0 0.0
  %591 = vmatpush1.msra.mxu0 0.0
  %592 = vmatprep.subr.mxu0 0.0
  %593 = vmatpush1.msra.mxu0 0.0
  %594 = vmatprep.subr.mxu0 0.0
  %595 = vmatpush1.msra.mxu0 0.0
  %596 = vmatprep.subr.mxu0 0.0
  %597 = vmatpush1.msra.mxu0 0.0
  %598 = vmatprep.subr.mxu0 0.0
  %599 = vmatpush1.msra.mxu0 0.0
  %600 = vmatprep.subr.mxu0 0.0
  %601 = vmatpush1.msra.mxu0 0.0
  %602 = vmatprep.subr.mxu0 0.0
  %603 = vmatpush1.msra.mxu0 0.0
  %604 = vmatprep.subr.mxu0 0.0
  %605 = vmatpush1.msra.mxu0 0.0
  %606 = vmatprep.subr.mxu0 0.0
  %607 = vmatpush1.msra.mxu0 0.0
  %608 = vmatprep.subr.mxu0 %v30
  %609 = vmatpush1.msra.mxu0 %v29
  %610 = vmatprep.subr.mxu0 %v26
  %611 = vmatpush1.msra.mxu0 %v25
  %612 = vmatprep.subr.mxu0 0.0
  %613 = vmatpush2.msra.mxu0 0.0
  %614 = vmatprep.subr.mxu0 0.0
  %615 = vmatpush2.msra.mxu0 0.0
  %616 = vmatprep.subr.mxu0 0.0
  %617 = vmatpush2.msra.mxu0 0.0
  %618 = vmatprep.subr.mxu0 0.0
  %619 = vmatpush2.msra.mxu0 0.0
  %620 = vmatprep.subr.mxu0 0.0
  %621 = vmatpush2.msra.mxu0 0.0
  %622 = vmatprep.subr.mxu0 0.0
  %623 = vmatpush2.msra.mxu0 0.0
  %624 = vmatprep.subr.mxu0 0.0
  %625 = vmatpush2.msra.mxu0 0.0
  %626 = vmatprep.subr.mxu0 0.0
  %627 = vmatpush2.msra.mxu0 0.0
  %628 = vmatprep.subr.mxu0 0.0
  %629 = vmatpush2.msra.mxu0 0.0
  %630 = vmatprep.subr.mxu0 0.0
  %631 = vmatpush2.msra.mxu0 0.0
  %632 = vmatprep.subr.mxu0 0.0
  %633 = vmatpush2.msra.mxu0 0.0
  %634 = vmatprep.subr.mxu0 0.0
  %635 = vmatpush2.msra.mxu0 0.0
  %636 = vmatprep.subr.mxu0 0.0
  %637 = vmatpush2.msra.mxu0 0.0
  %638 = vmatprep.subr.mxu0 0.0
  %639 = vmatpush2.msra.mxu0 0.0
  %640 = vmatprep.subr.mxu0 0.0
  %641 = vmatpush2.msra.mxu0 0.0
  %642 = vmatprep.subr.mxu0 0.0
  %643 = vmatpush2.msra.mxu0 0.0
  %644 = vmatprep.mubr.f32.mxu0 0.0
  %645 = vmatmul.mubr.f32.gmra.mxu0 %v578
  %v646 = vpop.f32.mrf.mxu0
  %v647 = vadd.f32 %v502, %v646
  %v648 = vpop.f32.mrf.mxu0
  %v649 = vadd.f32 %v504, %v648
  %650 = vdwg.mxu0
  %651 = vmatprep.subr.mxu0 0.0
  %652 = vmatpush1.msra.mxu0 0.0
  %653 = vmatprep.subr.mxu0 0.0
  %654 = vmatpush1.msra.mxu0 0.0
  %655 = vmatprep.subr.mxu0 0.0
  %656 = vmatpush1.msra.mxu0 0.0
  %657 = vmatprep.subr.mxu0 0.0
  %658 = vmatpush1.msra.mxu0 0.0
  %659 = vmatprep.subr.mxu0 0.0
  %660 = vmatpush1.msra.mxu0 0.0
  %661 = vmatprep.subr.mxu0 0.0
  %662 = vmatpush1.msra.mxu0 0.0
  %663 = vmatprep.subr.mxu0 0.0
  %664 = vmatpush1.msra.mxu0 0.0
  %665 = vmatprep.subr.mxu0 0.0
  %666 = vmatpush1.msra.mxu0 0.0
  %667 = vmatprep.subr.mxu0 0.0
  %668 = vmatpush1.msra.mxu0 0.0
  %669 = vmatprep.subr.mxu0 0.0
  %670 = vmatpush1.msra.mxu0 0.0
  %671 = vmatprep.subr.mxu0 0.0
  %672 = vmatpush1.msra.mxu0 0.0
  %673 = vmatprep.subr.mxu0 0.0
  %674 = vmatpush1.msra.mxu0 0.0
  %675 = vmatprep.subr.mxu0 0.0
  %676 = vmatpush1.msra.mxu0 0.0
  %677 = vmatprep.subr.mxu0 0.0
  %678 = vmatpush1.msra.mxu0 0.0
  %679 = vmatprep.subr.mxu0 %v32
  %680 = vmatpush1.msra.mxu0 %v31
  %681 = vmatprep.subr.mxu0 %v28
  %682 = vmatpush1.msra.mxu0 %v27
  %683 = vmatprep.subr.mxu0 0.0
  %684 = vmatpush2.msra.mxu0 0.0
  %685 = vmatprep.subr.mxu0 0.0
  %686 = vmatpush2.msra.mxu0 0.0
  %687 = vmatprep.subr.mxu0 0.0
  %688 = vmatpush2.msra.mxu0 0.0
  %689 = vmatprep.subr.mxu0 0.0
  %690 = vmatpush2.msra.mxu0 0.0
  %691 = vmatprep.subr.mxu0 0.0
  %692 = vmatpush2.msra.mxu0 0.0
  %693 = vmatprep.subr.mxu0 0.0
  %694 = vmatpush2.msra.mxu0 0.0
  %695 = vmatprep.subr.mxu0 0.0
  %696 = vmatpush2.msra.mxu0 0.0
  %697 = vmatprep.subr.mxu0 0.0
  %698 = vmatpush2.msra.mxu0 0.0
  %699 = vmatprep.subr.mxu0 0.0
  %700 = vmatpush2.msra.mxu0 0.0
  %701 = vmatprep.subr.mxu0 0.0
  %702 = vmatpush2.msra.mxu0 0.0
  %703 = vmatprep.subr.mxu0 0.0
  %704 = vmatpush2.msra.mxu0 0.0
  %705 = vmatprep.subr.mxu0 0.0
  %706 = vmatpush2.msra.mxu0 0.0
  %707 = vmatprep.subr.mxu0 0.0
  %708 = vmatpush2.msra.mxu0 0.0
  %709 = vmatprep.subr.mxu0 0.0
  %710 = vmatpush2.msra.mxu0 0.0
  %711 = vmatprep.subr.mxu0 0.0
  %712 = vmatpush2.msra.mxu0 0.0
  %713 = vmatprep.subr.mxu0 0.0
  %714 = vmatpush2.msra.mxu0 0.0
  %715 = vmatprep.mubr.f32.mxu0 0.0
  %716 = vmatmul.mubr.f32.gmra.mxu0 %v578
  %v717 = vpop.f32.mrf.mxu0
  %v718 = vadd.f32 %v573, %v717
  %v719 = vpop.f32.mrf.mxu0
  %v720 = vadd.f32 %v575, %v719
  %721 = vdwg.mxu0
  %v722 = vadd.f32 %v647, %v102
  %v723 = vadd.f32 %v649, %v106
  %v724 = vadd.f32 %v718, %v110
  %v725 = vadd.f32 %v720, %v114
  %v726 = vmul.f32 %v722, 0.5
  %v727 = vmul.f32 %v723, 0.5
  %v728 = vmul.f32 %v724, 0.5
  %v729 = vtanh.pop %v726
  %v730 = vtanh.pop %v727
  %v731 = vtanh.pop %v728
  %v732 = vmul.f32 %v729, 0.5
  %v733 = vmul.f32 %v730, 0.5
  %v734 = vmul.f32 %v731, 0.5
  %v735 = vadd.f32 %v732, 0.5
  %v736 = vadd.f32 %v733, 0.5
  %v737 = vadd.f32 %v734, 0.5
  %v738 = vtanh.pop %v725
  %v739 = vmul.f32 %v736, %v429
  %v740 = vmul.f32 %v735, %v738
  %v741 = vadd.f32 %v739, %v740
  %v742 = vtanh.pop %v741
  %v743 = vmul.f32 %v737, %v742
  %s744 = scalar_lea.vmem %s4, 8
  %745 = vst [vmem:[%s744] sm:$0xff] %v743
  %s746 = scalar_lea.vmem %s0, 16
  %v747 = vld [vmem:[%s746] sm:$0xff]
  %748 = vmatprep.subr.mxu0 %v94
  %749 = vmatpush1.msra.mxu0 %v93
  %750 = vmatprep.subr.mxu0 %v90
  %751 = vmatpush1.msra.mxu0 %v89
  %752 = vmatprep.subr.mxu0 %v86
  %753 = vmatpush1.msra.mxu0 %v85
  %754 = vmatprep.subr.mxu0 %v82
  %755 = vmatpush1.msra.mxu0 %v81
  %756 = vmatprep.subr.mxu0 %v78
  %757 = vmatpush1.msra.mxu0 %v77
  %758 = vmatprep.subr.mxu0 %v74
  %759 = vmatpush1.msra.mxu0 %v73
  %760 = vmatprep.subr.mxu0 %v70
  %761 = vmatpush1.msra.mxu0 %v69
  %762 = vmatprep.subr.mxu0 %v66
  %763 = vmatpush1.msra.mxu0 %v65
  %764 = vmatprep.subr.mxu0 %v62
  %765 = vmatpush1.msra.mxu0 %v61
  %766 = vmatprep.subr.mxu0 %v58
  %767 = vmatpush1.msra.mxu0 %v57
  %768 = vmatprep.subr.mxu0 %v54
  %769 = vmatpush1.msra.mxu0 %v53
  %770 = vmatprep.subr.mxu0 %v50
  %771 = vmatpush1.msra.mxu0 %v49
  %772 = vmatprep.subr.mxu0 %v46
  %773 = vmatpush1.msra.mxu0 %v45
  %774 = vmatprep.subr.mxu0 %v42
  %775 = vmatpush1.msra.mxu0 %v41
  %776 = vmatprep.subr.mxu0 %v38
  %777 = vmatpush1.msra.mxu0 %v37
  %778 = vmatprep.subr.mxu0 %v34
  %779 = vmatpush1.msra.mxu0 %v33
  %780 = vmatprep.subr.mxu0 0.0
  %781 = vmatpush2.msra.mxu0 0.0
  %782 = vmatprep.subr.mxu0 0.0
  %783 = vmatpush2.msra.mxu0 0.0
  %784 = vmatprep.subr.mxu0 0.0
  %785 = vmatpush2.msra.mxu0 0.0
  %786 = vmatprep.subr.mxu0 0.0
  %787 = vmatpush2.msra.mxu0 0.0
  %788 = vmatprep.subr.mxu0 0.0
  %789 = vmatpush2.msra.mxu0 0.0
  %790 = vmatprep.subr.mxu0 0.0
  %791 = vmatpush2.msra.mxu0 0.0
  %792 = vmatprep.subr.mxu0 0.0
  %793 = vmatpush2.msra.mxu0 0.0
  %794 = vmatprep.subr.mxu0 0.0
  %795 = vmatpush2.msra.mxu0 0.0
  %796 = vmatprep.subr.mxu0 0.0
  %797 = vmatpush2.msra.mxu0 0.0
  %798 = vmatprep.subr.mxu0 0.0
  %799 = vmatpush2.msra.mxu0 0.0
  %800 = vmatprep.subr.mxu0 0.0
  %801 = vmatpush2.msra.mxu0 0.0
  %802 = vmatprep.subr.mxu0 0.0
  %803 = vmatpush2.msra.mxu0 0.0
  %804 = vmatprep.subr.mxu0 0.0
  %805 = vmatpush2.msra.mxu0 0.0
  %806 = vmatprep.subr.mxu0 0.0
  %807 = vmatpush2.msra.mxu0 0.0
  %808 = vmatprep.subr.mxu0 0.0
  %809 = vmatpush2.msra.mxu0 0.0
  %810 = vmatprep.subr.mxu0 0.0
  %811 = vmatpush2.msra.mxu0 0.0
  %812 = vmatprep.mubr.f32.mxu0 0.0
  %813 = vmatmul.mubr.f32.gmra.mxu0 %v743
  %v814 = vpop.f32.mrf.mxu0
  %v815 = vadd.f32 0.0, %v814
  %v816 = vpop.f32.mrf.mxu0
  %v817 = vadd.f32 0.0, %v816
  %818 = vdwg.mxu0
  %819 = vmatprep.subr.mxu0 %v96
  %820 = vmatpush1.msra.mxu0 %v95
  %821 = vmatprep.subr.mxu0 %v92
  %822 = vmatpush1.msra.mxu0 %v91
  %823 = vmatprep.subr.mxu0 %v88
  %824 = vmatpush1.msra.mxu0 %v87
  %825 = vmatprep.subr.mxu0 %v84
  %826 = vmatpush1.msra.mxu0 %v83
  %827 = vmatprep.subr.mxu0 %v80
  %828 = vmatpush1.msra.mxu0 %v79
  %829 = vmatprep.subr.mxu0 %v76
  %830 = vmatpush1.msra.mxu0 %v75
  %831 = vmatprep.subr.mxu0 %v72
  %832 = vmatpush1.msra.mxu0 %v71
  %833 = vmatprep.subr.mxu0 %v68
  %834 = vmatpush1.msra.mxu0 %v67
  %835 = vmatprep.subr.mxu0 %v64
  %836 = vmatpush1.msra.mxu0 %v63
  %837 = vmatprep.subr.mxu0 %v60
  %838 = vmatpush1.msra.mxu0 %v59
  %839 = vmatprep.subr.mxu0 %v56
  %840 = vmatpush1.msra.mxu0 %v55
  %841 = vmatprep.subr.mxu0 %v52
  %842 = vmatpush1.msra.mxu0 %v51
  %843 = vmatprep.subr.mxu0 %v48
  %844 = vmatpush1.msra.mxu0 %v47
  %845 = vmatprep.subr.mxu0 %v44
  %846 = vmatpush1.msra.mxu0 %v43
  %847 = vmatprep.subr.mxu0 %v40
  %848 = vmatpush1.msra.mxu0 %v39
  %849 = vmatprep.subr.mxu0 %v36
  %850 = vmatpush1.msra.mxu0 %v35
  %851 = vmatprep.subr.mxu0 0.0
  %852 = vmatpush2.msra.mxu0 0.0
  %853 = vmatprep.subr.mxu0 0.0
  %854 = vmatpush2.msra.mxu0 0.0
  %855 = vmatprep.subr.mxu0 0.0
  %856 = vmatpush2.msra.mxu0 0.0
  %857 = vmatprep.subr.mxu0 0.0
  %858 = vmatpush2.msra.mxu0 0.0
  %859 = vmatprep.subr.mxu0 0.0
  %860 = vmatpush2.msra.mxu0 0.0
  %861 = vmatprep.subr.mxu0 0.0
  %862 = vmatpush2.msra.mxu0 0.0
  %863 = vmatprep.subr.mxu0 0.0
  %864 = vmatpush2.msra.mxu0 0.0
  %865 = vmatprep.subr.mxu0 0.0
  %866 = vmatpush2.msra.mxu0 0.0
  %867 = vmatprep.subr.mxu0 0.0
  %868 = vmatpush2.msra.mxu0 0.0
  %869 = vmatprep.subr.mxu0 0.0
  %870 = vmatpush2.msra.mxu0 0.0
  %871 = vmatprep.subr.mxu0 0.0
  %872 = vmatpush2.msra.mxu0 0.0
  %873 = vmatprep.subr.mxu0 0.0
  %874 = vmatpush2.msra.mxu0 0.0
  %875 = vmatprep.subr.mxu0 0.0
  %876 = vmatpush2.msra.mxu0 0.0
  %877 = vmatprep.subr.mxu0 0.0
  %878 = vmatpush2.msra.mxu0 0.0
  %879 = vmatprep.subr.mxu0 0.0
  %880 = vmatpush2.msra.mxu0 0.0
  %881 = vmatprep.subr.mxu0 0.0
  %882 = vmatpush2.msra.mxu0 0.0
  %883 = vmatprep.mubr.f32.mxu0 0.0
  %884 = vmatmul.mubr.f32.gmra.mxu0 %v743
  %v885 = vpop.f32.mrf.mxu0
  %v886 = vadd.f32 0.0, %v885
  %v887 = vpop.f32.mrf.mxu0
  %v888 = vadd.f32 0.0, %v887
  %889 = vdwg.mxu0
  %v891 = vsel %vm264, %v747, 0
  %893 = vmatprep.subr.mxu0 0.0
  %894 = vmatpush1.msra.mxu0 0.0
  %895 = vmatprep.subr.mxu0 0.0
  %896 = vmatpush1.msra.mxu0 0.0
  %897 = vmatprep.subr.mxu0 0.0
  %898 = vmatpush1.msra.mxu0 0.0
  %899 = vmatprep.subr.mxu0 0.0
  %900 = vmatpush1.msra.mxu0 0.0
  %901 = vmatprep.subr.mxu0 0.0
  %902 = vmatpush1.msra.mxu0 0.0
  %903 = vmatprep.subr.mxu0 0.0
  %904 = vmatpush1.msra.mxu0 0.0
  %905 = vmatprep.subr.mxu0 0.0
  %906 = vmatpush1.msra.mxu0 0.0
  %907 = vmatprep.subr.mxu0 0.0
  %908 = vmatpush1.msra.mxu0 0.0
  %909 = vmatprep.subr.mxu0 0.0
  %910 = vmatpush1.msra.mxu0 0.0
  %911 = vmatprep.subr.mxu0 0.0
  %912 = vmatpush1.msra.mxu0 0.0
  %913 = vmatprep.subr.mxu0 0.0
  %914 = vmatpush1.msra.mxu0 0.0
  %915 = vmatprep.subr.mxu0 0.0
  %916 = vmatpush1.msra.mxu0 0.0
  %917 = vmatprep.subr.mxu0 0.0
  %918 = vmatpush1.msra.mxu0 0.0
  %919 = vmatprep.subr.mxu0 0.0
  %920 = vmatpush1.msra.mxu0 0.0
  %921 = vmatprep.subr.mxu0 %v30
  %922 = vmatpush1.msra.mxu0 %v29
  %923 = vmatprep.subr.mxu0 %v26
  %924 = vmatpush1.msra.mxu0 %v25
  %925 = vmatprep.subr.mxu0 0.0
  %926 = vmatpush2.msra.mxu0 0.0
  %927 = vmatprep.subr.mxu0 0.0
  %928 = vmatpush2.msra.mxu0 0.0
  %929 = vmatprep.subr.mxu0 0.0
  %930 = vmatpush2.msra.mxu0 0.0
  %931 = vmatprep.subr.mxu0 0.0
  %932 = vmatpush2.msra.mxu0 0.0
  %933 = vmatprep.subr.mxu0 0.0
  %934 = vmatpush2.msra.mxu0 0.0
  %935 = vmatprep.subr.mxu0 0.0
  %936 = vmatpush2.msra.mxu0 0.0
  %937 = vmatprep.subr.mxu0 0.0
  %938 = vmatpush2.msra.mxu0 0.0
  %939 = vmatprep.subr.mxu0 0.0
  %940 = vmatpush2.msra.mxu0 0.0
  %941 = vmatprep.subr.mxu0 0.0
  %942 = vmatpush2.msra.mxu0 0.0
  %943 = vmatprep.subr.mxu0 0.0
  %944 = vmatpush2.msra.mxu0 0.0
  %945 = vmatprep.subr.mxu0 0.0
  %946 = vmatpush2.msra.mxu0 0.0
  %947 = vmatprep.subr.mxu0 0.0
  %948 = vmatpush2.msra.mxu0 0.0
  %949 = vmatprep.subr.mxu0 0.0
  %950 = vmatpush2.msra.mxu0 0.0
  %951 = vmatprep.subr.mxu0 0.0
  %952 = vmatpush2.msra.mxu0 0.0
  %953 = vmatprep.subr.mxu0 0.0
  %954 = vmatpush2.msra.mxu0 0.0
  %955 = vmatprep.subr.mxu0 0.0
  %956 = vmatpush2.msra.mxu0 0.0
  %957 = vmatprep.mubr.f32.mxu0 0.0
  %958 = vmatmul.mubr.f32.gmra.mxu0 %v891
  %v959 = vpop.f32.mrf.mxu0
  %v960 = vadd.f32 %v815, %v959
  %v961 = vpop.f32.mrf.mxu0
  %v962 = vadd.f32 %v817, %v961
  %963 = vdwg.mxu0
  %964 = vmatprep.subr.mxu0 0.0
  %965 = vmatpush1.msra.mxu0 0.0
  %966 = vmatprep.subr.mxu0 0.0
  %967 = vmatpush1.msra.mxu0 0.0
  %968 = vmatprep.subr.mxu0 0.0
  %969 = vmatpush1.msra.mxu0 0.0
  %970 = vmatprep.subr.mxu0 0.0
  %971 = vmatpush1.msra.mxu0 0.0
  %972 = vmatprep.subr.mxu0 0.0
  %973 = vmatpush1.msra.mxu0 0.0
  %974 = vmatprep.subr.mxu0 0.0
  %975 = vmatpush1.msra.mxu0 0.0
  %976 = vmatprep.subr.mxu0 0.0
  %977 = vmatpush1.msra.mxu0 0.0
  %978 = vmatprep.subr.mxu0 0.0
  %979 = vmatpush1.msra.mxu0 0.0
  %980 = vmatprep.subr.mxu0 0.0
  %981 = vmatpush1.msra.mxu0 0.0
  %982 = vmatprep.subr.mxu0 0.0
  %983 = vmatpush1.msra.mxu0 0.0
  %984 = vmatprep.subr.mxu0 0.0
  %985 = vmatpush1.msra.mxu0 0.0
  %986 = vmatprep.subr.mxu0 0.0
  %987 = vmatpush1.msra.mxu0 0.0
  %988 = vmatprep.subr.mxu0 0.0
  %989 = vmatpush1.msra.mxu0 0.0
  %990 = vmatprep.subr.mxu0 0.0
  %991 = vmatpush1.msra.mxu0 0.0
  %992 = vmatprep.subr.mxu0 %v32
  %993 = vmatpush1.msra.mxu0 %v31
  %994 = vmatprep.subr.mxu0 %v28
  %995 = vmatpush1.msra.mxu0 %v27
  %996 = vmatprep.subr.mxu0 0.0
  %997 = vmatpush2.msra.mxu0 0.0
  %998 = vmatprep.subr.mxu0 0.0
  %999 = vmatpush2.msra.mxu0 0.0
  %1000 = vmatprep.subr.mxu0 0.0
  %1001 = vmatpush2.msra.mxu0 0.0
  %1002 = vmatprep.subr.mxu0 0.0
  %1003 = vmatpush2.msra.mxu0 0.0
  %1004 = vmatprep.subr.mxu0 0.0
  %1005 = vmatpush2.msra.mxu0 0.0
  %1006 = vmatprep.subr.mxu0 0.0
  %1007 = vmatpush2.msra.mxu0 0.0
  %1008 = vmatprep.subr.mxu0 0.0
  %1009 = vmatpush2.msra.mxu0 0.0
  %1010 = vmatprep.subr.mxu0 0.0
  %1011 = vmatpush2.msra.mxu0 0.0
  %1012 = vmatprep.subr.mxu0 0.0
  %1013 = vmatpush2.msra.mxu0 0.0
  %1014 = vmatprep.subr.mxu0 0.0
  %1015 = vmatpush2.msra.mxu0 0.0
  %1016 = vmatprep.subr.mxu0 0.0
  %1017 = vmatpush2.msra.mxu0 0.0
  %1018 = vmatprep.subr.mxu0 0.0
  %1019 = vmatpush2.msra.mxu0 0.0
  %1020 = vmatprep.subr.mxu0 0.0
  %1021 = vmatpush2.msra.mxu0 0.0
  %1022 = vmatprep.subr.mxu0 0.0
  %1023 = vmatpush2.msra.mxu0 0.0
  %1024 = vmatprep.subr.mxu0 0.0
  %1025 = vmatpush2.msra.mxu0 0.0
  %1026 = vmatprep.subr.mxu0 0.0
  %1027 = vmatpush2.msra.mxu0 0.0
  %1028 = vmatprep.mubr.f32.mxu0 0.0
  %1029 = vmatmul.mubr.f32.gmra.mxu0 %v891
  %v1030 = vpop.f32.mrf.mxu0
  %v1031 = vadd.f32 %v886, %v1030
  %v1032 = vpop.f32.mrf.mxu0
  %v1033 = vadd.f32 %v888, %v1032
  %1034 = vdwg.mxu0
  %v1035 = vadd.f32 %v960, %v102
  %v1036 = vadd.f32 %v962, %v106
  %v1037 = vadd.f32 %v1031, %v110
  %v1038 = vadd.f32 %v1033, %v114
  %v1039 = vmul.f32 %v1035, 0.5
  %v1040 = vmul.f32 %v1036, 0.5
  %v1041 = vmul.f32 %v1037, 0.5
  %v1042 = vtanh.pop %v1039
  %v1043 = vtanh.pop %v1040
  %v1044 = vtanh.pop %v1041
  %v1045 = vmul.f32 %v1042, 0.5
  %v1046 = vmul.f32 %v1043, 0.5
  %v1047 = vmul.f32 %v1044, 0.5
  %v1048 = vadd.f32 %v1045, 0.5
  %v1049 = vadd.f32 %v1046, 0.5
  %v1050 = vadd.f32 %v1047, 0.5
  %v1051 = vtanh.pop %v1038
  %v1052 = vmul.f32 %v1049, %v741
  %v1053 = vmul.f32 %v1048, %v1051
  %v1054 = vadd.f32 %v1052, %v1053
  %v1055 = vtanh.pop %v1054
  %v1056 = vmul.f32 %v1050, %v1055
  %s1057 = scalar_lea.vmem %s4, 16
  %1058 = vst [vmem:[%s1057] sm:$0xff] %v1056
  %s1059 = scalar_lea.vmem %s0, 24
  %v1060 = vld [vmem:[%s1059] sm:$0xff]
  %1061 = vmatprep.subr.mxu0 %v94
  %1062 = vmatpush1.msra.mxu0 %v93
  %1063 = vmatprep.subr.mxu0 %v90
  %1064 = vmatpush1.msra.mxu0 %v89
  %1065 = vmatprep.subr.mxu0 %v86
  %1066 = vmatpush1.msra.mxu0 %v85
  %1067 = vmatprep.subr.mxu0 %v82
  %1068 = vmatpush1.msra.mxu0 %v81
  %1069 = vmatprep.subr.mxu0 %v78
  %1070 = vmatpush1.msra.mxu0 %v77
  %1071 = vmatprep.subr.mxu0 %v74
  %1072 = vmatpush1.msra.mxu0 %v73
  %1073 = vmatprep.subr.mxu0 %v70
  %1074 = vmatpush1.msra.mxu0 %v69
  %1075 = vmatprep.subr.mxu0 %v66
  %1076 = vmatpush1.msra.mxu0 %v65
  %1077 = vmatprep.subr.mxu0 %v62
  %1078 = vmatpush1.msra.mxu0 %v61
  %1079 = vmatprep.subr.mxu0 %v58
  %1080 = vmatpush1.msra.mxu0 %v57
  %1081 = vmatprep.subr.mxu0 %v54
  %1082 = vmatpush1.msra.mxu0 %v53
  %1083 = vmatprep.subr.mxu0 %v50
  %1084 = vmatpush1.msra.mxu0 %v49
  %1085 = vmatprep.subr.mxu0 %v46
  %1086 = vmatpush1.msra.mxu0 %v45
  %1087 = vmatprep.subr.mxu0 %v42
  %1088 = vmatpush1.msra.mxu0 %v41
  %1089 = vmatprep.subr.mxu0 %v38
  %1090 = vmatpush1.msra.mxu0 %v37
  %1091 = vmatprep.subr.mxu0 %v34
  %1092 = vmatpush1.msra.mxu0 %v33
  %1093 = vmatprep.subr.mxu0 0.0
  %1094 = vmatpush2.msra.mxu0 0.0
  %1095 = vmatprep.subr.mxu0 0.0
  %1096 = vmatpush2.msra.mxu0 0.0
  %1097 = vmatprep.subr.mxu0 0.0
  %1098 = vmatpush2.msra.mxu0 0.0
  %1099 = vmatprep.subr.mxu0 0.0
  %1100 = vmatpush2.msra.mxu0 0.0
  %1101 = vmatprep.subr.mxu0 0.0
  %1102 = vmatpush2.msra.mxu0 0.0
  %1103 = vmatprep.subr.mxu0 0.0
  %1104 = vmatpush2.msra.mxu0 0.0
  %1105 = vmatprep.subr.mxu0 0.0
  %1106 = vmatpush2.msra.mxu0 0.0
  %1107 = vmatprep.subr.mxu0 0.0
  %1108 = vmatpush2.msra.mxu0 0.0
  %1109 = vmatprep.subr.mxu0 0.0
  %1110 = vmatpush2.msra.mxu0 0.0
  %1111 = vmatprep.subr.mxu0 0.0
  %1112 = vmatpush2.msra.mxu0 0.0
  %1113 = vmatprep.subr.mxu0 0.0
  %1114 = vmatpush2.msra.mxu0 0.0
  %1115 = vmatprep.subr.mxu0 0.0
  %1116 = vmatpush2.msra.mxu0 0.0
  %1117 = vmatprep.subr.mxu0 0.0
  %1118 = vmatpush2.msra.mxu0 0.0
  %1119 = vmatprep.subr.mxu0 0.0
  %1120 = vmatpush2.msra.mxu0 0.0
  %1121 = vmatprep.subr.mxu0 0.0
  %1122 = vmatpush2.msra.mxu0 0.0
  %1123 = vmatprep.subr.mxu0 0.0
  %1124 = vmatpush2.msra.mxu0 0.0
  %1125 = vmatprep.mubr.f32.mxu0 0.0
  %1126 = vmatmul.mubr.f32.gmra.mxu0 %v1056
  %v1127 = vpop.f32.mrf.mxu0
  %v1128 = vadd.f32 0.0, %v1127
  %v1129 = vpop.f32.mrf.mxu0
  %v1130 = vadd.f32 0.0, %v1129
  %1131 = vdwg.mxu0
  %1132 = vmatprep.subr.mxu0 %v96
  %1133 = vmatpush1.msra.mxu0 %v95
  %1134 = vmatprep.subr.mxu0 %v92
  %1135 = vmatpush1.msra.mxu0 %v91
  %1136 = vmatprep.subr.mxu0 %v88
  %1137 = vmatpush1.msra.mxu0 %v87
  %1138 = vmatprep.subr.mxu0 %v84
  %1139 = vmatpush1.msra.mxu0 %v83
  %1140 = vmatprep.subr.mxu0 %v80
  %1141 = vmatpush1.msra.mxu0 %v79
  %1142 = vmatprep.subr.mxu0 %v76
  %1143 = vmatpush1.msra.mxu0 %v75
  %1144 = vmatprep.subr.mxu0 %v72
  %1145 = vmatpush1.msra.mxu0 %v71
  %1146 = vmatprep.subr.mxu0 %v68
  %1147 = vmatpush1.msra.mxu0 %v67
  %1148 = vmatprep.subr.mxu0 %v64
  %1149 = vmatpush1.msra.mxu0 %v63
  %1150 = vmatprep.subr.mxu0 %v60
  %1151 = vmatpush1.msra.mxu0 %v59
  %1152 = vmatprep.subr.mxu0 %v56
  %1153 = vmatpush1.msra.mxu0 %v55
  %1154 = vmatprep.subr.mxu0 %v52
  %1155 = vmatpush1.msra.mxu0 %v51
  %1156 = vmatprep.subr.mxu0 %v48
  %1157 = vmatpush1.msra.mxu0 %v47
  %1158 = vmatprep.subr.mxu0 %v44
  %1159 = vmatpush1.msra.mxu0 %v43
  %1160 = vmatprep.subr.mxu0 %v40
  %1161 = vmatpush1.msra.mxu0 %v39
  %1162 = vmatprep.subr.mxu0 %v36
  %1163 = vmatpush1.msra.mxu0 %v35
  %1164 = vmatprep.subr.mxu0 0.0
  %1165 = vmatpush2.msra.mxu0 0.0
  %1166 = vmatprep.subr.mxu0 0.0
  %1167 = vmatpush2.msra.mxu0 0.0
  %1168 = vmatprep.subr.mxu0 0.0
  %1169 = vmatpush2.msra.mxu0 0.0
  %1170 = vmatprep.subr.mxu0 0.0
  %1171 = vmatpush2.msra.mxu0 0.0
  %1172 = vmatprep.subr.mxu0 0.0
  %1173 = vmatpush2.msra.mxu0 0.0
  %1174 = vmatprep.subr.mxu0 0.0
  %1175 = vmatpush2.msra.mxu0 0.0
  %1176 = vmatprep.subr.mxu0 0.0
  %1177 = vmatpush2.msra.mxu0 0.0
  %1178 = vmatprep.subr.mxu0 0.0
  %1179 = vmatpush2.msra.mxu0 0.0
  %1180 = vmatprep.subr.mxu0 0.0
  %1181 = vmatpush2.msra.mxu0 0.0
  %1182 = vmatprep.subr.mxu0 0.0
  %1183 = vmatpush2.msra.mxu0 0.0
  %1184 = vmatprep.subr.mxu0 0.0
  %1185 = vmatpush2.msra.mxu0 0.0
  %1186 = vmatprep.subr.mxu0 0.0
  %1187 = vmatpush2.msra.mxu0 0.0
  %1188 = vmatprep.subr.mxu0 0.0
  %1189 = vmatpush2.msra.mxu0 0.0
  %1190 = vmatprep.subr.mxu0 0.0
  %1191 = vmatpush2.msra.mxu0 0.0
  %1192 = vmatprep.subr.mxu0 0.0
  %1193 = vmatpush2.msra.mxu0 0.0
  %1194 = vmatprep.subr.mxu0 0.0
  %1195 = vmatpush2.msra.mxu0 0.0
  %1196 = vmatprep.mubr.f32.mxu0 0.0
  %1197 = vmatmul.mubr.f32.gmra.mxu0 %v1056
  %v1198 = vpop.f32.mrf.mxu0
  %v1199 = vadd.f32 0.0, %v1198
  %v1200 = vpop.f32.mrf.mxu0
  %v1201 = vadd.f32 0.0, %v1200
  %1202 = vdwg.mxu0
  %v1204 = vsel %vm264, %v1060, 0
  %1206 = vmatprep.subr.mxu0 0.0
  %1207 = vmatpush1.msra.mxu0 0.0
  %1208 = vmatprep.subr.mxu0 0.0
  %1209 = vmatpush1.msra.mxu0 0.0
  %1210 = vmatprep.subr.mxu0 0.0
  %1211 = vmatpush1.msra.mxu0 0.0
  %1212 = vmatprep.subr.mxu0 0.0
  %1213 = vmatpush1.msra.mxu0 0.0
  %1214 = vmatprep.subr.mxu0 0.0
  %1215 = vmatpush1.msra.mxu0 0.0
  %1216 = vmatprep.subr.mxu0 0.0
  %1217 = vmatpush1.msra.mxu0 0.0
  %1218 = vmatprep.subr.mxu0 0.0
  %1219 = vmatpush1.msra.mxu0 0.0
  %1220 = vmatprep.subr.mxu0 0.0
  %1221 = vmatpush1.msra.mxu0 0.0
  %1222 = vmatprep.subr.mxu0 0.0
  %1223 = vmatpush1.msra.mxu0 0.0
  %1224 = vmatprep.subr.mxu0 0.0
  %1225 = vmatpush1.msra.mxu0 0.0
  %1226 = vmatprep.subr.mxu0 0.0
  %1227 = vmatpush1.msra.mxu0 0.0
  %1228 = vmatprep.subr.mxu0 0.0
  %1229 = vmatpush1.msra.mxu0 0.0
  %1230 = vmatprep.subr.mxu0 0.0
  %1231 = vmatpush1.msra.mxu0 0.0
  %1232 = vmatprep.subr.mxu0 0.0
  %1233 = vmatpush1.msra.mxu0 0.0
  %1234 = vmatprep.subr.mxu0 %v30
  %1235 = vmatpush1.msra.mxu0 %v29
  %1236 = vmatprep.subr.mxu0 %v26
  %1237 = vmatpush1.msra.mxu0 %v25
  %1238 = vmatprep.subr.mxu0 0.0
  %1239 = vmatpush2.msra.mxu0 0.0
  %1240 = vmatprep.subr.mxu0 0.0
  %1241 = vmatpush2.msra.mxu0 0.0
  %1242 = vmatprep.subr.mxu0 0.0
  %1243 = vmatpush2.msra.mxu0 0.0
  %1244 = vmatprep.subr.mxu0 0.0
  %1245 = vmatpush2.msra.mxu0 0.0
  %1246 = vmatprep.subr.mxu0 0.0
  %1247 = vmatpush2.msra.mxu0 0.0
  %1248 = vmatprep.subr.mxu0 0.0
  %1249 = vmatpush2.msra.mxu0 0.0
  %1250 = vmatprep.subr.mxu0 0.0
  %1251 = vmatpush2.msra.mxu0 0.0
  %1252 = vmatprep.subr.mxu0 0.0
  %1253 = vmatpush2.msra.mxu0 0.0
  %1254 = vmatprep.subr.mxu0 0.0
  %1255 = vmatpush2.msra.mxu0 0.0
  %1256 = vmatprep.subr.mxu0 0.0
  %1257 = vmatpush2.msra.mxu0 0.0
  %1258 = vmatprep.subr.mxu0 0.0
  %1259 = vmatpush2.msra.mxu0 0.0
  %1260 = vmatprep.subr.mxu0 0.0
  %1261 = vmatpush2.msra.mxu0 0.0
  %1262 = vmatprep.subr.mxu0 0.0
  %1263 = vmatpush2.msra.mxu0 0.0
  %1264 = vmatprep.subr.mxu0 0.0
  %1265 = vmatpush2.msra.mxu0 0.0
  %1266 = vmatprep.subr.mxu0 0.0
  %1267 = vmatpush2.msra.mxu0 0.0
  %1268 = vmatprep.subr.mxu0 0.0
  %1269 = vmatpush2.msra.mxu0 0.0
  %1270 = vmatprep.mubr.f32.mxu0 0.0
  %1271 = vmatmul.mubr.f32.gmra.mxu0 %v1204
  %v1272 = vpop.f32.mrf.mxu0
  %v1273 = vadd.f32 %v1128, %v1272
  %v1274 = vpop.f32.mrf.mxu0
  %v1275 = vadd.f32 %v1130, %v1274
  %1276 = vdwg.mxu0
  %1277 = vmatprep.subr.mxu0 0.0
  %1278 = vmatpush1.msra.mxu0 0.0
  %1279 = vmatprep.subr.mxu0 0.0
  %1280 = vmatpush1.msra.mxu0 0.0
  %1281 = vmatprep.subr.mxu0 0.0
  %1282 = vmatpush1.msra.mxu0 0.0
  %1283 = vmatprep.subr.mxu0 0.0
  %1284 = vmatpush1.msra.mxu0 0.0
  %1285 = vmatprep.subr.mxu0 0.0
  %1286 = vmatpush1.msra.mxu0 0.0
  %1287 = vmatprep.subr.mxu0 0.0
  %1288 = vmatpush1.msra.mxu0 0.0
  %1289 = vmatprep.subr.mxu0 0.0
  %1290 = vmatpush1.msra.mxu0 0.0
  %1291 = vmatprep.subr.mxu0 0.0
  %1292 = vmatpush1.msra.mxu0 0.0
  %1293 = vmatprep.subr.mxu0 0.0
  %1294 = vmatpush1.msra.mxu0 0.0
  %1295 = vmatprep.subr.mxu0 0.0
  %1296 = vmatpush1.msra.mxu0 0.0
  %1297 = vmatprep.subr.mxu0 0.0
  %1298 = vmatpush1.msra.mxu0 0.0
  %1299 = vmatprep.subr.mxu0 0.0
  %1300 = vmatpush1.msra.mxu0 0.0
  %1301 = vmatprep.subr.mxu0 0.0
  %1302 = vmatpush1.msra.mxu0 0.0
  %1303 = vmatprep.subr.mxu0 0.0
  %1304 = vmatpush1.msra.mxu0 0.0
  %1305 = vmatprep.subr.mxu0 %v32
  %1306 = vmatpush1.msra.mxu0 %v31
  %1307 = vmatprep.subr.mxu0 %v28
  %1308 = vmatpush1.msra.mxu0 %v27
  %1309 = vmatprep.subr.mxu0 0.0
  %1310 = vmatpush2.msra.mxu0 0.0
  %1311 = vmatprep.subr.mxu0 0.0
  %1312 = vmatpush2.msra.mxu0 0.0
  %1313 = vmatprep.subr.mxu0 0.0
  %1314 = vmatpush2.msra.mxu0 0.0
  %1315 = vmatprep.subr.mxu0 0.0
  %1316 = vmatpush2.msra.mxu0 0.0
  %1317 = vmatprep.subr.mxu0 0.0
  %1318 = vmatpush2.msra.mxu0 0.0
  %1319 = vmatprep.subr.mxu0 0.0
  %1320 = vmatpush2.msra.mxu0 0.0
  %1321 = vmatprep.subr.mxu0 0.0
  %1322 = vmatpush2.msra.mxu0 0.0
  %1323 = vmatprep.subr.mxu0 0.0
  %1324 = vmatpush2.msra.mxu0 0.0
  %1325 = vmatprep.subr.mxu0 0.0
  %1326 = vmatpush2.msra.mxu0 0.0
  %1327 = vmatprep.subr.mxu0 0.0
  %1328 = vmatpush2.msra.mxu0 0.0
  %1329 = vmatprep.subr.mxu0 0.0
  %1330 = vmatpush2.msra.mxu0 0.0
  %1331 = vmatprep.subr.mxu0 0.0
  %1332 = vmatpush2.msra.mxu0 0.0
  %1333 = vmatprep.subr.mxu0 0.0
  %1334 = vmatpush2.msra.mxu0 0.0
  %1335 = vmatprep.subr.mxu0 0.0
  %1336 = vmatpush2.msra.mxu0 0.0
  %1337 = vmatprep.subr.mxu0 0.0
  %1338 = vmatpush2.msra.mxu0 0.0
  %1339 = vmatprep.subr.mxu0 0.0
  %1340 = vmatpush2.msra.mxu0 0.0
  %1341 = vmatprep.mubr.f32.mxu0 0.0
  %1342 = vmatmul.mubr.f32.gmra.mxu0 %v1204
  %v1343 = vpop.f32.mrf.mxu0
  %v1344 = vadd.f32 %v1199, %v1343
  %v1345 = vpop.f32.mrf.mxu0
  %v1346 = vadd.f32 %v1201, %v1345
  %1347 = vdwg.mxu0
  %v1348 = vadd.f32 %v1273, %v102
  %v1349 = vadd.f32 %v1275, %v106
  %v1350 = vadd.f32 %v1344, %v110
  %v1351 = vadd.f32 %v1346, %v114
  %v1352 = vmul.f32 %v1348, 0.5
  %v1353 = vmul.f32 %v1349, 0.5
  %v1354 = vmul.f32 %v1350, 0.5
  %v1355 = vtanh.pop %v1352
  %v1356 = vtanh.pop %v1353
  %v1357 = vtanh.pop %v1354
  %v1358 = vmul.f32 %v1355, 0.5
  %v1359 = vmul.f32 %v1356, 0.5
  %v1360 = vmul.f32 %v1357, 0.5
  %v1361 = vadd.f32 %v1358, 0.5
  %v1362 = vadd.f32 %v1359, 0.5
  %v1363 = vadd.f32 %v1360, 0.5
  %v1364 = vtanh.pop %v1351
  %v1365 = vmul.f32 %v1362, %v1054
  %v1366 = vmul.f32 %v1361, %v1364
  %v1367 = vadd.f32 %v1365, %v1366
  %v1368 = vtanh.pop %v1367
  %v1369 = vmul.f32 %v1363, %v1368
  %s1370 = scalar_lea.vmem %s4, 24
  %1371 = vst [vmem:[%s1370] sm:$0xff] %v1369
  %s1372 = scalar_lea.vmem %s0, 32
  %v1373 = vld [vmem:[%s1372] sm:$0xff]
  %1374 = vmatprep.subr.mxu0 %v94
  %1375 = vmatpush1.msra.mxu0 %v93
  %1376 = vmatprep.subr.mxu0 %v90
  %1377 = vmatpush1.msra.mxu0 %v89
  %1378 = vmatprep.subr.mxu0 %v86
  %1379 = vmatpush1.msra.mxu0 %v85
  %1380 = vmatprep.subr.mxu0 %v82
  %1381 = vmatpush1.msra.mxu0 %v81
  %1382 = vmatprep.subr.mxu0 %v78
  %1383 = vmatpush1.msra.mxu0 %v77
  %1384 = vmatprep.subr.mxu0 %v74
  %1385 = vmatpush1.msra.mxu0 %v73
  %1386 = vmatprep.subr.mxu0 %v70
  %1387 = vmatpush1.msra.mxu0 %v69
  %1388 = vmatprep.subr.mxu0 %v66
  %1389 = vmatpush1.msra.mxu0 %v65
  %1390 = vmatprep.subr.mxu0 %v62
  %1391 = vmatpush1.msra.mxu0 %v61
  %1392 = vmatprep.subr.mxu0 %v58
  %1393 = vmatpush1.msra.mxu0 %v57
  %1394 = vmatprep.subr.mxu0 %v54
  %1395 = vmatpush1.msra.mxu0 %v53
  %1396 = vmatprep.subr.mxu0 %v50
  %1397 = vmatpush1.msra.mxu0 %v49
  %1398 = vmatprep.subr.mxu0 %v46
  %1399 = vmatpush1.msra.mxu0 %v45
  %1400 = vmatprep.subr.mxu0 %v42
  %1401 = vmatpush1.msra.mxu0 %v41
  %1402 = vmatprep.subr.mxu0 %v38
  %1403 = vmatpush1.msra.mxu0 %v37
  %1404 = vmatprep.subr.mxu0 %v34
  %1405 = vmatpush1.msra.mxu0 %v33
  %1406 = vmatprep.subr.mxu0 0.0
  %1407 = vmatpush2.msra.mxu0 0.0
  %1408 = vmatprep.subr.mxu0 0.0
  %1409 = vmatpush2.msra.mxu0 0.0
  %1410 = vmatprep.subr.mxu0 0.0
  %1411 = vmatpush2.msra.mxu0 0.0
  %1412 = vmatprep.subr.mxu0 0.0
  %1413 = vmatpush2.msra.mxu0 0.0
  %1414 = vmatprep.subr.mxu0 0.0
  %1415 = vmatpush2.msra.mxu0 0.0
  %1416 = vmatprep.subr.mxu0 0.0
  %1417 = vmatpush2.msra.mxu0 0.0
  %1418 = vmatprep.subr.mxu0 0.0
  %1419 = vmatpush2.msra.mxu0 0.0
  %1420 = vmatprep.subr.mxu0 0.0
  %1421 = vmatpush2.msra.mxu0 0.0
  %1422 = vmatprep.subr.mxu0 0.0
  %1423 = vmatpush2.msra.mxu0 0.0
  %1424 = vmatprep.subr.mxu0 0.0
  %1425 = vmatpush2.msra.mxu0 0.0
  %1426 = vmatprep.subr.mxu0 0.0
  %1427 = vmatpush2.msra.mxu0 0.0
  %1428 = vmatprep.subr.mxu0 0.0
  %1429 = vmatpush2.msra.mxu0 0.0
  %1430 = vmatprep.subr.mxu0 0.0
  %1431 = vmatpush2.msra.mxu0 0.0
  %1432 = vmatprep.subr.mxu0 0.0
  %1433 = vmatpush2.msra.mxu0 0.0
  %1434 = vmatprep.subr.mxu0 0.0
  %1435 = vmatpush2.msra.mxu0 0.0
  %1436 = vmatprep.subr.mxu0 0.0
  %1437 = vmatpush2.msra.mxu0 0.0
  %1438 = vmatprep.mubr.f32.mxu0 0.0
  %1439 = vmatmul.mubr.f32.gmra.mxu0 %v1369
  %v1440 = vpop.f32.mrf.mxu0
  %v1441 = vadd.f32 0.0, %v1440
  %v1442 = vpop.f32.mrf.mxu0
  %v1443 = vadd.f32 0.0, %v1442
  %1444 = vdwg.mxu0
  %1445 = vmatprep.subr.mxu0 %v96
  %1446 = vmatpush1.msra.mxu0 %v95
  %1447 = vmatprep.subr.mxu0 %v92
  %1448 = vmatpush1.msra.mxu0 %v91
  %1449 = vmatprep.subr.mxu0 %v88
  %1450 = vmatpush1.msra.mxu0 %v87
  %1451 = vmatprep.subr.mxu0 %v84
  %1452 = vmatpush1.msra.mxu0 %v83
  %1453 = vmatprep.subr.mxu0 %v80
  %1454 = vmatpush1.msra.mxu0 %v79
  %1455 = vmatprep.subr.mxu0 %v76
  %1456 = vmatpush1.msra.mxu0 %v75
  %1457 = vmatprep.subr.mxu0 %v72
  %1458 = vmatpush1.msra.mxu0 %v71
  %1459 = vmatprep.subr.mxu0 %v68
  %1460 = vmatpush1.msra.mxu0 %v67
  %1461 = vmatprep.subr.mxu0 %v64
  %1462 = vmatpush1.msra.mxu0 %v63
  %1463 = vmatprep.subr.mxu0 %v60
  %1464 = vmatpush1.msra.mxu0 %v59
  %1465 = vmatprep.subr.mxu0 %v56
  %1466 = vmatpush1.msra.mxu0 %v55
  %1467 = vmatprep.subr.mxu0 %v52
  %1468 = vmatpush1.msra.mxu0 %v51
  %1469 = vmatprep.subr.mxu0 %v48
  %1470 = vmatpush1.msra.mxu0 %v47
  %1471 = vmatprep.subr.mxu0 %v44
  %1472 = vmatpush1.msra.mxu0 %v43
  %1473 = vmatprep.subr.mxu0 %v40
  %1474 = vmatpush1.msra.mxu0 %v39
  %1475 = vmatprep.subr.mxu0 %v36
  %1476 = vmatpush1.msra.mxu0 %v35
  %1477 = vmatprep.subr.mxu0 0.0
  %1478 = vmatpush2.msra.mxu0 0.0
  %1479 = vmatprep.subr.mxu0 0.0
  %1480 = vmatpush2.msra.mxu0 0.0
  %1481 = vmatprep.subr.mxu0 0.0
  %1482 = vmatpush2.msra.mxu0 0.0
  %1483 = vmatprep.subr.mxu0 0.0
  %1484 = vmatpush2.msra.mxu0 0.0
  %1485 = vmatprep.subr.mxu0 0.0
  %1486 = vmatpush2.msra.mxu0 0.0
  %1487 = vmatprep.subr.mxu0 0.0
  %1488 = vmatpush2.msra.mxu0 0.0
  %1489 = vmatprep.subr.mxu0 0.0
  %1490 = vmatpush2.msra.mxu0 0.0
  %1491 = vmatprep.subr.mxu0 0.0
  %1492 = vmatpush2.msra.mxu0 0.0
  %1493 = vmatprep.subr.mxu0 0.0
  %1494 = vmatpush2.msra.mxu0 0.0
  %1495 = vmatprep.subr.mxu0 0.0
  %1496 = vmatpush2.msra.mxu0 0.0
  %1497 = vmatprep.subr.mxu0 0.0
  %1498 = vmatpush2.msra.mxu0 0.0
  %1499 = vmatprep.subr.mxu0 0.0
  %1500 = vmatpush2.msra.mxu0 0.0
  %1501 = vmatprep.subr.mxu0 0.0
  %1502 = vmatpush2.msra.mxu0 0.0
  %1503 = vmatprep.subr.mxu0 0.0
  %1504 = vmatpush2.msra.mxu0 0.0
  %1505 = vmatprep.subr.mxu0 0.0
  %1506 = vmatpush2.msra.mxu0 0.0
  %1507 = vmatprep.subr.mxu0 0.0
  %1508 = vmatpush2.msra.mxu0 0.0
  %1509 = vmatprep.mubr.f32.mxu0 0.0
  %1510 = vmatmul.mubr.f32.gmra.mxu0 %v1369
  %v1511 = vpop.f32.mrf.mxu0
  %v1512 = vadd.f32 0.0, %v1511
  %v1513 = vpop.f32.mrf.mxu0
  %v1514 = vadd.f32 0.0, %v1513
  %1515 = vdwg.mxu0
  %v1517 = vsel %vm264, %v1373, 0
  %1519 = vmatprep.subr.mxu0 0.0
  %1520 = vmatpush1.msra.mxu0 0.0
  %1521 = vmatprep.subr.mxu0 0.0
  %1522 = vmatpush1.msra.mxu0 0.0
  %1523 = vmatprep.subr.mxu0 0.0
  %1524 = vmatpush1.msra.mxu0 0.0
  %1525 = vmatprep.subr.mxu0 0.0
  %1526 = vmatpush1.msra.mxu0 0.0
  %1527 = vmatprep.subr.mxu0 0.0
  %1528 = vmatpush1.msra.mxu0 0.0
  %1529 = vmatprep.subr.mxu0 0.0
  %1530 = vmatpush1.msra.mxu0 0.0
  %1531 = vmatprep.subr.mxu0 0.0
  %1532 = vmatpush1.msra.mxu0 0.0
  %1533 = vmatprep.subr.mxu0 0.0
  %1534 = vmatpush1.msra.mxu0 0.0
  %1535 = vmatprep.subr.mxu0 0.0
  %1536 = vmatpush1.msra.mxu0 0.0
  %1537 = vmatprep.subr.mxu0 0.0
  %1538 = vmatpush1.msra.mxu0 0.0
  %1539 = vmatprep.subr.mxu0 0.0
  %1540 = vmatpush1.msra.mxu0 0.0
  %1541 = vmatprep.subr.mxu0 0.0
  %1542 = vmatpush1.msra.mxu0 0.0
  %1543 = vmatprep.subr.mxu0 0.0
  %1544 = vmatpush1.msra.mxu0 0.0
  %1545 = vmatprep.subr.mxu0 0.0
  %1546 = vmatpush1.msra.mxu0 0.0
  %1547 = vmatprep.subr.mxu0 %v30
  %1548 = vmatpush1.msra.mxu0 %v29
  %1549 = vmatprep.subr.mxu0 %v26
  %1550 = vmatpush1.msra.mxu0 %v25
  %1551 = vmatprep.subr.mxu0 0.0
  %1552 = vmatpush2.msra.mxu0 0.0
  %1553 = vmatprep.subr.mxu0 0.0
  %1554 = vmatpush2.msra.mxu0 0.0
  %1555 = vmatprep.subr.mxu0 0.0
  %1556 = vmatpush2.msra.mxu0 0.0
  %1557 = vmatprep.subr.mxu0 0.0
  %1558 = vmatpush2.msra.mxu0 0.0
  %1559 = vmatprep.subr.mxu0 0.0
  %1560 = vmatpush2.msra.mxu0 0.0
  %1561 = vmatprep.subr.mxu0 0.0
  %1562 = vmatpush2.msra.mxu0 0.0
  %1563 = vmatprep.subr.mxu0 0.0
  %1564 = vmatpush2.msra.mxu0 0.0
  %1565 = vmatprep.subr.mxu0 0.0
  %1566 = vmatpush2.msra.mxu0 0.0
  %1567 = vmatprep.subr.mxu0 0.0
  %1568 = vmatpush2.msra.mxu0 0.0
  %1569 = vmatprep.subr.mxu0 0.0
  %1570 = vmatpush2.msra.mxu0 0.0
  %1571 = vmatprep.subr.mxu0 0.0
  %1572 = vmatpush2.msra.mxu0 0.0
  %1573 = vmatprep.subr.mxu0 0.0
  %1574 = vmatpush2.msra.mxu0 0.0
  %1575 = vmatprep.subr.mxu0 0.0
  %1576 = vmatpush2.msra.mxu0 0.0
  %1577 = vmatprep.subr.mxu0 0.0
  %1578 = vmatpush2.msra.mxu0 0.0
  %1579 = vmatprep.subr.mxu0 0.0
  %1580 = vmatpush2.msra.mxu0 0.0
  %1581 = vmatprep.subr.mxu0 0.0
  %1582 = vmatpush2.msra.mxu0 0.0
  %1583 = vmatprep.mubr.f32.mxu0 0.0
  %1584 = vmatmul.mubr.f32.gmra.mxu0 %v1517
  %v1585 = vpop.f32.mrf.mxu0
  %v1586 = vadd.f32 %v1441, %v1585
  %v1587 = vpop.f32.mrf.mxu0
  %v1588 = vadd.f32 %v1443, %v1587
  %1589 = vdwg.mxu0
  %1590 = vmatprep.subr.mxu0 0.0
  %1591 = vmatpush1.msra.mxu0 0.0
  %1592 = vmatprep.subr.mxu0 0.0
  %1593 = vmatpush1.msra.mxu0 0.0
  %1594 = vmatprep.subr.mxu0 0.0
  %1595 = vmatpush1.msra.mxu0 0.0
  %1596 = vmatprep.subr.mxu0 0.0
  %1597 = vmatpush1.msra.mxu0 0.0
  %1598 = vmatprep.subr.mxu0 0.0
  %1599 = vmatpush1.msra.mxu0 0.0
  %1600 = vmatprep.subr.mxu0 0.0
  %1601 = vmatpush1.msra.mxu0 0.0
  %1602 = vmatprep.subr.mxu0 0.0
  %1603 = vmatpush1.msra.mxu0 0.0
  %1604 = vmatprep.subr.mxu0 0.0
  %1605 = vmatpush1.msra.mxu0 0.0
  %1606 = vmatprep.subr.mxu0 0.0
  %1607 = vmatpush1.msra.mxu0 0.0
  %1608 = vmatprep.subr.mxu0 0.0
  %1609 = vmatpush1.msra.mxu0 0.0
  %1610 = vmatprep.subr.mxu0 0.0
  %1611 = vmatpush1.msra.mxu0 0.0
  %1612 = vmatprep.subr.mxu0 0.0
  %1613 = vmatpush1.msra.mxu0 0.0
  %1614 = vmatprep.subr.mxu0 0.0
  %1615 = vmatpush1.msra.mxu0 0.0
  %1616 = vmatprep.subr.mxu0 0.0
  %1617 = vmatpush1.msra.mxu0 0.0
  %1618 = vmatprep.subr.mxu0 %v32
  %1619 = vmatpush1.msra.mxu0 %v31
  %1620 = vmatprep.subr.mxu0 %v28
  %1621 = vmatpush1.msra.mxu0 %v27
  %1622 = vmatprep.subr.mxu0 0.0
  %1623 = vmatpush2.msra.mxu0 0.0
  %1624 = vmatprep.subr.mxu0 0.0
  %1625 = vmatpush2.msra.mxu0 0.0
  %1626 = vmatprep.subr.mxu0 0.0
  %1627 = vmatpush2.msra.mxu0 0.0
  %1628 = vmatprep.subr.mxu0 0.0
  %1629 = vmatpush2.msra.mxu0 0.0
  %1630 = vmatprep.subr.mxu0 0.0
  %1631 = vmatpush2.msra.mxu0 0.0
  %1632 = vmatprep.subr.mxu0 0.0
  %1633 = vmatpush2.msra.mxu0 0.0
  %1634 = vmatprep.subr.mxu0 0.0
  %1635 = vmatpush2.msra.mxu0 0.0
  %1636 = vmatprep.subr.mxu0 0.0
  %1637 = vmatpush2.msra.mxu0 0.0
  %1638 = vmatprep.subr.mxu0 0.0
  %1639 = vmatpush2.msra.mxu0 0.0
  %1640 = vmatprep.subr.mxu0 0.0
  %1641 = vmatpush2.msra.mxu0 0.0
  %1642 = vmatprep.subr.mxu0 0.0
  %1643 = vmatpush2.msra.mxu0 0.0
  %1644 = vmatprep.subr.mxu0 0.0
  %1645 = vmatpush2.msra.mxu0 0.0
  %1646 = vmatprep.subr.mxu0 0.0
  %1647 = vmatpush2.msra.mxu0 0.0
  %1648 = vmatprep.subr.mxu0 0.0
  %1649 = vmatpush2.msra.mxu0 0.0
  %1650 = vmatprep.subr.mxu0 0.0
  %1651 = vmatpush2.msra.mxu0 0.0
  %1652 = vmatprep.subr.mxu0 0.0
  %1653 = vmatpush2.msra.mxu0 0.0
  %1654 = vmatprep.mubr.f32.mxu0 0.0
  %1655 = vmatmul.mubr.f32.gmra.mxu0 %v1517
  %v1656 = vpop.f32.mrf.mxu0
  %v1657 = vadd.f32 %v1512, %v1656
  %v1658 = vpop.f32.mrf.mxu0
  %v1659 = vadd.f32 %v1514, %v1658
  %1660 = vdwg.mxu0
  %v1661 = vadd.f32 %v1586, %v102
  %v1662 = vadd.f32 %v1588, %v106
  %v1663 = vadd.f32 %v1657, %v110
  %v1664 = vadd.f32 %v1659, %v114
  %v1665 = vmul.f32 %v1661, 0.5
  %v1666 = vmul.f32 %v1662, 0.5
  %v1667 = vmul.f32 %v1663, 0.5
  %v1668 = vtanh.pop %v1665
  %v1669 = vtanh.pop %v1666
  %v1670 = vtanh.pop %v1667
  %v1671 = vmul.f32 %v1668, 0.5
  %v1672 = vmul.f32 %v1669, 0.5
  %v1673 = vmul.f32 %v1670, 0.5
  %v1674 = vadd.f32 %v1671, 0.5
  %v1675 = vadd.f32 %v1672, 0.5
  %v1676 = vadd.f32 %v1673, 0.5
  %v1677 = vtanh.pop %v1664
  %v1678 = vmul.f32 %v1675, %v1367
  %v1679 = vmul.f32 %v1674, %v1677
  %v1680 = vadd.f32 %v1678, %v1679
  %v1681 = vtanh.pop %v1680
  %v1682 = vmul.f32 %v1676, %v1681
  %s1683 = scalar_lea.vmem %s4, 32
  %1684 = vst [vmem:[%s1683] sm:$0xff] %v1682
  %s1685 = scalar_lea.vmem %s0, 40
  %v1686 = vld [vmem:[%s1685] sm:$0xff]
  %1687 = vmatprep.subr.mxu0 %v94
  %1688 = vmatpush1.msra.mxu0 %v93
  %1689 = vmatprep.subr.mxu0 %v90
  %1690 = vmatpush1.msra.mxu0 %v89
  %1691 = vmatprep.subr.mxu0 %v86
  %1692 = vmatpush1.msra.mxu0 %v85
  %1693 = vmatprep.subr.mxu0 %v82
  %1694 = vmatpush1.msra.mxu0 %v81
  %1695 = vmatprep.subr.mxu0 %v78
  %1696 = vmatpush1.msra.mxu0 %v77
  %1697 = vmatprep.subr.mxu0 %v74
  %1698 = vmatpush1.msra.mxu0 %v73
  %1699 = vmatprep.subr.mxu0 %v70
  %1700 = vmatpush1.msra.mxu0 %v69
  %1701 = vmatprep.subr.mxu0 %v66
  %1702 = vmatpush1.msra.mxu0 %v65
  %1703 = vmatprep.subr.mxu0 %v62
  %1704 = vmatpush1.msra.mxu0 %v61
  %1705 = vmatprep.subr.mxu0 %v58
  %1706 = vmatpush1.msra.mxu0 %v57
  %1707 = vmatprep.subr.mxu0 %v54
  %1708 = vmatpush1.msra.mxu0 %v53
  %1709 = vmatprep.subr.mxu0 %v50
  %1710 = vmatpush1.msra.mxu0 %v49
  %1711 = vmatprep.subr.mxu0 %v46
  %1712 = vmatpush1.msra.mxu0 %v45
  %1713 = vmatprep.subr.mxu0 %v42
  %1714 = vmatpush1.msra.mxu0 %v41
  %1715 = vmatprep.subr.mxu0 %v38
  %1716 = vmatpush1.msra.mxu0 %v37
  %1717 = vmatprep.subr.mxu0 %v34
  %1718 = vmatpush1.msra.mxu0 %v33
  %1719 = vmatprep.subr.mxu0 0.0
  %1720 = vmatpush2.msra.mxu0 0.0
  %1721 = vmatprep.subr.mxu0 0.0
  %1722 = vmatpush2.msra.mxu0 0.0
  %1723 = vmatprep.subr.mxu0 0.0
  %1724 = vmatpush2.msra.mxu0 0.0
  %1725 = vmatprep.subr.mxu0 0.0
  %1726 = vmatpush2.msra.mxu0 0.0
  %1727 = vmatprep.subr.mxu0 0.0
  %1728 = vmatpush2.msra.mxu0 0.0
  %1729 = vmatprep.subr.mxu0 0.0
  %1730 = vmatpush2.msra.mxu0 0.0
  %1731 = vmatprep.subr.mxu0 0.0
  %1732 = vmatpush2.msra.mxu0 0.0
  %1733 = vmatprep.subr.mxu0 0.0
  %1734 = vmatpush2.msra.mxu0 0.0
  %1735 = vmatprep.subr.mxu0 0.0
  %1736 = vmatpush2.msra.mxu0 0.0
  %1737 = vmatprep.subr.mxu0 0.0
  %1738 = vmatpush2.msra.mxu0 0.0
  %1739 = vmatprep.subr.mxu0 0.0
  %1740 = vmatpush2.msra.mxu0 0.0
  %1741 = vmatprep.subr.mxu0 0.0
  %1742 = vmatpush2.msra.mxu0 0.0
  %1743 = vmatprep.subr.mxu0 0.0
  %1744 = vmatpush2.msra.mxu0 0.0
  %1745 = vmatprep.subr.mxu0 0.0
  %1746 = vmatpush2.msra.mxu0 0.0
  %1747 = vmatprep.subr.mxu0 0.0
  %1748 = vmatpush2.msra.mxu0 0.0
  %1749 = vmatprep.subr.mxu0 0.0
  %1750 = vmatpush2.msra.mxu0 0.0
  %1751 = vmatprep.mubr.f32.mxu0 0.0
  %1752 = vmatmul.mubr.f32.gmra.mxu0 %v1682
  %v1753 = vpop.f32.mrf.mxu0
  %v1754 = vadd.f32 0.0, %v1753
  %v1755 = vpop.f32.mrf.mxu0
  %v1756 = vadd.f32 0.0, %v1755
  %1757 = vdwg.mxu0
  %1758 = vmatprep.subr.mxu0 %v96
  %1759 = vmatpush1.msra.mxu0 %v95
  %1760 = vmatprep.subr.mxu0 %v92
  %1761 = vmatpush1.msra.mxu0 %v91
  %1762 = vmatprep.subr.mxu0 %v88
  %1763 = vmatpush1.msra.mxu0 %v87
  %1764 = vmatprep.subr.mxu0 %v84
  %1765 = vmatpush1.msra.mxu0 %v83
  %1766 = vmatprep.subr.mxu0 %v80
  %1767 = vmatpush1.msra.mxu0 %v79
  %1768 = vmatprep.subr.mxu0 %v76
  %1769 = vmatpush1.msra.mxu0 %v75
  %1770 = vmatprep.subr.mxu0 %v72
  %1771 = vmatpush1.msra.mxu0 %v71
  %1772 = vmatprep.subr.mxu0 %v68
  %1773 = vmatpush1.msra.mxu0 %v67
  %1774 = vmatprep.subr.mxu0 %v64
  %1775 = vmatpush1.msra.mxu0 %v63
  %1776 = vmatprep.subr.mxu0 %v60
  %1777 = vmatpush1.msra.mxu0 %v59
  %1778 = vmatprep.subr.mxu0 %v56
  %1779 = vmatpush1.msra.mxu0 %v55
  %1780 = vmatprep.subr.mxu0 %v52
  %1781 = vmatpush1.msra.mxu0 %v51
  %1782 = vmatprep.subr.mxu0 %v48
  %1783 = vmatpush1.msra.mxu0 %v47
  %1784 = vmatprep.subr.mxu0 %v44
  %1785 = vmatpush1.msra.mxu0 %v43
  %1786 = vmatprep.subr.mxu0 %v40
  %1787 = vmatpush1.msra.mxu0 %v39
  %1788 = vmatprep.subr.mxu0 %v36
  %1789 = vmatpush1.msra.mxu0 %v35
  %1790 = vmatprep.subr.mxu0 0.0
  %1791 = vmatpush2.msra.mxu0 0.0
  %1792 = vmatprep.subr.mxu0 0.0
  %1793 = vmatpush2.msra.mxu0 0.0
  %1794 = vmatprep.subr.mxu0 0.0
  %1795 = vmatpush2.msra.mxu0 0.0
  %1796 = vmatprep.subr.mxu0 0.0
  %1797 = vmatpush2.msra.mxu0 0.0
  %1798 = vmatprep.subr.mxu0 0.0
  %1799 = vmatpush2.msra.mxu0 0.0
  %1800 = vmatprep.subr.mxu0 0.0
  %1801 = vmatpush2.msra.mxu0 0.0
  %1802 = vmatprep.subr.mxu0 0.0
  %1803 = vmatpush2.msra.mxu0 0.0
  %1804 = vmatprep.subr.mxu0 0.0
  %1805 = vmatpush2.msra.mxu0 0.0
  %1806 = vmatprep.subr.mxu0 0.0
  %1807 = vmatpush2.msra.mxu0 0.0
  %1808 = vmatprep.subr.mxu0 0.0
  %1809 = vmatpush2.msra.mxu0 0.0
  %1810 = vmatprep.subr.mxu0 0.0
  %1811 = vmatpush2.msra.mxu0 0.0
  %1812 = vmatprep.subr.mxu0 0.0
  %1813 = vmatpush2.msra.mxu0 0.0
  %1814 = vmatprep.subr.mxu0 0.0
  %1815 = vmatpush2.msra.mxu0 0.0
  %1816 = vmatprep.subr.mxu0 0.0
  %1817 = vmatpush2.msra.mxu0 0.0
  %1818 = vmatprep.subr.mxu0 0.0
  %1819 = vmatpush2.msra.mxu0 0.0
  %1820 = vmatprep.subr.mxu0 0.0
  %1821 = vmatpush2.msra.mxu0 0.0
  %1822 = vmatprep.mubr.f32.mxu0 0.0
  %1823 = vmatmul.mubr.f32.gmra.mxu0 %v1682
  %v1824 = vpop.f32.mrf.mxu0
  %v1825 = vadd.f32 0.0, %v1824
  %v1826 = vpop.f32.mrf.mxu0
  %v1827 = vadd.f32 0.0, %v1826
  %1828 = vdwg.mxu0
  %v1830 = vsel %vm264, %v1686, 0
  %1832 = vmatprep.subr.mxu0 0.0
  %1833 = vmatpush1.msra.mxu0 0.0
  %1834 = vmatprep.subr.mxu0 0.0
  %1835 = vmatpush1.msra.mxu0 0.0
  %1836 = vmatprep.subr.mxu0 0.0
  %1837 = vmatpush1.msra.mxu0 0.0
  %1838 = vmatprep.subr.mxu0 0.0
  %1839 = vmatpush1.msra.mxu0 0.0
  %1840 = vmatprep.subr.mxu0 0.0
  %1841 = vmatpush1.msra.mxu0 0.0
  %1842 = vmatprep.subr.mxu0 0.0
  %1843 = vmatpush1.msra.mxu0 0.0
  %1844 = vmatprep.subr.mxu0 0.0
  %1845 = vmatpush1.msra.mxu0 0.0
  %1846 = vmatprep.subr.mxu0 0.0
  %1847 = vmatpush1.msra.mxu0 0.0
  %1848 = vmatprep.subr.mxu0 0.0
  %1849 = vmatpush1.msra.mxu0 0.0
  %1850 = vmatprep.subr.mxu0 0.0
  %1851 = vmatpush1.msra.mxu0 0.0
  %1852 = vmatprep.subr.mxu0 0.0
  %1853 = vmatpush1.msra.mxu0 0.0
  %1854 = vmatprep.subr.mxu0 0.0
  %1855 = vmatpush1.msra.mxu0 0.0
  %1856 = vmatprep.subr.mxu0 0.0
  %1857 = vmatpush1.msra.mxu0 0.0
  %1858 = vmatprep.subr.mxu0 0.0
  %1859 = vmatpush1.msra.mxu0 0.0
  %1860 = vmatprep.subr.mxu0 %v30
  %1861 = vmatpush1.msra.mxu0 %v29
  %1862 = vmatprep.subr.mxu0 %v26
  %1863 = vmatpush1.msra.mxu0 %v25
  %1864 = vmatprep.subr.mxu0 0.0
  %1865 = vmatpush2.msra.mxu0 0.0
  %1866 = vmatprep.subr.mxu0 0.0
  %1867 = vmatpush2.msra.mxu0 0.0
  %1868 = vmatprep.subr.mxu0 0.0
  %1869 = vmatpush2.msra.mxu0 0.0
  %1870 = vmatprep.subr.mxu0 0.0
  %1871 = vmatpush2.msra.mxu0 0.0
  %1872 = vmatprep.subr.mxu0 0.0
  %1873 = vmatpush2.msra.mxu0 0.0
  %1874 = vmatprep.subr.mxu0 0.0
  %1875 = vmatpush2.msra.mxu0 0.0
  %1876 = vmatprep.subr.mxu0 0.0
  %1877 = vmatpush2.msra.mxu0 0.0
  %1878 = vmatprep.subr.mxu0 0.0
  %1879 = vmatpush2.msra.mxu0 0.0
  %1880 = vmatprep.subr.mxu0 0.0
  %1881 = vmatpush2.msra.mxu0 0.0
  %1882 = vmatprep.subr.mxu0 0.0
  %1883 = vmatpush2.msra.mxu0 0.0
  %1884 = vmatprep.subr.mxu0 0.0
  %1885 = vmatpush2.msra.mxu0 0.0
  %1886 = vmatprep.subr.mxu0 0.0
  %1887 = vmatpush2.msra.mxu0 0.0
  %1888 = vmatprep.subr.mxu0 0.0
  %1889 = vmatpush2.msra.mxu0 0.0
  %1890 = vmatprep.subr.mxu0 0.0
  %1891 = vmatpush2.msra.mxu0 0.0
  %1892 = vmatprep.subr.mxu0 0.0
  %1893 = vmatpush2.msra.mxu0 0.0
  %1894 = vmatprep.subr.mxu0 0.0
  %1895 = vmatpush2.msra.mxu0 0.0
  %1896 = vmatprep.mubr.f32.mxu0 0.0
  %1897 = vmatmul.mubr.f32.gmra.mxu0 %v1830
  %v1898 = vpop.f32.mrf.mxu0
  %v1899 = vadd.f32 %v1754, %v1898
  %v1900 = vpop.f32.mrf.mxu0
  %v1901 = vadd.f32 %v1756, %v1900
  %1902 = vdwg.mxu0
  %1903 = vmatprep.subr.mxu0 0.0
  %1904 = vmatpush1.msra.mxu0 0.0
  %1905 = vmatprep.subr.mxu0 0.0
  %1906 = vmatpush1.msra.mxu0 0.0
  %1907 = vmatprep.subr.mxu0 0.0
  %1908 = vmatpush1.msra.mxu0 0.0
  %1909 = vmatprep.subr.mxu0 0.0
  %1910 = vmatpush1.msra.mxu0 0.0
  %1911 = vmatprep.subr.mxu0 0.0
  %1912 = vmatpush1.msra.mxu0 0.0
  %1913 = vmatprep.subr.mxu0 0.0
  %1914 = vmatpush1.msra.mxu0 0.0
  %1915 = vmatprep.subr.mxu0 0.0
  %1916 = vmatpush1.msra.mxu0 0.0
  %1917 = vmatprep.subr.mxu0 0.0
  %1918 = vmatpush1.msra.mxu0 0.0
  %1919 = vmatprep.subr.mxu0 0.0
  %1920 = vmatpush1.msra.mxu0 0.0
  %1921 = vmatprep.subr.mxu0 0.0
  %1922 = vmatpush1.msra.mxu0 0.0
  %1923 = vmatprep.subr.mxu0 0.0
  %1924 = vmatpush1.msra.mxu0 0.0
  %1925 = vmatprep.subr.mxu0 0.0
  %1926 = vmatpush1.msra.mxu0 0.0
  %1927 = vmatprep.subr.mxu0 0.0
  %1928 = vmatpush1.msra.mxu0 0.0
  %1929 = vmatprep.subr.mxu0 0.0
  %1930 = vmatpush1.msra.mxu0 0.0
  %1931 = vmatprep.subr.mxu0 %v32
  %1932 = vmatpush1.msra.mxu0 %v31
  %1933 = vmatprep.subr.mxu0 %v28
  %1934 = vmatpush1.msra.mxu0 %v27
  %1935 = vmatprep.subr.mxu0 0.0
  %1936 = vmatpush2.msra.mxu0 0.0
  %1937 = vmatprep.subr.mxu0 0.0
  %1938 = vmatpush2.msra.mxu0 0.0
  %1939 = vmatprep.subr.mxu0 0.0
  %1940 = vmatpush2.msra.mxu0 0.0
  %1941 = vmatprep.subr.mxu0 0.0
  %1942 = vmatpush2.msra.mxu0 0.0
  %1943 = vmatprep.subr.mxu0 0.0
  %1944 = vmatpush2.msra.mxu0 0.0
  %1945 = vmatprep.subr.mxu0 0.0
  %1946 = vmatpush2.msra.mxu0 0.0
  %1947 = vmatprep.subr.mxu0 0.0
  %1948 = vmatpush2.msra.mxu0 0.0
  %1949 = vmatprep.subr.mxu0 0.0
  %1950 = vmatpush2.msra.mxu0 0.0
  %1951 = vmatprep.subr.mxu0 0.0
  %1952 = vmatpush2.msra.mxu0 0.0
  %1953 = vmatprep.subr.mxu0 0.0
  %1954 = vmatpush2.msra.mxu0 0.0
  %1955 = vmatprep.subr.mxu0 0.0
  %1956 = vmatpush2.msra.mxu0 0.0
  %1957 = vmatprep.subr.mxu0 0.0
  %1958 = vmatpush2.msra.mxu0 0.0
  %1959 = vmatprep.subr.mxu0 0.0
  %1960 = vmatpush2.msra.mxu0 0.0
  %1961 = vmatprep.subr.mxu0 0.0
  %1962 = vmatpush2.msra.mxu0 0.0
  %1963 = vmatprep.subr.mxu0 0.0
  %1964 = vmatpush2.msra.mxu0 0.0
  %1965 = vmatprep.subr.mxu0 0.0
  %1966 = vmatpush2.msra.mxu0 0.0
  %1967 = vmatprep.mubr.f32.mxu0 0.0
  %1968 = vmatmul.mubr.f32.gmra.mxu0 %v1830
  %v1969 = vpop.f32.mrf.mxu0
  %v1970 = vadd.f32 %v1825, %v1969
  %v1971 = vpop.f32.mrf.mxu0
  %v1972 = vadd.f32 %v1827, %v1971
  %1973 = vdwg.mxu0
  %v1974 = vadd.f32 %v1899, %v102
  %v1975 = vadd.f32 %v1901, %v106
  %v1976 = vadd.f32 %v1970, %v110
  %v1977 = vadd.f32 %v1972, %v114
  %v1978 = vmul.f32 %v1974, 0.5
  %v1979 = vmul.f32 %v1975, 0.5
  %v1980 = vmul.f32 %v1976, 0.5
  %v1981 = vtanh.pop %v1978
  %v1982 = vtanh.pop %v1979
  %v1983 = vtanh.pop %v1980
  %v1984 = vmul.f32 %v1981, 0.5
  %v1985 = vmul.f32 %v1982, 0.5
  %v1986 = vmul.f32 %v1983, 0.5
  %v1987 = vadd.f32 %v1984, 0.5
  %v1988 = vadd.f32 %v1985, 0.5
  %v1989 = vadd.f32 %v1986, 0.5
  %v1990 = vtanh.pop %v1977
  %v1991 = vmul.f32 %v1988, %v1680
  %v1992 = vmul.f32 %v1987, %v1990
  %v1993 = vadd.f32 %v1991, %v1992
  %v1994 = vtanh.pop %v1993
  %v1995 = vmul.f32 %v1989, %v1994
  %s1996 = scalar_lea.vmem %s4, 40
  %1997 = vst [vmem:[%s1996] sm:$0xff] %v1995
  %s1998 = scalar_lea.vmem %s0, 48
  %v1999 = vld [vmem:[%s1998] sm:$0xff]
  %2000 = vmatprep.subr.mxu0 %v94
  %2001 = vmatpush1.msra.mxu0 %v93
  %2002 = vmatprep.subr.mxu0 %v90
  %2003 = vmatpush1.msra.mxu0 %v89
  %2004 = vmatprep.subr.mxu0 %v86
  %2005 = vmatpush1.msra.mxu0 %v85
  %2006 = vmatprep.subr.mxu0 %v82
  %2007 = vmatpush1.msra.mxu0 %v81
  %2008 = vmatprep.subr.mxu0 %v78
  %2009 = vmatpush1.msra.mxu0 %v77
  %2010 = vmatprep.subr.mxu0 %v74
  %2011 = vmatpush1.msra.mxu0 %v73
  %2012 = vmatprep.subr.mxu0 %v70
  %2013 = vmatpush1.msra.mxu0 %v69
  %2014 = vmatprep.subr.mxu0 %v66
  %2015 = vmatpush1.msra.mxu0 %v65
  %2016 = vmatprep.subr.mxu0 %v62
  %2017 = vmatpush1.msra.mxu0 %v61
  %2018 = vmatprep.subr.mxu0 %v58
  %2019 = vmatpush1.msra.mxu0 %v57
  %2020 = vmatprep.subr.mxu0 %v54
  %2021 = vmatpush1.msra.mxu0 %v53
  %2022 = vmatprep.subr.mxu0 %v50
  %2023 = vmatpush1.msra.mxu0 %v49
  %2024 = vmatprep.subr.mxu0 %v46
  %2025 = vmatpush1.msra.mxu0 %v45
  %2026 = vmatprep.subr.mxu0 %v42
  %2027 = vmatpush1.msra.mxu0 %v41
  %2028 = vmatprep.subr.mxu0 %v38
  %2029 = vmatpush1.msra.mxu0 %v37
  %2030 = vmatprep.subr.mxu0 %v34
  %2031 = vmatpush1.msra.mxu0 %v33
  %2032 = vmatprep.subr.mxu0 0.0
  %2033 = vmatpush2.msra.mxu0 0.0
  %2034 = vmatprep.subr.mxu0 0.0
  %2035 = vmatpush2.msra.mxu0 0.0
  %2036 = vmatprep.subr.mxu0 0.0
  %2037 = vmatpush2.msra.mxu0 0.0
  %2038 = vmatprep.subr.mxu0 0.0
  %2039 = vmatpush2.msra.mxu0 0.0
  %2040 = vmatprep.subr.mxu0 0.0
  %2041 = vmatpush2.msra.mxu0 0.0
  %2042 = vmatprep.subr.mxu0 0.0
  %2043 = vmatpush2.msra.mxu0 0.0
  %2044 = vmatprep.subr.mxu0 0.0
  %2045 = vmatpush2.msra.mxu0 0.0
  %2046 = vmatprep.subr.mxu0 0.0
  %2047 = vmatpush2.msra.mxu0 0.0
  %2048 = vmatprep.subr.mxu0 0.0
  %2049 = vmatpush2.msra.mxu0 0.0
  %2050 = vmatprep.subr.mxu0 0.0
  %2051 = vmatpush2.msra.mxu0 0.0
  %2052 = vmatprep.subr.mxu0 0.0
  %2053 = vmatpush2.msra.mxu0 0.0
  %2054 = vmatprep.subr.mxu0 0.0
  %2055 = vmatpush2.msra.mxu0 0.0
  %2056 = vmatprep.subr.mxu0 0.0
  %2057 = vmatpush2.msra.mxu0 0.0
  %2058 = vmatprep.subr.mxu0 0.0
  %2059 = vmatpush2.msra.mxu0 0.0
  %2060 = vmatprep.subr.mxu0 0.0
  %2061 = vmatpush2.msra.mxu0 0.0
  %2062 = vmatprep.subr.mxu0 0.0
  %2063 = vmatpush2.msra.mxu0 0.0
  %2064 = vmatprep.mubr.f32.mxu0 0.0
  %2065 = vmatmul.mubr.f32.gmra.mxu0 %v1995
  %v2066 = vpop.f32.mrf.mxu0
  %v2067 = vadd.f32 0.0, %v2066
  %v2068 = vpop.f32.mrf.mxu0
  %v2069 = vadd.f32 0.0, %v2068
  %2070 = vdwg.mxu0
  %2071 = vmatprep.subr.mxu0 %v96
  %2072 = vmatpush1.msra.mxu0 %v95
  %2073 = vmatprep.subr.mxu0 %v92
  %2074 = vmatpush1.msra.mxu0 %v91
  %2075 = vmatprep.subr.mxu0 %v88
  %2076 = vmatpush1.msra.mxu0 %v87
  %2077 = vmatprep.subr.mxu0 %v84
  %2078 = vmatpush1.msra.mxu0 %v83
  %2079 = vmatprep.subr.mxu0 %v80
  %2080 = vmatpush1.msra.mxu0 %v79
  %2081 = vmatprep.subr.mxu0 %v76
  %2082 = vmatpush1.msra.mxu0 %v75
  %2083 = vmatprep.subr.mxu0 %v72
  %2084 = vmatpush1.msra.mxu0 %v71
  %2085 = vmatprep.subr.mxu0 %v68
  %2086 = vmatpush1.msra.mxu0 %v67
  %2087 = vmatprep.subr.mxu0 %v64
  %2088 = vmatpush1.msra.mxu0 %v63
  %2089 = vmatprep.subr.mxu0 %v60
  %2090 = vmatpush1.msra.mxu0 %v59
  %2091 = vmatprep.subr.mxu0 %v56
  %2092 = vmatpush1.msra.mxu0 %v55
  %2093 = vmatprep.subr.mxu0 %v52
  %2094 = vmatpush1.msra.mxu0 %v51
  %2095 = vmatprep.subr.mxu0 %v48
  %2096 = vmatpush1.msra.mxu0 %v47
  %2097 = vmatprep.subr.mxu0 %v44
  %2098 = vmatpush1.msra.mxu0 %v43
  %2099 = vmatprep.subr.mxu0 %v40
  %2100 = vmatpush1.msra.mxu0 %v39
  %2101 = vmatprep.subr.mxu0 %v36
  %2102 = vmatpush1.msra.mxu0 %v35
  %2103 = vmatprep.subr.mxu0 0.0
  %2104 = vmatpush2.msra.mxu0 0.0
  %2105 = vmatprep.subr.mxu0 0.0
  %2106 = vmatpush2.msra.mxu0 0.0
  %2107 = vmatprep.subr.mxu0 0.0
  %2108 = vmatpush2.msra.mxu0 0.0
  %2109 = vmatprep.subr.mxu0 0.0
  %2110 = vmatpush2.msra.mxu0 0.0
  %2111 = vmatprep.subr.mxu0 0.0
  %2112 = vmatpush2.msra.mxu0 0.0
  %2113 = vmatprep.subr.mxu0 0.0
  %2114 = vmatpush2.msra.mxu0 0.0
  %2115 = vmatprep.subr.mxu0 0.0
  %2116 = vmatpush2.msra.mxu0 0.0
  %2117 = vmatprep.subr.mxu0 0.0
  %2118 = vmatpush2.msra.mxu0 0.0
  %2119 = vmatprep.subr.mxu0 0.0
  %2120 = vmatpush2.msra.mxu0 0.0
  %2121 = vmatprep.subr.mxu0 0.0
  %2122 = vmatpush2.msra.mxu0 0.0
  %2123 = vmatprep.subr.mxu0 0.0
  %2124 = vmatpush2.msra.mxu0 0.0
  %2125 = vmatprep.subr.mxu0 0.0
  %2126 = vmatpush2.msra.mxu0 0.0
  %2127 = vmatprep.subr.mxu0 0.0
  %2128 = vmatpush2.msra.mxu0 0.0
  %2129 = vmatprep.subr.mxu0 0.0
  %2130 = vmatpush2.msra.mxu0 0.0
  %2131 = vmatprep.subr.mxu0 0.0
  %2132 = vmatpush2.msra.mxu0 0.0
  %2133 = vmatprep.subr.mxu0 0.0
  %2134 = vmatpush2.msra.mxu0 0.0
  %2135 = vmatprep.mubr.f32.mxu0 0.0
  %2136 = vmatmul.mubr.f32.gmra.mxu0 %v1995
  %v2137 = vpop.f32.mrf.mxu0
  %v2138 = vadd.f32 0.0, %v2137
  %v2139 = vpop.f32.mrf.mxu0
  %v2140 = vadd.f32 0.0, %v2139
  %2141 = vdwg.mxu0
  %v2143 = vsel %vm264, %v1999, 0
  %2145 = vmatprep.subr.mxu0 0.0
  %2146 = vmatpush1.msra.mxu0 0.0
  %2147 = vmatprep.subr.mxu0 0.0
  %2148 = vmatpush1.msra.mxu0 0.0
  %2149 = vmatprep.subr.mxu0 0.0
  %2150 = vmatpush1.msra.mxu0 0.0
  %2151 = vmatprep.subr.mxu0 0.0
  %2152 = vmatpush1.msra.mxu0 0.0
  %2153 = vmatprep.subr.mxu0 0.0
  %2154 = vmatpush1.msra.mxu0 0.0
  %2155 = vmatprep.subr.mxu0 0.0
  %2156 = vmatpush1.msra.mxu0 0.0
  %2157 = vmatprep.subr.mxu0 0.0
  %2158 = vmatpush1.msra.mxu0 0.0
  %2159 = vmatprep.subr.mxu0 0.0
  %2160 = vmatpush1.msra.mxu0 0.0
  %2161 = vmatprep.subr.mxu0 0.0
  %2162 = vmatpush1.msra.mxu0 0.0
  %2163 = vmatprep.subr.mxu0 0.0
  %2164 = vmatpush1.msra.mxu0 0.0
  %2165 = vmatprep.subr.mxu0 0.0
  %2166 = vmatpush1.msra.mxu0 0.0
  %2167 = vmatprep.subr.mxu0 0.0
  %2168 = vmatpush1.msra.mxu0 0.0
  %2169 = vmatprep.subr.mxu0 0.0
  %2170 = vmatpush1.msra.mxu0 0.0
  %2171 = vmatprep.subr.mxu0 0.0
  %2172 = vmatpush1.msra.mxu0 0.0
  %2173 = vmatprep.subr.mxu0 %v30
  %2174 = vmatpush1.msra.mxu0 %v29
  %2175 = vmatprep.subr.mxu0 %v26
  %2176 = vmatpush1.msra.mxu0 %v25
  %2177 = vmatprep.subr.mxu0 0.0
  %2178 = vmatpush2.msra.mxu0 0.0
  %2179 = vmatprep.subr.mxu0 0.0
  %2180 = vmatpush2.msra.mxu0 0.0
  %2181 = vmatprep.subr.mxu0 0.0
  %2182 = vmatpush2.msra.mxu0 0.0
  %2183 = vmatprep.subr.mxu0 0.0
  %2184 = vmatpush2.msra.mxu0 0.0
  %2185 = vmatprep.subr.mxu0 0.0
  %2186 = vmatpush2.msra.mxu0 0.0
  %2187 = vmatprep.subr.mxu0 0.0
  %2188 = vmatpush2.msra.mxu0 0.0
  %2189 = vmatprep.subr.mxu0 0.0
  %2190 = vmatpush2.msra.mxu0 0.0
  %2191 = vmatprep.subr.mxu0 0.0
  %2192 = vmatpush2.msra.mxu0 0.0
  %2193 = vmatprep.subr.mxu0 0.0
  %2194 = vmatpush2.msra.mxu0 0.0
  %2195 = vmatprep.subr.mxu0 0.0
  %2196 = vmatpush2.msra.mxu0 0.0
  %2197 = vmatprep.subr.mxu0 0.0
  %2198 = vmatpush2.msra.mxu0 0.0
  %2199 = vmatprep.subr.mxu0 0.0
  %2200 = vmatpush2.msra.mxu0 0.0
  %2201 = vmatprep.subr.mxu0 0.0
  %2202 = vmatpush2.msra.mxu0 0.0
  %2203 = vmatprep.subr.mxu0 0.0
  %2204 = vmatpush2.msra.mxu0 0.0
  %2205 = vmatprep.subr.mxu0 0.0
  %2206 = vmatpush2.msra.mxu0 0.0
  %2207 = vmatprep.subr.mxu0 0.0
  %2208 = vmatpush2.msra.mxu0 0.0
  %2209 = vmatprep.mubr.f32.mxu0 0.0
  %2210 = vmatmul.mubr.f32.gmra.mxu0 %v2143
  %v2211 = vpop.f32.mrf.mxu0
  %v2212 = vadd.f32 %v2067, %v2211
  %v2213 = vpop.f32.mrf.mxu0
  %v2214 = vadd.f32 %v2069, %v2213
  %2215 = vdwg.mxu0
  %2216 = vmatprep.subr.mxu0 0.0
  %2217 = vmatpush1.msra.mxu0 0.0
  %2218 = vmatprep.subr.mxu0 0.0
  %2219 = vmatpush1.msra.mxu0 0.0
  %2220 = vmatprep.subr.mxu0 0.0
  %2221 = vmatpush1.msra.mxu0 0.0
  %2222 = vmatprep.subr.mxu0 0.0
  %2223 = vmatpush1.msra.mxu0 0.0
  %2224 = vmatprep.subr.mxu0 0.0
  %2225 = vmatpush1.msra.mxu0 0.0
  %2226 = vmatprep.subr.mxu0 0.0
  %2227 = vmatpush1.msra.mxu0 0.0
  %2228 = vmatprep.subr.mxu0 0.0
  %2229 = vmatpush1.msra.mxu0 0.0
  %2230 = vmatprep.subr.mxu0 0.0
  %2231 = vmatpush1.msra.mxu0 0.0
  %2232 = vmatprep.subr.mxu0 0.0
  %2233 = vmatpush1.msra.mxu0 0.0
  %2234 = vmatprep.subr.mxu0 0.0
  %2235 = vmatpush1.msra.mxu0 0.0
  %2236 = vmatprep.subr.mxu0 0.0
  %2237 = vmatpush1.msra.mxu0 0.0
  %2238 = vmatprep.subr.mxu0 0.0
  %2239 = vmatpush1.msra.mxu0 0.0
  %2240 = vmatprep.subr.mxu0 0.0
  %2241 = vmatpush1.msra.mxu0 0.0
  %2242 = vmatprep.subr.mxu0 0.0
  %2243 = vmatpush1.msra.mxu0 0.0
  %2244 = vmatprep.subr.mxu0 %v32
  %2245 = vmatpush1.msra.mxu0 %v31
  %2246 = vmatprep.subr.mxu0 %v28
  %2247 = vmatpush1.msra.mxu0 %v27
  %2248 = vmatprep.subr.mxu0 0.0
  %2249 = vmatpush2.msra.mxu0 0.0
  %2250 = vmatprep.subr.mxu0 0.0
  %2251 = vmatpush2.msra.mxu0 0.0
  %2252 = vmatprep.subr.mxu0 0.0
  %2253 = vmatpush2.msra.mxu0 0.0
  %2254 = vmatprep.subr.mxu0 0.0
  %2255 = vmatpush2.msra.mxu0 0.0
  %2256 = vmatprep.subr.mxu0 0.0
  %2257 = vmatpush2.msra.mxu0 0.0
  %2258 = vmatprep.subr.mxu0 0.0
  %2259 = vmatpush2.msra.mxu0 0.0
  %2260 = vmatprep.subr.mxu0 0.0
  %2261 = vmatpush2.msra.mxu0 0.0
  %2262 = vmatprep.subr.mxu0 0.0
  %2263 = vmatpush2.msra.mxu0 0.0
  %2264 = vmatprep.subr.mxu0 0.0
  %2265 = vmatpush2.msra.mxu0 0.0
  %2266 = vmatprep.subr.mxu0 0.0
  %2267 = vmatpush2.msra.mxu0 0.0
  %2268 = vmatprep.subr.mxu0 0.0
  %2269 = vmatpush2.msra.mxu0 0.0
  %2270 = vmatprep.subr.mxu0 0.0
  %2271 = vmatpush2.msra.mxu0 0.0
  %2272 = vmatprep.subr.mxu0 0.0
  %2273 = vmatpush2.msra.mxu0 0.0
  %2274 = vmatprep.subr.mxu0 0.0
  %2275 = vmatpush2.msra.mxu0 0.0
  %2276 = vmatprep.subr.mxu0 0.0
  %2277 = vmatpush2.msra.mxu0 0.0
  %2278 = vmatprep.subr.mxu0 0.0
  %2279 = vmatpush2.msra.mxu0 0.0
  %2280 = vmatprep.mubr.f32.mxu0 0.0
  %2281 = vmatmul.mubr.f32.gmra.mxu0 %v2143
  %v2282 = vpop.f32.mrf.mxu0
  %v2283 = vadd.f32 %v2138, %v2282
  %v2284 = vpop.f32.mrf.mxu0
  %v2285 = vadd.f32 %v2140, %v2284
  %2286 = vdwg.mxu0
  %v2287 = vadd.f32 %v2212, %v102
  %v2288 = vadd.f32 %v2214, %v106
  %v2289 = vadd.f32 %v2283, %v110
  %v2290 = vadd.f32 %v2285, %v114
  %v2291 = vmul.f32 %v2287, 0.5
  %v2292 = vmul.f32 %v2288, 0.5
  %v2293 = vmul.f32 %v2289, 0.5
  %v2294 = vtanh.pop %v2291
  %v2295 = vtanh.pop %v2292
  %v2296 = vtanh.pop %v2293
  %v2297 = vmul.f32 %v2294, 0.5
  %v2298 = vmul.f32 %v2295, 0.5
  %v2299 = vmul.f32 %v2296, 0.5
  %v2300 = vadd.f32 %v2297, 0.5
  %v2301 = vadd.f32 %v2298, 0.5
  %v2302 = vadd.f32 %v2299, 0.5
  %v2303 = vtanh.pop %v2290
  %v2304 = vmul.f32 %v2301, %v1993
  %v2305 = vmul.f32 %v2300, %v2303
  %v2306 = vadd.f32 %v2304, %v2305
  %v2307 = vtanh.pop %v2306
  %v2308 = vmul.f32 %v2302, %v2307
  %s2309 = scalar_lea.vmem %s4, 48
  %2310 = vst [vmem:[%s2309] sm:$0xff] %v2308
  %s2311 = scalar_lea.vmem %s0, 56
  %v2312 = vld [vmem:[%s2311] sm:$0xff]
  %2313 = vmatprep.subr.mxu0 %v94
  %2314 = vmatpush1.msra.mxu0 %v93
  %2315 = vmatprep.subr.mxu0 %v90
  %2316 = vmatpush1.msra.mxu0 %v89
  %2317 = vmatprep.subr.mxu0 %v86
  %2318 = vmatpush1.msra.mxu0 %v85
  %2319 = vmatprep.subr.mxu0 %v82
  %2320 = vmatpush1.msra.mxu0 %v81
  %2321 = vmatprep.subr.mxu0 %v78
  %2322 = vmatpush1.msra.mxu0 %v77
  %2323 = vmatprep.subr.mxu0 %v74
  %2324 = vmatpush1.msra.mxu0 %v73
  %2325 = vmatprep.subr.mxu0 %v70
  %2326 = vmatpush1.msra.mxu0 %v69
  %2327 = vmatprep.subr.mxu0 %v66
  %2328 = vmatpush1.msra.mxu0 %v65
  %2329 = vmatprep.subr.mxu0 %v62
  %2330 = vmatpush1.msra.mxu0 %v61
  %2331 = vmatprep.subr.mxu0 %v58
  %2332 = vmatpush1.msra.mxu0 %v57
  %2333 = vmatprep.subr.mxu0 %v54
  %2334 = vmatpush1.msra.mxu0 %v53
  %2335 = vmatprep.subr.mxu0 %v50
  %2336 = vmatpush1.msra.mxu0 %v49
  %2337 = vmatprep.subr.mxu0 %v46
  %2338 = vmatpush1.msra.mxu0 %v45
  %2339 = vmatprep.subr.mxu0 %v42
  %2340 = vmatpush1.msra.mxu0 %v41
  %2341 = vmatprep.subr.mxu0 %v38
  %2342 = vmatpush1.msra.mxu0 %v37
  %2343 = vmatprep.subr.mxu0 %v34
  %2344 = vmatpush1.msra.mxu0 %v33
  %2345 = vmatprep.subr.mxu0 0.0
  %2346 = vmatpush2.msra.mxu0 0.0
  %2347 = vmatprep.subr.mxu0 0.0
  %2348 = vmatpush2.msra.mxu0 0.0
  %2349 = vmatprep.subr.mxu0 0.0
  %2350 = vmatpush2.msra.mxu0 0.0
  %2351 = vmatprep.subr.mxu0 0.0
  %2352 = vmatpush2.msra.mxu0 0.0
  %2353 = vmatprep.subr.mxu0 0.0
  %2354 = vmatpush2.msra.mxu0 0.0
  %2355 = vmatprep.subr.mxu0 0.0
  %2356 = vmatpush2.msra.mxu0 0.0
  %2357 = vmatprep.subr.mxu0 0.0
  %2358 = vmatpush2.msra.mxu0 0.0
  %2359 = vmatprep.subr.mxu0 0.0
  %2360 = vmatpush2.msra.mxu0 0.0
  %2361 = vmatprep.subr.mxu0 0.0
  %2362 = vmatpush2.msra.mxu0 0.0
  %2363 = vmatprep.subr.mxu0 0.0
  %2364 = vmatpush2.msra.mxu0 0.0
  %2365 = vmatprep.subr.mxu0 0.0
  %2366 = vmatpush2.msra.mxu0 0.0
  %2367 = vmatprep.subr.mxu0 0.0
  %2368 = vmatpush2.msra.mxu0 0.0
  %2369 = vmatprep.subr.mxu0 0.0
  %2370 = vmatpush2.msra.mxu0 0.0
  %2371 = vmatprep.subr.mxu0 0.0
  %2372 = vmatpush2.msra.mxu0 0.0
  %2373 = vmatprep.subr.mxu0 0.0
  %2374 = vmatpush2.msra.mxu0 0.0
  %2375 = vmatprep.subr.mxu0 0.0
  %2376 = vmatpush2.msra.mxu0 0.0
  %2377 = vmatprep.mubr.f32.mxu0 0.0
  %2378 = vmatmul.mubr.f32.gmra.mxu0 %v2308
  %v2379 = vpop.f32.mrf.mxu0
  %v2380 = vadd.f32 0.0, %v2379
  %v2381 = vpop.f32.mrf.mxu0
  %v2382 = vadd.f32 0.0, %v2381
  %2383 = vdwg.mxu0
  %2384 = vmatprep.subr.mxu0 %v96
  %2385 = vmatpush1.msra.mxu0 %v95
  %2386 = vmatprep.subr.mxu0 %v92
  %2387 = vmatpush1.msra.mxu0 %v91
  %2388 = vmatprep.subr.mxu0 %v88
  %2389 = vmatpush1.msra.mxu0 %v87
  %2390 = vmatprep.subr.mxu0 %v84
  %2391 = vmatpush1.msra.mxu0 %v83
  %2392 = vmatprep.subr.mxu0 %v80
  %2393 = vmatpush1.msra.mxu0 %v79
  %2394 = vmatprep.subr.mxu0 %v76
  %2395 = vmatpush1.msra.mxu0 %v75
  %2396 = vmatprep.subr.mxu0 %v72
  %2397 = vmatpush1.msra.mxu0 %v71
  %2398 = vmatprep.subr.mxu0 %v68
  %2399 = vmatpush1.msra.mxu0 %v67
  %2400 = vmatprep.subr.mxu0 %v64
  %2401 = vmatpush1.msra.mxu0 %v63
  %2402 = vmatprep.subr.mxu0 %v60
  %2403 = vmatpush1.msra.mxu0 %v59
  %2404 = vmatprep.subr.mxu0 %v56
  %2405 = vmatpush1.msra.mxu0 %v55
  %2406 = vmatprep.subr.mxu0 %v52
  %2407 = vmatpush1.msra.mxu0 %v51
  %2408 = vmatprep.subr.mxu0 %v48
  %2409 = vmatpush1.msra.mxu0 %v47
  %2410 = vmatprep.subr.mxu0 %v44
  %2411 = vmatpush1.msra.mxu0 %v43
  %2412 = vmatprep.subr.mxu0 %v40
  %2413 = vmatpush1.msra.mxu0 %v39
  %2414 = vmatprep.subr.mxu0 %v36
  %2415 = vmatpush1.msra.mxu0 %v35
  %2416 = vmatprep.subr.mxu0 0.0
  %2417 = vmatpush2.msra.mxu0 0.0
  %2418 = vmatprep.subr.mxu0 0.0
  %2419 = vmatpush2.msra.mxu0 0.0
  %2420 = vmatprep.subr.mxu0 0.0
  %2421 = vmatpush2.msra.mxu0 0.0
  %2422 = vmatprep.subr.mxu0 0.0
  %2423 = vmatpush2.msra.mxu0 0.0
  %2424 = vmatprep.subr.mxu0 0.0
  %2425 = vmatpush2.msra.mxu0 0.0
  %2426 = vmatprep.subr.mxu0 0.0
  %2427 = vmatpush2.msra.mxu0 0.0
  %2428 = vmatprep.subr.mxu0 0.0
  %2429 = vmatpush2.msra.mxu0 0.0
  %2430 = vmatprep.subr.mxu0 0.0
  %2431 = vmatpush2.msra.mxu0 0.0
  %2432 = vmatprep.subr.mxu0 0.0
  %2433 = vmatpush2.msra.mxu0 0.0
  %2434 = vmatprep.subr.mxu0 0.0
  %2435 = vmatpush2.msra.mxu0 0.0
  %2436 = vmatprep.subr.mxu0 0.0
  %2437 = vmatpush2.msra.mxu0 0.0
  %2438 = vmatprep.subr.mxu0 0.0
  %2439 = vmatpush2.msra.mxu0 0.0
  %2440 = vmatprep.subr.mxu0 0.0
  %2441 = vmatpush2.msra.mxu0 0.0
  %2442 = vmatprep.subr.mxu0 0.0
  %2443 = vmatpush2.msra.mxu0 0.0
  %2444 = vmatprep.subr.mxu0 0.0
  %2445 = vmatpush2.msra.mxu0 0.0
  %2446 = vmatprep.subr.mxu0 0.0
  %2447 = vmatpush2.msra.mxu0 0.0
  %2448 = vmatprep.mubr.f32.mxu0 0.0
  %2449 = vmatmul.mubr.f32.gmra.mxu0 %v2308
  %v2450 = vpop.f32.mrf.mxu0
  %v2451 = vadd.f32 0.0, %v2450
  %v2452 = vpop.f32.mrf.mxu0
  %v2453 = vadd.f32 0.0, %v2452
  %2454 = vdwg.mxu0
  %v2456 = vsel %vm264, %v2312, 0
  %2458 = vmatprep.subr.mxu0 0.0
  %2459 = vmatpush1.msra.mxu0 0.0
  %2460 = vmatprep.subr.mxu0 0.0
  %2461 = vmatpush1.msra.mxu0 0.0
  %2462 = vmatprep.subr.mxu0 0.0
  %2463 = vmatpush1.msra.mxu0 0.0
  %2464 = vmatprep.subr.mxu0 0.0
  %2465 = vmatpush1.msra.mxu0 0.0
  %2466 = vmatprep.subr.mxu0 0.0
  %2467 = vmatpush1.msra.mxu0 0.0
  %2468 = vmatprep.subr.mxu0 0.0
  %2469 = vmatpush1.msra.mxu0 0.0
  %2470 = vmatprep.subr.mxu0 0.0
  %2471 = vmatpush1.msra.mxu0 0.0
  %2472 = vmatprep.subr.mxu0 0.0
  %2473 = vmatpush1.msra.mxu0 0.0
  %2474 = vmatprep.subr.mxu0 0.0
  %2475 = vmatpush1.msra.mxu0 0.0
  %2476 = vmatprep.subr.mxu0 0.0
  %2477 = vmatpush1.msra.mxu0 0.0
  %2478 = vmatprep.subr.mxu0 0.0
  %2479 = vmatpush1.msra.mxu0 0.0
  %2480 = vmatprep.subr.mxu0 0.0
  %2481 = vmatpush1.msra.mxu0 0.0
  %2482 = vmatprep.subr.mxu0 0.0
  %2483 = vmatpush1.msra.mxu0 0.0
  %2484 = vmatprep.subr.mxu0 0.0
  %2485 = vmatpush1.msra.mxu0 0.0
  %2486 = vmatprep.subr.mxu0 %v30
  %2487 = vmatpush1.msra.mxu0 %v29
  %2488 = vmatprep.subr.mxu0 %v26
  %2489 = vmatpush1.msra.mxu0 %v25
  %2490 = vmatprep.subr.mxu0 0.0
  %2491 = vmatpush2.msra.mxu0 0.0
  %2492 = vmatprep.subr.mxu0 0.0
  %2493 = vmatpush2.msra.mxu0 0.0
  %2494 = vmatprep.subr.mxu0 0.0
  %2495 = vmatpush2.msra.mxu0 0.0
  %2496 = vmatprep.subr.mxu0 0.0
  %2497 = vmatpush2.msra.mxu0 0.0
  %2498 = vmatprep.subr.mxu0 0.0
  %2499 = vmatpush2.msra.mxu0 0.0
  %2500 = vmatprep.subr.mxu0 0.0
  %2501 = vmatpush2.msra.mxu0 0.0
  %2502 = vmatprep.subr.mxu0 0.0
  %2503 = vmatpush2.msra.mxu0 0.0
  %2504 = vmatprep.subr.mxu0 0.0
  %2505 = vmatpush2.msra.mxu0 0.0
  %2506 = vmatprep.subr.mxu0 0.0
  %2507 = vmatpush2.msra.mxu0 0.0
  %2508 = vmatprep.subr.mxu0 0.0
  %2509 = vmatpush2.msra.mxu0 0.0
  %2510 = vmatprep.subr.mxu0 0.0
  %2511 = vmatpush2.msra.mxu0 0.0
  %2512 = vmatprep.subr.mxu0 0.0
  %2513 = vmatpush2.msra.mxu0 0.0
  %2514 = vmatprep.subr.mxu0 0.0
  %2515 = vmatpush2.msra.mxu0 0.0
  %2516 = vmatprep.subr.mxu0 0.0
  %2517 = vmatpush2.msra.mxu0 0.0
  %2518 = vmatprep.subr.mxu0 0.0
  %2519 = vmatpush2.msra.mxu0 0.0
  %2520 = vmatprep.subr.mxu0 0.0
  %2521 = vmatpush2.msra.mxu0 0.0
  %2522 = vmatprep.mubr.f32.mxu0 0.0
  %2523 = vmatmul.mubr.f32.gmra.mxu0 %v2456
  %v2524 = vpop.f32.mrf.mxu0
  %v2525 = vadd.f32 %v2380, %v2524
  %v2526 = vpop.f32.mrf.mxu0
  %v2527 = vadd.f32 %v2382, %v2526
  %2528 = vdwg.mxu0
  %2529 = vmatprep.subr.mxu0 0.0
  %2530 = vmatpush1.msra.mxu0 0.0
  %2531 = vmatprep.subr.mxu0 0.0
  %2532 = vmatpush1.msra.mxu0 0.0
  %2533 = vmatprep.subr.mxu0 0.0
  %2534 = vmatpush1.msra.mxu0 0.0
  %2535 = vmatprep.subr.mxu0 0.0
  %2536 = vmatpush1.msra.mxu0 0.0
  %2537 = vmatprep.subr.mxu0 0.0
  %2538 = vmatpush1.msra.mxu0 0.0
  %2539 = vmatprep.subr.mxu0 0.0
  %2540 = vmatpush1.msra.mxu0 0.0
  %2541 = vmatprep.subr.mxu0 0.0
  %2542 = vmatpush1.msra.mxu0 0.0
  %2543 = vmatprep.subr.mxu0 0.0
  %2544 = vmatpush1.msra.mxu0 0.0
  %2545 = vmatprep.subr.mxu0 0.0
  %2546 = vmatpush1.msra.mxu0 0.0
  %2547 = vmatprep.subr.mxu0 0.0
  %2548 = vmatpush1.msra.mxu0 0.0
  %2549 = vmatprep.subr.mxu0 0.0
  %2550 = vmatpush1.msra.mxu0 0.0
  %2551 = vmatprep.subr.mxu0 0.0
  %2552 = vmatpush1.msra.mxu0 0.0
  %2553 = vmatprep.subr.mxu0 0.0
  %2554 = vmatpush1.msra.mxu0 0.0
  %2555 = vmatprep.subr.mxu0 0.0
  %2556 = vmatpush1.msra.mxu0 0.0
  %2557 = vmatprep.subr.mxu0 %v32
  %2558 = vmatpush1.msra.mxu0 %v31
  %2559 = vmatprep.subr.mxu0 %v28
  %2560 = vmatpush1.msra.mxu0 %v27
  %2561 = vmatprep.subr.mxu0 0.0
  %2562 = vmatpush2.msra.mxu0 0.0
  %2563 = vmatprep.subr.mxu0 0.0
  %2564 = vmatpush2.msra.mxu0 0.0
  %2565 = vmatprep.subr.mxu0 0.0
  %2566 = vmatpush2.msra.mxu0 0.0
  %2567 = vmatprep.subr.mxu0 0.0
  %2568 = vmatpush2.msra.mxu0 0.0
  %2569 = vmatprep.subr.mxu0 0.0
  %2570 = vmatpush2.msra.mxu0 0.0
  %2571 = vmatprep.subr.mxu0 0.0
  %2572 = vmatpush2.msra.mxu0 0.0
  %2573 = vmatprep.subr.mxu0 0.0
  %2574 = vmatpush2.msra.mxu0 0.0
  %2575 = vmatprep.subr.mxu0 0.0
  %2576 = vmatpush2.msra.mxu0 0.0
  %2577 = vmatprep.subr.mxu0 0.0
  %2578 = vmatpush2.msra.mxu0 0.0
  %2579 = vmatprep.subr.mxu0 0.0
  %2580 = vmatpush2.msra.mxu0 0.0
  %2581 = vmatprep.subr.mxu0 0.0
  %2582 = vmatpush2.msra.mxu0 0.0
  %2583 = vmatprep.subr.mxu0 0.0
  %2584 = vmatpush2.msra.mxu0 0.0
  %2585 = vmatprep.subr.mxu0 0.0
  %2586 = vmatpush2.msra.mxu0 0.0
  %2587 = vmatprep.subr.mxu0 0.0
  %2588 = vmatpush2.msra.mxu0 0.0
  %2589 = vmatprep.subr.mxu0 0.0
  %2590 = vmatpush2.msra.mxu0 0.0
  %2591 = vmatprep.subr.mxu0 0.0
  %2592 = vmatpush2.msra.mxu0 0.0
  %2593 = vmatprep.mubr.f32.mxu0 0.0
  %2594 = vmatmul.mubr.f32.gmra.mxu0 %v2456
  %v2595 = vpop.f32.mrf.mxu0
  %v2596 = vadd.f32 %v2451, %v2595
  %v2597 = vpop.f32.mrf.mxu0
  %v2598 = vadd.f32 %v2453, %v2597
  %2599 = vdwg.mxu0
  %v2600 = vadd.f32 %v2525, %v102
  %v2601 = vadd.f32 %v2527, %v106
  %v2602 = vadd.f32 %v2596, %v110
  %v2603 = vadd.f32 %v2598, %v114
  %v2604 = vmul.f32 %v2600, 0.5
  %v2605 = vmul.f32 %v2601, 0.5
  %v2606 = vmul.f32 %v2602, 0.5
  %v2607 = vtanh.pop %v2604
  %v2608 = vtanh.pop %v2605
  %v2609 = vtanh.pop %v2606
  %v2610 = vmul.f32 %v2607, 0.5
  %v2611 = vmul.f32 %v2608, 0.5
  %v2612 = vmul.f32 %v2609, 0.5
  %v2613 = vadd.f32 %v2610, 0.5
  %v2614 = vadd.f32 %v2611, 0.5
  %v2615 = vadd.f32 %v2612, 0.5
  %v2616 = vtanh.pop %v2603
  %v2617 = vmul.f32 %v2614, %v2306
  %v2618 = vmul.f32 %v2613, %v2616
  %v2619 = vadd.f32 %v2617, %v2618
  %v2620 = vtanh.pop %v2619
  %v2621 = vmul.f32 %v2615, %v2620
  %s2622 = scalar_lea.vmem %s4, 56
  %2623 = vst [vmem:[%s2622] sm:$0xff] %v2621
  %2624 = vst [vmem:[#allocation2] sm:$0xff] %v2621
  %2625 = vst [vmem:[#allocation3] sm:$0xff] %v2619
  // Predicated region
  $region22: #{_lambda_.1} parent=0 // pred_check
    %p2626 = pneg %p19
  $region23: #{_lambda_.1} parent=0 // pred_check_branch
    %2628 = sbr.rel (%p2626) target = $region25
  $region24: #{_lambda_.1} parent=0 // pred_region
    %2629 = vst [vmem:[%s5] sm:$0xff] %v2619
  $region25: #{_lambda_.1} parent=0 // pred_fallthru
    _
  // Predicated region
  $region26: #{_lambda_.1} parent=0 // pred_check
    _
  $region27: #{_lambda_.1} parent=0 // pred_check_branch
    %2631 = sbr.rel (0) target = $region29
  $region28: #{_lambda_.1} parent=0 // pred_region
    _
  $region29: #{_lambda_.1} parent=0 // pred_fallthru
    _
  // Predicated region
  $region30: #{_lambda_.1} parent=0 // pred_check
    _
  $region31: #{_lambda_.1} parent=0 // pred_check_branch
    %2633 = sbr.rel (0) target = $region33
  $region32: #{_lambda_.1} parent=0 // pred_region
    _
  $region33: #{_lambda_.1} parent=0 // pred_fallthru
    _
  // Predicated region
  $region34: #{_lambda_.1} parent=0 // pred_check
    _
  $region35: #{_lambda_.1} parent=0 // pred_check_branch
    %2635 = sbr.rel (0) target = $region37
  $region36: #{_lambda_.1} parent=0 // pred_region
    _
  $region37: #{_lambda_.1} parent=0 // pred_fallthru
    _
  // Predicated region
  $region38: #{_lambda_.1} parent=0 // pred_check
    _
  $region39: #{_lambda_.1} parent=0 // pred_check_branch
    %2637 = sbr.rel (0) target = $region41
  $region40: #{_lambda_.1} parent=0 // pred_region
    _
  $region41: #{_lambda_.1} parent=0 // pred_fallthru
    _

</llo_original>
